<compile_context>
chip_gen: v5e
topology: v5e:2x2
jax: 0.10.0
libtpu: 0.0.40
codegen_flags: <defaults>
</compile_context>

<pallas_src>
import functools

import jax
import jax.numpy as jnp
from jax.experimental import pallas as pl
from jax.experimental.pallas import tpu as pltpu


# -----------------------------------------------------------------------------
# Fused Pallas kernel: forward diffusion + full synthetic UNet
# -----------------------------------------------------------------------------
def _fused_ddpm_kernel(
        t_sref, ab_sref,                                   # scalar-prefetch (SMEM)
        x0_ref, noise_ref, temb_ref,
        tw1t_ref, tb1_ref, tw2_ref, tb2_ref, twpt_ref, tbp_ref,
        cinw_ref, cinb_ref, c1w_ref, c1b_ref, c2w_ref, c2b_ref,
        coutw_ref, coutb_ref,
        o_ref,
        pad_ref,                                           # VMEM scratch (rows, hw + 2*lane_pad)
        *, w_img, lane_pad, cin_pad):
    hw = x0_ref.shape[2]
    b = pl.program_id(0)
    rows = pad_ref.shape[0]

    def silu(x):
        return x * jax.nn.sigmoid(x)

    # Column-validity masks for horizontally-shifted taps (x = lane % w_img).
    xcol = jax.lax.broadcasted_iota(jnp.int32, (1, hw), 1) % w_img
    mask_l = xcol >= 1                  # tap kx == 0 reads source x-1
    mask_r = xcol <= w_img - 2          # tap kx == 2 reads source x+1

    # Keep only the left/right lane-pad strips zero (vertical taps read them as
    # the conv's zero padding).  The centre strip is rewritten by every conv
    # before it is read, so it never needs clearing.  Done per-iteration so the
    # kernel is correct even when the batch grid is split across TensorCores.
    pad_ref[:, 0:lane_pad] = jnp.zeros((rows, lane_pad), jnp.float32)
    pad_ref[:, lane_pad + hw:] = jnp.zeros((rows, lane_pad), jnp.float32)

    def conv3x3(h, w_ref, b_ref):
        # h: (cin, hw) channel-major, cin a multiple of 8.
        # w_ref: (cout, 9*cin) flattened tap-major / cin-minor.
        # b_ref: (cout, 1)
        cin = h.shape[0]
        pad_ref[0:cin, lane_pad:lane_pad + hw] = h
        taps = []
        for ky in range(3):
            for kx in range(3):
                s = (ky - 1) * w_img + (kx - 1)
                sh = pad_ref[0:cin, lane_pad + s:lane_pad + s + hw]
                if kx == 0:
                    sh = jnp.where(mask_l, sh, 0.0)
                elif kx == 2:
                    sh = jnp.where(mask_r, sh, 0.0)
                taps.append(sh)
        stacked = jnp.concatenate(taps, axis=0)            # (9*cin, hw)
        out = jnp.dot(w_ref[...], stacked,                 # single k=9*cin MXU pass
                      preferred_element_type=jnp.float32)
        return out + b_ref[...]

    # ---- forward diffusion: x_t = sqrt(ab[t])*x0 + sqrt(1 - ab[t])*noise ----
    ab = ab_sref[t_sref[b]]                                     # scalar gather in SMEM
    xt = jnp.sqrt(ab) * x0_ref[0] + jnp.sqrt(1.0 - ab) * noise_ref[0]   # (C, hw)

    c = xt.shape[0]
    if c < cin_pad:                      # pad channels to a sublane multiple (8)
        xt = jnp.concatenate(
            [xt, jnp.zeros((cin_pad - c, hw), jnp.float32)], axis=0)

    # ---- time-embedding MLP (tiny: VPU multiply + XLU reduce, no MXU needed) ----
    e_row = temb_ref[0]                                                        # (1, EMB)
    l1 = jnp.sum(tw1t_ref[...] * e_row, axis=1, keepdims=True) + tb1_ref[...]  # (EMB, 1)
    l1 = silu(l1)
    l2 = jnp.sum(tw2_ref[...] * l1, axis=0, keepdims=True) + tb2_ref[...]      # (1, EMB)
    tproj = jnp.sum(twpt_ref[...] * l2, axis=1, keepdims=True) + tbp_ref[...]  # (F, 1)

    # ---- synthetic UNet (all activations (F, hw), lane-dense) ----
    h0 = silu(conv3x3(xt, cinw_ref, cinb_ref))             # conv_in + SiLU
    h1 = conv3x3(h0, c1w_ref, c1b_ref)                     # conv1
    h1 = silu(h1 + tproj)                                  # fused temb-add + SiLU
    h2 = silu(conv3x3(h1, c2w_ref, c2b_ref) + h0)          # conv2 + residual + SiLU
    eps = conv3x3(h2, coutw_ref, coutb_ref)                # conv_out (C, hw)

    o_ref[0] = eps


def ddpm_forward(kparams, alpha_bar, x0_nchw, noise_nchw, t):
    """Fused DDPM forward: NCHW in, NCHW eps-prediction out, one pallas_call."""
    n, c, h_img, w_img = x0_nchw.shape
    hw = h_img * w_img
    emb = kparams["t_w1T"].shape[0]
    feat = kparams["c1_w"].shape[0]
    cin_pad = kparams["cin_w"].shape[1] // 9
    rows = max(feat, cin_pad)
    lane_pad = 128                 # >= w_img + 1; keeps the scratch store lane-aligned

    # NCHW flattened per batch IS the channel-major (C, H*W) layout -> no transpose.
    x0 = x0_nchw.reshape(n, c, hw)
    noise = noise_nchw.reshape(n, c, hw)
    sin_emb = sinusoidal_embedding(t, emb).reshape(n, 1, emb)

    full = lambda shape: pl.BlockSpec(shape, lambda b, *_: (0,) * len(shape))
    per_b = lambda shape: pl.BlockSpec(
        shape, lambda b, *_: (b,) + (0,) * (len(shape) - 1))

    grid_spec = pltpu.PrefetchScalarGridSpec(
        num_scalar_prefetch=2,                 # t, alpha_bar -> SMEM
        grid=(n,),
        in_specs=[
            per_b((1, c, hw)),                 # x0
            per_b((1, c, hw)),                 # noise
            per_b((1, 1, emb)),                # sinusoidal time embedding (row)
            full((emb, emb)),                  # t_w1^T
            full((emb, 1)),                    # t_b1 (col)
            full((emb, emb)),                  # t_w2
            full((1, emb)),                    # t_b2 (row)
            full((feat, emb)),                 # t_wp^T
            full((feat, 1)),                   # t_bp (col)
            full((feat, 9 * cin_pad)),         # conv_in weight (cout, 9*cin_pad)
            full((feat, 1)),
            full((feat, 9 * feat)),            # conv1 weight
            full((feat, 1)),
            full((feat, 9 * feat)),            # conv2 weight
            full((feat, 1)),
            full((c, 9 * feat)),               # conv_out weight
            full((c, 1)),
        ],
        out_specs=per_b((1, c, hw)),
        scratch_shapes=[pltpu.VMEM((rows, hw + 2 * lane_pad), jnp.float32)],
    )

    eps = pl.pallas_call(
        functools.partial(_fused_ddpm_kernel, w_img=w_img, lane_pad=lane_pad,
                          cin_pad=cin_pad),
        out_shape=jax.ShapeDtypeStruct((n, c, hw), jnp.float32),
        grid_spec=grid_spec,
        compiler_params=pltpu.CompilerParams(
            dimension_semantics=("parallel",)),   # batch -> both TCs on v7x
    )(t.astype(jnp.int32), alpha_bar.astype(jnp.float32),
      x0, noise, sin_emb,
      kparams["t_w1T"], kparams["t_b1"], kparams["t_w2"], kparams["t_b2"],
      kparams["t_wpT"], kparams["t_bp"],
      kparams["cin_w"], kparams["cin_b"], kparams["c1_w"], kparams["c1_b"],
      kparams["c2_w"], kparams["c2_b"], kparams["cout_w"], kparams["cout_b"])
    return eps.reshape(n, c, h_img, w_img)


# -----------------------------------------------------------------------------
# Parameters (synthetic UNet) and kernel-layout prep
# -----------------------------------------------------------------------------
def sinusoidal_embedding(t, dim):
    half = dim // 2
    freqs = jnp.exp(-jnp.log(10000.0) * jnp.arange(half, dtype=jnp.float32) / half)
    args = t.astype(jnp.float32)[:, None] * freqs[None, :]
    return jnp.concatenate([jnp.sin(args), jnp.cos(args)], axis=-1)


def init_unet_params(key, c_in=4, feat=32, emb=32):
    ks = jax.random.split(key, 7)
    w = lambda k, s, sc: jax.random.normal(k, s, jnp.float32) * sc
    return dict(
        t_w1=w(ks[0], (emb, emb), 0.1),  t_b1=jnp.zeros((emb,), jnp.float32),
        t_w2=w(ks[1], (emb, emb), 0.1),  t_b2=jnp.zeros((emb,), jnp.float32),
        t_wp=w(ks[2], (emb, feat), 0.1), t_bp=jnp.zeros((feat,), jnp.float32),
        conv_in_w=w(ks[3], (3, 3, c_in, feat), 0.1),   conv_in_b=jnp.zeros((feat,), jnp.float32),
        conv1_w=w(ks[4], (3, 3, feat, feat), 0.05),    conv1_b=jnp.zeros((feat,), jnp.float32),
        conv2_w=w(ks[5], (3, 3, feat, feat), 0.05),    conv2_b=jnp.zeros((feat,), jnp.float32),
        conv_out_w=w(ks[6], (3, 3, feat, c_in), 0.1),  conv_out_b=jnp.zeros((c_in,), jnp.float32),
    )


def prep_kernel_params(p):
    """Re-layout params for the fused kernel: conv weights flattened to
    (cout, 9*cin) with tap-major / cin-minor columns (matches the in-kernel
    stacked-tap operand); conv_in's cin zero-padded to a sublane multiple (8);
    transposed / column- or row-shaped time-MLP parameters."""
    def tapcat(w):
        kh, kw, cin, cout = w.shape
        return jnp.transpose(
            w.reshape(kh * kw, cin, cout), (2, 0, 1)).reshape(cout, kh * kw * cin)
    col = lambda v: v.reshape(-1, 1)
    row = lambda v: v.reshape(1, -1)

    cin_w = p["conv_in_w"]
    c_in = cin_w.shape[2]
    c_pad = ((c_in + 7) // 8) * 8
    if c_pad != c_in:
        cin_w = jnp.pad(cin_w, ((0, 0), (0, 0), (0, c_pad - c_in), (0, 0)))

    return dict(
        t_w1T=p["t_w1"].T, t_b1=col(p["t_b1"]),
        t_w2=p["t_w2"],    t_b2=row(p["t_b2"]),
        t_wpT=p["t_wp"].T, t_bp=col(p["t_bp"]),
        cin_w=tapcat(cin_w),          cin_b=col(p["conv_in_b"]),
        c1_w=tapcat(p["conv1_w"]),    c1_b=col(p["conv1_b"]),
        c2_w=tapcat(p["conv2_w"]),    c2_b=col(p["conv2_b"]),
        cout_w=tapcat(p["conv_out_w"]), cout_b=col(p["conv_out_b"]),
    )


# -----------------------------------------------------------------------------
# Pure-JAX reference (same forward graph) for a correctness check
# -----------------------------------------------------------------------------
def _silu(x):
    return x * jax.nn.sigmoid(x)


def reference_forward(params, alpha_bar, x0_nchw, noise_nchw, t):
    x0 = jnp.transpose(x0_nchw, (0, 2, 3, 1))
    noise = jnp.transpose(noise_nchw, (0, 2, 3, 1))
    ab = alpha_bar[t][:, None, None, None]
    xt = jnp.sqrt(ab) * x0 + jnp.sqrt(1.0 - ab) * noise

    emb = sinusoidal_embedding(t, params["t_w1"].shape[0])
    e = _silu(jnp.dot(emb, params["t_w1"], precision="highest") + params["t_b1"])
    e = jnp.dot(e, params["t_w2"], precision="highest") + params["t_b2"]
    tproj = jnp.dot(e, params["t_wp"], precision="highest") + params["t_bp"]

    def conv(x, w, bias):
        n, h, wd, cin = x.shape
        cout = w.shape[-1]
        xp = jnp.pad(x, ((0, 0), (1, 1), (1, 1), (0, 0)))
        cols = jnp.concatenate(
            [xp[:, dy:dy + h, dx:dx + wd, :] for dy in range(3) for dx in range(3)],
            axis=-1).reshape(n * h * wd, 9 * cin)
        y = jnp.dot(cols, w.reshape(9 * cin, cout), precision="highest") + bias
        return y.reshape(n, h, wd, cout)

    h0 = _silu(conv(xt, params["conv_in_w"], params["conv_in_b"]))
    h1 = conv(h0, params["conv1_w"], params["conv1_b"])
    h1 = _silu(h1 + tproj[:, None, None, :])
    h2 = _silu(conv(h1, params["conv2_w"], params["conv2_b"]) + h0)
    eps = conv(h2, params["conv_out_w"], params["conv_out_b"])
    return jnp.transpose(eps, (0, 3, 1, 2))


# TODO(synk): VAE encode/decode, the iterative reverse_diffusion_process /
# scheduler.step sampling loop, optimizer + LambdaLR, MSE loss and checkpoint
# save/load are training/inference-loop machinery outside forward() and are
# not kernelized.

if __name__ == "__main__":
    key = jax.random.PRNGKey(0)
    k1, k2, k3, k4 = jax.random.split(key, 4)

    N, C, H, W = 2, 4, 16, 16
    FEAT, EMB = 32, 32
    T = 1000                                             # num_train_timesteps

    x0 = jax.random.normal(k1, (N, C, H, W), jnp.float32)
    noise = jax.random.normal(k2, (N, C, H, W), jnp.float32)
    t = jax.random.randint(k3, (N,), 0, T, jnp.int32)    # torch.randint(0, T, (N,))

    beta = jnp.linspace(1e-4, 0.02, T, dtype=jnp.float32)
    alpha_bar = jnp.cumprod(1.0 - beta)

    params = init_unet_params(k4, c_in=C, feat=FEAT, emb=EMB)
    kparams = prep_kernel_params(params)

    out = jax.jit(ddpm_forward)(kparams, alpha_bar, x0, noise, t)
    out = jax.block_until_ready(out)
    assert out.shape == (N, C, H, W) and out.dtype == jnp.float32
    assert bool(jnp.all(jnp.isfinite(out)))

    # correctness check against a pure-JAX reference of the same forward graph
    ref = jax.jit(reference_forward)(params, alpha_bar, x0, noise, t)
    err = float(jnp.max(jnp.abs(out - ref)))
    assert err < 0.15, f"mismatch vs reference: max abs err = {err}"

    print("KERNEL_OK")
</pallas_src>

<mosaic_0001>
module attributes {stable_mosaic.version = 11 : i64} {
  func.func @_fused_ddpm_kernel(%arg0: i32, %arg1: memref<2xi32, #tpu.memory_space<smem>>, %arg2: memref<1000xf32, #tpu.memory_space<smem>>, %arg3: memref<1x4x256xf32, #tpu.memory_space<vmem>>, %arg4: memref<1x4x256xf32, #tpu.memory_space<vmem>>, %arg5: memref<1x1x32xf32, #tpu.memory_space<vmem>>, %arg6: memref<32x32xf32, #tpu.memory_space<vmem>>, %arg7: memref<32x1xf32, #tpu.memory_space<vmem>>, %arg8: memref<32x32xf32, #tpu.memory_space<vmem>>, %arg9: memref<1x32xf32, #tpu.memory_space<vmem>>, %arg10: memref<32x32xf32, #tpu.memory_space<vmem>>, %arg11: memref<32x1xf32, #tpu.memory_space<vmem>>, %arg12: memref<32x72xf32, #tpu.memory_space<vmem>>, %arg13: memref<32x1xf32, #tpu.memory_space<vmem>>, %arg14: memref<32x288xf32, #tpu.memory_space<vmem>>, %arg15: memref<32x1xf32, #tpu.memory_space<vmem>>, %arg16: memref<32x288xf32, #tpu.memory_space<vmem>>, %arg17: memref<32x1xf32, #tpu.memory_space<vmem>>, %arg18: memref<4x288xf32, #tpu.memory_space<vmem>>, %arg19: memref<4x1xf32, #tpu.memory_space<vmem>>, %arg20: memref<1x4x256xf32, #tpu.memory_space<vmem>>, %arg21: memref<32x512xf32, #tpu.memory_space<vmem>>) attributes {dimension_semantics = [#tpu.dimension_semantics<parallel>], iteration_bounds = array<i64: 2>, scalar_prefetch = 2 : i64, scratch_operands = 1 : i64, tpu.core_type = #tpu.core_type<tc>, window_params = [{transform_indices = @transform_0, window_bounds = array<i64: 1, 4, 256>}, {transform_indices = @transform_1, window_bounds = array<i64: 1, 4, 256>}, {transform_indices = @transform_2, window_bounds = array<i64: 1, 1, 32>}, {pipeline_mode = #tpu.pipeline_mode<synchronous>, transform_indices = @transform_3, window_bounds = array<i64: 32, 32>}, {pipeline_mode = #tpu.pipeline_mode<synchronous>, transform_indices = @transform_4, window_bounds = array<i64: 32, 1>}, {pipeline_mode = #tpu.pipeline_mode<synchronous>, transform_indices = @transform_5, window_bounds = array<i64: 32, 32>}, {pipeline_mode = #tpu.pipeline_mode<synchronous>, transform_indices = @transform_6, window_bounds = array<i64: 1, 32>}, {pipeline_mode = #tpu.pipeline_mode<synchronous>, transform_indices = @transform_7, window_bounds = array<i64: 32, 32>}, {pipeline_mode = #tpu.pipeline_mode<synchronous>, transform_indices = @transform_8, window_bounds = array<i64: 32, 1>}, {pipeline_mode = #tpu.pipeline_mode<synchronous>, transform_indices = @transform_9, window_bounds = array<i64: 32, 72>}, {pipeline_mode = #tpu.pipeline_mode<synchronous>, transform_indices = @transform_10, window_bounds = array<i64: 32, 1>}, {pipeline_mode = #tpu.pipeline_mode<synchronous>, transform_indices = @transform_11, window_bounds = array<i64: 32, 288>}, {pipeline_mode = #tpu.pipeline_mode<synchronous>, transform_indices = @transform_12, window_bounds = array<i64: 32, 1>}, {pipeline_mode = #tpu.pipeline_mode<synchronous>, transform_indices = @transform_13, window_bounds = array<i64: 32, 288>}, {pipeline_mode = #tpu.pipeline_mode<synchronous>, transform_indices = @transform_14, window_bounds = array<i64: 32, 1>}, {pipeline_mode = #tpu.pipeline_mode<synchronous>, transform_indices = @transform_15, window_bounds = array<i64: 4, 288>}, {pipeline_mode = #tpu.pipeline_mode<synchronous>, transform_indices = @transform_16, window_bounds = array<i64: 4, 1>}, {transform_indices = @transform_17, window_bounds = array<i64: 1, 4, 256>}]} {
    %0 = tpu.iota {dimensions = array<i32: 1>} : vector<1x256xi32>
    %c16_i32 = arith.constant 16 : i32
    %c0_i32 = arith.constant 0 : i32
    %1 = arith.cmpi eq, %c16_i32, %c0_i32 : i32
    %c1_i32 = arith.constant 1 : i32
    %2 = arith.select %1, %c1_i32, %c16_i32 : i32
    %3 = vector.broadcast %2 : i32 to vector<1x256xi32>
    %4 = arith.remsi %0, %3 : vector<1x256xi32>
    %c0_i32_0 = arith.constant 0 : i32
    %5 = vector.broadcast %c0_i32_0 : i32 to vector<1x256xi32>
    %6 = arith.cmpi ne, %4, %5 : vector<1x256xi32>
    %c0_i32_1 = arith.constant 0 : i32
    %7 = vector.broadcast %c0_i32_1 : i32 to vector<1x256xi32>
    %8 = arith.cmpi slt, %4, %7 : vector<1x256xi32>
    %c0_i32_2 = arith.constant 0 : i32
    %9 = arith.cmpi slt, %2, %c0_i32_2 : i32
    %10 = vector.broadcast %9 : i1 to vector<1x256xi1>
    %11 = vector.broadcast %10 : vector<1x256xi1> to vector<1x256xi1>
    %12 = arith.xori %8, %11 : vector<1x256xi1>
    %13 = arith.andi %12, %6 : vector<1x256xi1>
    %14 = vector.broadcast %2 : i32 to vector<1x256xi32>
    %15 = arith.addi %4, %14 : vector<1x256xi32>
    %16 = arith.select %13, %15, %4 : vector<1x256xi1>, vector<1x256xi32>
    %c1_i32_3 = arith.constant 1 : i32
    %17 = vector.broadcast %c1_i32_3 : i32 to vector<1x256xi32>
    %18 = arith.cmpi sge, %16, %17 : vector<1x256xi32>
    %c14_i32 = arith.constant 14 : i32
    %19 = vector.broadcast %c14_i32 : i32 to vector<1x256xi32>
    %20 = arith.cmpi sle, %16, %19 : vector<1x256xi32>
    %cst = arith.constant 0.000000e+00 : f32
    %21 = vector.broadcast %cst : f32 to vector<32x128xf32>
    %c0 = arith.constant 0 : index
    %c0_4 = arith.constant 0 : index
    %22 = vector.load %arg21[%c0, %c0_4] : memref<32x512xf32, #tpu.memory_space<vmem>>, vector<32x128xf32>
    tpu.vector_store %arg21[%c0, %c0_4], %21 {strides = array<i32>} : memref<32x512xf32, #tpu.memory_space<vmem>>, vector<32x128xf32>,
    %cst_5 = arith.constant 0.000000e+00 : f32
    %23 = vector.broadcast %cst_5 : f32 to vector<32x128xf32>
    %c0_6 = arith.constant 0 : index
    %c384 = arith.constant 384 : index
    %24 = vector.load %arg21[%c0_6, %c384] : memref<32x512xf32, #tpu.memory_space<vmem>>, vector<32x128xf32>
    tpu.vector_store %arg21[%c0_6, %c384], %23 {strides = array<i32>} : memref<32x512xf32, #tpu.memory_space<vmem>>, vector<32x128xf32>,
    %25 = arith.index_cast %arg0 : i32 to index
    %26 = memref.load %arg1[%25] : memref<2xi32, #tpu.memory_space<smem>>
    %27 = arith.index_cast %26 : i32 to index
    %28 = memref.load %arg2[%27] : memref<1000xf32, #tpu.memory_space<smem>>
    %29 = math.sqrt %28 : f32
    %c0_7 = arith.constant 0 : index
    %c0_8 = arith.constant 0 : index
    %c0_9 = arith.constant 0 : index
    %30 = vector.load %arg3[%c0_7, %c0_8, %c0_9] : memref<1x4x256xf32, #tpu.memory_space<vmem>>, vector<1x4x256xf32>
    %31 = vector.shape_cast %30 : vector<1x4x256xf32> to vector<4x256xf32>
    %32 = vector.broadcast %29 : f32 to vector<4x256xf32>
    %33 = arith.mulf %32, %31 : vector<4x256xf32>
    %cst_10 = arith.constant 1.000000e+00 : f32
    %34 = arith.subf %cst_10, %28 : f32
    %35 = math.sqrt %34 : f32
    %c0_11 = arith.constant 0 : index
    %c0_12 = arith.constant 0 : index
    %c0_13 = arith.constant 0 : index
    %36 = vector.load %arg4[%c0_11, %c0_12, %c0_13] : memref<1x4x256xf32, #tpu.memory_space<vmem>>, vector<1x4x256xf32>
    %37 = vector.shape_cast %36 : vector<1x4x256xf32> to vector<4x256xf32>
    %38 = vector.broadcast %35 : f32 to vector<4x256xf32>
    %39 = arith.mulf %38, %37 : vector<4x256xf32>
    %40 = arith.addf %33, %39 : vector<4x256xf32>
    %cst_14 = arith.constant 0.000000e+00 : f32
    %41 = vector.broadcast %cst_14 : f32 to vector<4x256xf32>
    %42 = tpu.concatenate %40, %41 in 0 : vector<4x256xf32>, vector<4x256xf32> -> vector<8x256xf32>
    %c0_15 = arith.constant 0 : index
    %c0_16 = arith.constant 0 : index
    %c0_17 = arith.constant 0 : index
    %43 = vector.load %arg5[%c0_15, %c0_16, %c0_17] : memref<1x1x32xf32, #tpu.memory_space<vmem>>, vector<1x1x32xf32>
    %44 = vector.shape_cast %43 : vector<1x1x32xf32> to vector<1x32xf32>
    %c0_18 = arith.constant 0 : index
    %c0_19 = arith.constant 0 : index
    %45 = vector.load %arg6[%c0_18, %c0_19] : memref<32x32xf32, #tpu.memory_space<vmem>>, vector<32x32xf32>
    %46 = vector.broadcast %44 : vector<1x32xf32> to vector<32x32xf32>
    %47 = arith.mulf %45, %46 : vector<32x32xf32>
    %cst_20 = arith.constant dense<0.000000e+00> : vector<32xf32>
    %48 = vector.multi_reduction <add>, %47, %cst_20 [1] : vector<32x32xf32> to vector<32xf32>
    %49 = vector.shape_cast %48 : vector<32xf32> to vector<32x1xf32>
    %c0_21 = arith.constant 0 : index
    %c0_22 = arith.constant 0 : index
    %50 = vector.load %arg7[%c0_21, %c0_22] : memref<32x1xf32, #tpu.memory_space<vmem>>, vector<32x1xf32>
    %51 = arith.addf %49, %50 : vector<32x1xf32>
    %52 = arith.negf %51 : vector<32x1xf32>
    %53 = math.exp %52 : vector<32x1xf32>
    %cst_23 = arith.constant 1.000000e+00 : f32
    %54 = vector.broadcast %cst_23 : f32 to vector<32x1xf32>
    %55 = arith.addf %54, %53 : vector<32x1xf32>
    %56 = arith.divf %54, %55 : vector<32x1xf32>
    %57 = arith.mulf %51, %56 : vector<32x1xf32>
    %c0_24 = arith.constant 0 : index
    %c0_25 = arith.constant 0 : index
    %58 = vector.load %arg8[%c0_24, %c0_25] : memref<32x32xf32, #tpu.memory_space<vmem>>, vector<32x32xf32>
    %59 = vector.broadcast %57 : vector<32x1xf32> to vector<32x32xf32>
    %60 = arith.mulf %58, %59 : vector<32x32xf32>
    %cst_26 = arith.constant dense<0.000000e+00> : vector<32xf32>
    %61 = vector.multi_reduction <add>, %60, %cst_26 [0] : vector<32x32xf32> to vector<32xf32>
    %62 = vector.shape_cast %61 : vector<32xf32> to vector<1x32xf32>
    %c0_27 = arith.constant 0 : index
    %c0_28 = arith.constant 0 : index
    %63 = vector.load %arg9[%c0_27, %c0_28] : memref<1x32xf32, #tpu.memory_space<vmem>>, vector<1x32xf32>
    %64 = arith.addf %62, %63 : vector<1x32xf32>
    %c0_29 = arith.constant 0 : index
    %c0_30 = arith.constant 0 : index
    %65 = vector.load %arg10[%c0_29, %c0_30] : memref<32x32xf32, #tpu.memory_space<vmem>>, vector<32x32xf32>
    %66 = vector.broadcast %64 : vector<1x32xf32> to vector<32x32xf32>
    %67 = arith.mulf %65, %66 : vector<32x32xf32>
    %cst_31 = arith.constant dense<0.000000e+00> : vector<32xf32>
    %68 = vector.multi_reduction <add>, %67, %cst_31 [1] : vector<32x32xf32> to vector<32xf32>
    %69 = vector.shape_cast %68 : vector<32xf32> to vector<32x1xf32>
    %c0_32 = arith.constant 0 : index
    %c0_33 = arith.constant 0 : index
    %70 = vector.load %arg11[%c0_32, %c0_33] : memref<32x1xf32, #tpu.memory_space<vmem>>, vector<32x1xf32>
    %71 = arith.addf %69, %70 : vector<32x1xf32>
    %c0_34 = arith.constant 0 : index
    %c128 = arith.constant 128 : index
    %72 = vector.load %arg21[%c0_34, %c128] : memref<32x512xf32, #tpu.memory_space<vmem>>, vector<8x256xf32>
    tpu.vector_store %arg21[%c0_34, %c128], %42 {strides = array<i32>} : memref<32x512xf32, #tpu.memory_space<vmem>>, vector<8x256xf32>,
    %c0_35 = arith.constant 0 : index
    %c111 = arith.constant 111 : index
    %73 = vector.load %arg21[%c0_35, %c111] : memref<32x512xf32, #tpu.memory_space<vmem>>, vector<8x256xf32>
    %cst_36 = arith.constant 0.000000e+00 : f32
    %74 = vector.shape_cast %18 : vector<1x256xi1> to vector<1x256xi1>
    %75 = vector.broadcast %74 : vector<1x256xi1> to vector<8x256xi1>
    %76 = vector.broadcast %cst_36 : f32 to vector<8x256xf32>
    %77 = arith.select %75, %73, %76 : vector<8x256xi1>, vector<8x256xf32>
    %c0_37 = arith.constant 0 : index
    %c112 = arith.constant 112 : index
    %78 = vector.load %arg21[%c0_37, %c112] : memref<32x512xf32, #tpu.memory_space<vmem>>, vector<8x256xf32>
    %c0_38 = arith.constant 0 : index
    %c113 = arith.constant 113 : index
    %79 = vector.load %arg21[%c0_38, %c113] : memref<32x512xf32, #tpu.memory_space<vmem>>, vector<8x256xf32>
    %cst_39 = arith.constant 0.000000e+00 : f32
    %80 = vector.shape_cast %20 : vector<1x256xi1> to vector<1x256xi1>
    %81 = vector.broadcast %80 : vector<1x256xi1> to vector<8x256xi1>
    %82 = vector.broadcast %cst_39 : f32 to vector<8x256xf32>
    %83 = arith.select %81, %79, %82 : vector<8x256xi1>, vector<8x256xf32>
    %c0_40 = arith.constant 0 : index
    %c127 = arith.constant 127 : index
    %84 = vector.load %arg21[%c0_40, %c127] : memref<32x512xf32, #tpu.memory_space<vmem>>, vector<8x256xf32>
    %cst_41 = arith.constant 0.000000e+00 : f32
    %85 = vector.shape_cast %18 : vector<1x256xi1> to vector<1x256xi1>
    %86 = vector.broadcast %85 : vector<1x256xi1> to vector<8x256xi1>
    %87 = vector.broadcast %cst_41 : f32 to vector<8x256xf32>
    %88 = arith.select %86, %84, %87 : vector<8x256xi1>, vector<8x256xf32>
    %c0_42 = arith.constant 0 : index
    %c128_43 = arith.constant 128 : index
    %89 = vector.load %arg21[%c0_42, %c128_43] : memref<32x512xf32, #tpu.memory_space<vmem>>, vector<8x256xf32>
    %c0_44 = arith.constant 0 : index
    %c129 = arith.constant 129 : index
    %90 = vector.load %arg21[%c0_44, %c129] : memref<32x512xf32, #tpu.memory_space<vmem>>, vector<8x256xf32>
    %cst_45 = arith.constant 0.000000e+00 : f32
    %91 = vector.shape_cast %20 : vector<1x256xi1> to vector<1x256xi1>
    %92 = vector.broadcast %91 : vector<1x256xi1> to vector<8x256xi1>
    %93 = vector.broadcast %cst_45 : f32 to vector<8x256xf32>
    %94 = arith.select %92, %90, %93 : vector<8x256xi1>, vector<8x256xf32>
    %c0_46 = arith.constant 0 : index
    %c143 = arith.constant 143 : index
    %95 = vector.load %arg21[%c0_46, %c143] : memref<32x512xf32, #tpu.memory_space<vmem>>, vector<8x256xf32>
    %cst_47 = arith.constant 0.000000e+00 : f32
    %96 = vector.shape_cast %18 : vector<1x256xi1> to vector<1x256xi1>
    %97 = vector.broadcast %96 : vector<1x256xi1> to vector<8x256xi1>
    %98 = vector.broadcast %cst_47 : f32 to vector<8x256xf32>
    %99 = arith.select %97, %95, %98 : vector<8x256xi1>, vector<8x256xf32>
    %c0_48 = arith.constant 0 : index
    %c144 = arith.constant 144 : index
    %100 = vector.load %arg21[%c0_48, %c144] : memref<32x512xf32, #tpu.memory_space<vmem>>, vector<8x256xf32>
    %c0_49 = arith.constant 0 : index
    %c145 = arith.constant 145 : index
    %101 = vector.load %arg21[%c0_49, %c145] : memref<32x512xf32, #tpu.memory_space<vmem>>, vector<8x256xf32>
    %cst_50 = arith.constant 0.000000e+00 : f32
    %102 = vector.shape_cast %20 : vector<1x256xi1> to vector<1x256xi1>
    %103 = vector.broadcast %102 : vector<1x256xi1> to vector<8x256xi1>
    %104 = vector.broadcast %cst_50 : f32 to vector<8x256xf32>
    %105 = arith.select %103, %101, %104 : vector<8x256xi1>, vector<8x256xf32>
    %106 = tpu.concatenate %77, %78, %83, %88, %89, %94, %99, %100, %105 in 0 : vector<8x256xf32>, vector<8x256xf32>, vector<8x256xf32>, vector<8x256xf32>, vector<8x256xf32>, vector<8x256xf32>, vector<8x256xf32>, vector<8x256xf32>, vector<8x256xf32> -> vector<72x256xf32>
    %c0_51 = arith.constant 0 : index
    %c0_52 = arith.constant 0 : index
    %107 = vector.load %arg12[%c0_51, %c0_52] : memref<32x72xf32, #tpu.memory_space<vmem>>, vector<32x72xf32>
    %cst_53 = arith.constant dense<0.000000e+00> : vector<32x256xf32>
    %108 = tpu.matmul %107, %106, %cst_53 {dimension_numbers = #tpu.dot_dimension_numbers<[1], [0], [0], [1], [0, 0, 1, 1], [], []>} : vector<32x72xf32>, vector<72x256xf32>, vector<32x256xf32> -> vector<32x256xf32>
    %c0_54 = arith.constant 0 : index
    %c0_55 = arith.constant 0 : index
    %109 = vector.load %arg13[%c0_54, %c0_55] : memref<32x1xf32, #tpu.memory_space<vmem>>, vector<32x1xf32>
    %110 = vector.broadcast %109 : vector<32x1xf32> to vector<32x256xf32>
    %111 = arith.addf %108, %110 : vector<32x256xf32>
    %112 = arith.negf %111 : vector<32x256xf32>
    %113 = math.exp %112 : vector<32x256xf32>
    %cst_56 = arith.constant 1.000000e+00 : f32
    %114 = vector.broadcast %cst_56 : f32 to vector<32x256xf32>
    %115 = arith.addf %114, %113 : vector<32x256xf32>
    %116 = arith.divf %114, %115 : vector<32x256xf32>
    %117 = arith.mulf %111, %116 : vector<32x256xf32>
    %c0_57 = arith.constant 0 : index
    %c128_58 = arith.constant 128 : index
    %118 = vector.load %arg21[%c0_57, %c128_58] : memref<32x512xf32, #tpu.memory_space<vmem>>, vector<32x256xf32>
    tpu.vector_store %arg21[%c0_57, %c128_58], %117 {strides = array<i32>} : memref<32x512xf32, #tpu.memory_space<vmem>>, vector<32x256xf32>,
    %c0_59 = arith.constant 0 : index
    %c111_60 = arith.constant 111 : index
    %119 = vector.load %arg21[%c0_59, %c111_60] : memref<32x512xf32, #tpu.memory_space<vmem>>, vector<32x256xf32>
    %cst_61 = arith.constant 0.000000e+00 : f32
    %120 = vector.shape_cast %18 : vector<1x256xi1> to vector<1x256xi1>
    %121 = vector.broadcast %120 : vector<1x256xi1> to vector<32x256xi1>
    %122 = vector.broadcast %cst_61 : f32 to vector<32x256xf32>
    %123 = arith.select %121, %119, %122 : vector<32x256xi1>, vector<32x256xf32>
    %c0_62 = arith.constant 0 : index
    %c112_63 = arith.constant 112 : index
    %124 = vector.load %arg21[%c0_62, %c112_63] : memref<32x512xf32, #tpu.memory_space<vmem>>, vector<32x256xf32>
    %c0_64 = arith.constant 0 : index
    %c113_65 = arith.constant 113 : index
    %125 = vector.load %arg21[%c0_64, %c113_65] : memref<32x512xf32, #tpu.memory_space<vmem>>, vector<32x256xf32>
    %cst_66 = arith.constant 0.000000e+00 : f32
    %126 = vector.shape_cast %20 : vector<1x256xi1> to vector<1x256xi1>
    %127 = vector.broadcast %126 : vector<1x256xi1> to vector<32x256xi1>
    %128 = vector.broadcast %cst_66 : f32 to vector<32x256xf32>
    %129 = arith.select %127, %125, %128 : vector<32x256xi1>, vector<32x256xf32>
    %c0_67 = arith.constant 0 : index
    %c127_68 = arith.constant 127 : index
    %130 = vector.load %arg21[%c0_67, %c127_68] : memref<32x512xf32, #tpu.memory_space<vmem>>, vector<32x256xf32>
    %cst_69 = arith.constant 0.000000e+00 : f32
    %131 = vector.shape_cast %18 : vector<1x256xi1> to vector<1x256xi1>
    %132 = vector.broadcast %131 : vector<1x256xi1> to vector<32x256xi1>
    %133 = vector.broadcast %cst_69 : f32 to vector<32x256xf32>
    %134 = arith.select %132, %130, %133 : vector<32x256xi1>, vector<32x256xf32>
    %c0_70 = arith.constant 0 : index
    %c128_71 = arith.constant 128 : index
    %135 = vector.load %arg21[%c0_70, %c128_71] : memref<32x512xf32, #tpu.memory_space<vmem>>, vector<32x256xf32>
    %c0_72 = arith.constant 0 : index
    %c129_73 = arith.constant 129 : index
    %136 = vector.load %arg21[%c0_72, %c129_73] : memref<32x512xf32, #tpu.memory_space<vmem>>, vector<32x256xf32>
    %cst_74 = arith.constant 0.000000e+00 : f32
    %137 = vector.shape_cast %20 : vector<1x256xi1> to vector<1x256xi1>
    %138 = vector.broadcast %137 : vector<1x256xi1> to vector<32x256xi1>
    %139 = vector.broadcast %cst_74 : f32 to vector<32x256xf32>
    %140 = arith.select %138, %136, %139 : vector<32x256xi1>, vector<32x256xf32>
    %c0_75 = arith.constant 0 : index
    %c143_76 = arith.constant 143 : index
    %141 = vector.load %arg21[%c0_75, %c143_76] : memref<32x512xf32, #tpu.memory_space<vmem>>, vector<32x256xf32>
    %cst_77 = arith.constant 0.000000e+00 : f32
    %142 = vector.shape_cast %18 : vector<1x256xi1> to vector<1x256xi1>
    %143 = vector.broadcast %142 : vector<1x256xi1> to vector<32x256xi1>
    %144 = vector.broadcast %cst_77 : f32 to vector<32x256xf32>
    %145 = arith.select %143, %141, %144 : vector<32x256xi1>, vector<32x256xf32>
    %c0_78 = arith.constant 0 : index
    %c144_79 = arith.constant 144 : index
    %146 = vector.load %arg21[%c0_78, %c144_79] : memref<32x512xf32, #tpu.memory_space<vmem>>, vector<32x256xf32>
    %c0_80 = arith.constant 0 : index
    %c145_81 = arith.constant 145 : index
    %147 = vector.load %arg21[%c0_80, %c145_81] : memref<32x512xf32, #tpu.memory_space<vmem>>, vector<32x256xf32>
    %cst_82 = arith.constant 0.000000e+00 : f32
    %148 = vector.shape_cast %20 : vector<1x256xi1> to vector<1x256xi1>
    %149 = vector.broadcast %148 : vector<1x256xi1> to vector<32x256xi1>
    %150 = vector.broadcast %cst_82 : f32 to vector<32x256xf32>
    %151 = arith.select %149, %147, %150 : vector<32x256xi1>, vector<32x256xf32>
    %152 = tpu.concatenate %123, %124, %129, %134, %135, %140, %145, %146, %151 in 0 : vector<32x256xf32>, vector<32x256xf32>, vector<32x256xf32>, vector<32x256xf32>, vector<32x256xf32>, vector<32x256xf32>, vector<32x256xf32>, vector<32x256xf32>, vector<32x256xf32> -> vector<288x256xf32>
    %c0_83 = arith.constant 0 : index
    %c0_84 = arith.constant 0 : index
    %153 = vector.load %arg14[%c0_83, %c0_84] : memref<32x288xf32, #tpu.memory_space<vmem>>, vector<32x288xf32>
    %cst_85 = arith.constant dense<0.000000e+00> : vector<32x256xf32>
    %154 = tpu.matmul %153, %152, %cst_85 {dimension_numbers = #tpu.dot_dimension_numbers<[1], [0], [0], [1], [0, 0, 1, 1], [], []>} : vector<32x288xf32>, vector<288x256xf32>, vector<32x256xf32> -> vector<32x256xf32>
    %c0_86 = arith.constant 0 : index
    %c0_87 = arith.constant 0 : index
    %155 = vector.load %arg15[%c0_86, %c0_87] : memref<32x1xf32, #tpu.memory_space<vmem>>, vector<32x1xf32>
    %156 = vector.broadcast %155 : vector<32x1xf32> to vector<32x256xf32>
    %157 = arith.addf %154, %156 : vector<32x256xf32>
    %158 = vector.broadcast %71 : vector<32x1xf32> to vector<32x256xf32>
    %159 = arith.addf %157, %158 : vector<32x256xf32>
    %160 = arith.negf %159 : vector<32x256xf32>
    %161 = math.exp %160 : vector<32x256xf32>
    %cst_88 = arith.constant 1.000000e+00 : f32
    %162 = vector.broadcast %cst_88 : f32 to vector<32x256xf32>
    %163 = arith.addf %162, %161 : vector<32x256xf32>
    %164 = arith.divf %162, %163 : vector<32x256xf32>
    %165 = arith.mulf %159, %164 : vector<32x256xf32>
    %c0_89 = arith.constant 0 : index
    %c128_90 = arith.constant 128 : index
    %166 = vector.load %arg21[%c0_89, %c128_90] : memref<32x512xf32, #tpu.memory_space<vmem>>, vector<32x256xf32>
    tpu.vector_store %arg21[%c0_89, %c128_90], %165 {strides = array<i32>} : memref<32x512xf32, #tpu.memory_space<vmem>>, vector<32x256xf32>,
    %c0_91 = arith.constant 0 : index
    %c111_92 = arith.constant 111 : index
    %167 = vector.load %arg21[%c0_91, %c111_92] : memref<32x512xf32, #tpu.memory_space<vmem>>, vector<32x256xf32>
    %cst_93 = arith.constant 0.000000e+00 : f32
    %168 = vector.shape_cast %18 : vector<1x256xi1> to vector<1x256xi1>
    %169 = vector.broadcast %168 : vector<1x256xi1> to vector<32x256xi1>
    %170 = vector.broadcast %cst_93 : f32 to vector<32x256xf32>
    %171 = arith.select %169, %167, %170 : vector<32x256xi1>, vector<32x256xf32>
    %c0_94 = arith.constant 0 : index
    %c112_95 = arith.constant 112 : index
    %172 = vector.load %arg21[%c0_94, %c112_95] : memref<32x512xf32, #tpu.memory_space<vmem>>, vector<32x256xf32>
    %c0_96 = arith.constant 0 : index
    %c113_97 = arith.constant 113 : index
    %173 = vector.load %arg21[%c0_96, %c113_97] : memref<32x512xf32, #tpu.memory_space<vmem>>, vector<32x256xf32>
    %cst_98 = arith.constant 0.000000e+00 : f32
    %174 = vector.shape_cast %20 : vector<1x256xi1> to vector<1x256xi1>
    %175 = vector.broadcast %174 : vector<1x256xi1> to vector<32x256xi1>
    %176 = vector.broadcast %cst_98 : f32 to vector<32x256xf32>
    %177 = arith.select %175, %173, %176 : vector<32x256xi1>, vector<32x256xf32>
    %c0_99 = arith.constant 0 : index
    %c127_100 = arith.constant 127 : index
    %178 = vector.load %arg21[%c0_99, %c127_100] : memref<32x512xf32, #tpu.memory_space<vmem>>, vector<32x256xf32>
    %cst_101 = arith.constant 0.000000e+00 : f32
    %179 = vector.shape_cast %18 : vector<1x256xi1> to vector<1x256xi1>
    %180 = vector.broadcast %179 : vector<1x256xi1> to vector<32x256xi1>
    %181 = vector.broadcast %cst_101 : f32 to vector<32x256xf32>
    %182 = arith.select %180, %178, %181 : vector<32x256xi1>, vector<32x256xf32>
    %c0_102 = arith.constant 0 : index
    %c128_103 = arith.constant 128 : index
    %183 = vector.load %arg21[%c0_102, %c128_103] : memref<32x512xf32, #tpu.memory_space<vmem>>, vector<32x256xf32>
    %c0_104 = arith.constant 0 : index
    %c129_105 = arith.constant 129 : index
    %184 = vector.load %arg21[%c0_104, %c129_105] : memref<32x512xf32, #tpu.memory_space<vmem>>, vector<32x256xf32>
    %cst_106 = arith.constant 0.000000e+00 : f32
    %185 = vector.shape_cast %20 : vector<1x256xi1> to vector<1x256xi1>
    %186 = vector.broadcast %185 : vector<1x256xi1> to vector<32x256xi1>
    %187 = vector.broadcast %cst_106 : f32 to vector<32x256xf32>
    %188 = arith.select %186, %184, %187 : vector<32x256xi1>, vector<32x256xf32>
    %c0_107 = arith.constant 0 : index
    %c143_108 = arith.constant 143 : index
    %189 = vector.load %arg21[%c0_107, %c143_108] : memref<32x512xf32, #tpu.memory_space<vmem>>, vector<32x256xf32>
    %cst_109 = arith.constant 0.000000e+00 : f32
    %190 = vector.shape_cast %18 : vector<1x256xi1> to vector<1x256xi1>
    %191 = vector.broadcast %190 : vector<1x256xi1> to vector<32x256xi1>
    %192 = vector.broadcast %cst_109 : f32 to vector<32x256xf32>
    %193 = arith.select %191, %189, %192 : vector<32x256xi1>, vector<32x256xf32>
    %c0_110 = arith.constant 0 : index
    %c144_111 = arith.constant 144 : index
    %194 = vector.load %arg21[%c0_110, %c144_111] : memref<32x512xf32, #tpu.memory_space<vmem>>, vector<32x256xf32>
    %c0_112 = arith.constant 0 : index
    %c145_113 = arith.constant 145 : index
    %195 = vector.load %arg21[%c0_112, %c145_113] : memref<32x512xf32, #tpu.memory_space<vmem>>, vector<32x256xf32>
    %cst_114 = arith.constant 0.000000e+00 : f32
    %196 = vector.shape_cast %20 : vector<1x256xi1> to vector<1x256xi1>
    %197 = vector.broadcast %196 : vector<1x256xi1> to vector<32x256xi1>
    %198 = vector.broadcast %cst_114 : f32 to vector<32x256xf32>
    %199 = arith.select %197, %195, %198 : vector<32x256xi1>, vector<32x256xf32>
    %200 = tpu.concatenate %171, %172, %177, %182, %183, %188, %193, %194, %199 in 0 : vector<32x256xf32>, vector<32x256xf32>, vector<32x256xf32>, vector<32x256xf32>, vector<32x256xf32>, vector<32x256xf32>, vector<32x256xf32>, vector<32x256xf32>, vector<32x256xf32> -> vector<288x256xf32>
    %c0_115 = arith.constant 0 : index
    %c0_116 = arith.constant 0 : index
    %201 = vector.load %arg16[%c0_115, %c0_116] : memref<32x288xf32, #tpu.memory_space<vmem>>, vector<32x288xf32>
    %cst_117 = arith.constant dense<0.000000e+00> : vector<32x256xf32>
    %202 = tpu.matmul %201, %200, %cst_117 {dimension_numbers = #tpu.dot_dimension_numbers<[1], [0], [0], [1], [0, 0, 1, 1], [], []>} : vector<32x288xf32>, vector<288x256xf32>, vector<32x256xf32> -> vector<32x256xf32>
    %c0_118 = arith.constant 0 : index
    %c0_119 = arith.constant 0 : index
    %203 = vector.load %arg17[%c0_118, %c0_119] : memref<32x1xf32, #tpu.memory_space<vmem>>, vector<32x1xf32>
    %204 = vector.broadcast %203 : vector<32x1xf32> to vector<32x256xf32>
    %205 = arith.addf %202, %204 : vector<32x256xf32>
    %206 = arith.addf %205, %117 : vector<32x256xf32>
    %207 = arith.negf %206 : vector<32x256xf32>
    %208 = math.exp %207 : vector<32x256xf32>
    %cst_120 = arith.constant 1.000000e+00 : f32
    %209 = vector.broadcast %cst_120 : f32 to vector<32x256xf32>
    %210 = arith.addf %209, %208 : vector<32x256xf32>
    %211 = arith.divf %209, %210 : vector<32x256xf32>
    %212 = arith.mulf %206, %211 : vector<32x256xf32>
    %c0_121 = arith.constant 0 : index
    %c128_122 = arith.constant 128 : index
    %213 = vector.load %arg21[%c0_121, %c128_122] : memref<32x512xf32, #tpu.memory_space<vmem>>, vector<32x256xf32>
    tpu.vector_store %arg21[%c0_121, %c128_122], %212 {strides = array<i32>} : memref<32x512xf32, #tpu.memory_space<vmem>>, vector<32x256xf32>,
    %c0_123 = arith.constant 0 : index
    %c111_124 = arith.constant 111 : index
    %214 = vector.load %arg21[%c0_123, %c111_124] : memref<32x512xf32, #tpu.memory_space<vmem>>, vector<32x256xf32>
    %cst_125 = arith.constant 0.000000e+00 : f32
    %215 = vector.shape_cast %18 : vector<1x256xi1> to vector<1x256xi1>
    %216 = vector.broadcast %215 : vector<1x256xi1> to vector<32x256xi1>
    %217 = vector.broadcast %cst_125 : f32 to vector<32x256xf32>
    %218 = arith.select %216, %214, %217 : vector<32x256xi1>, vector<32x256xf32>
    %c0_126 = arith.constant 0 : index
    %c112_127 = arith.constant 112 : index
    %219 = vector.load %arg21[%c0_126, %c112_127] : memref<32x512xf32, #tpu.memory_space<vmem>>, vector<32x256xf32>
    %c0_128 = arith.constant 0 : index
    %c113_129 = arith.constant 113 : index
    %220 = vector.load %arg21[%c0_128, %c113_129] : memref<32x512xf32, #tpu.memory_space<vmem>>, vector<32x256xf32>
    %cst_130 = arith.constant 0.000000e+00 : f32
    %221 = vector.shape_cast %20 : vector<1x256xi1> to vector<1x256xi1>
    %222 = vector.broadcast %221 : vector<1x256xi1> to vector<32x256xi1>
    %223 = vector.broadcast %cst_130 : f32 to vector<32x256xf32>
    %224 = arith.select %222, %220, %223 : vector<32x256xi1>, vector<32x256xf32>
    %c0_131 = arith.constant 0 : index
    %c127_132 = arith.constant 127 : index
    %225 = vector.load %arg21[%c0_131, %c127_132] : memref<32x512xf32, #tpu.memory_space<vmem>>, vector<32x256xf32>
    %cst_133 = arith.constant 0.000000e+00 : f32
    %226 = vector.shape_cast %18 : vector<1x256xi1> to vector<1x256xi1>
    %227 = vector.broadcast %226 : vector<1x256xi1> to vector<32x256xi1>
    %228 = vector.broadcast %cst_133 : f32 to vector<32x256xf32>
    %229 = arith.select %227, %225, %228 : vector<32x256xi1>, vector<32x256xf32>
    %c0_134 = arith.constant 0 : index
    %c128_135 = arith.constant 128 : index
    %230 = vector.load %arg21[%c0_134, %c128_135] : memref<32x512xf32, #tpu.memory_space<vmem>>, vector<32x256xf32>
    %c0_136 = arith.constant 0 : index
    %c129_137 = arith.constant 129 : index
    %231 = vector.load %arg21[%c0_136, %c129_137] : memref<32x512xf32, #tpu.memory_space<vmem>>, vector<32x256xf32>
    %cst_138 = arith.constant 0.000000e+00 : f32
    %232 = vector.shape_cast %20 : vector<1x256xi1> to vector<1x256xi1>
    %233 = vector.broadcast %232 : vector<1x256xi1> to vector<32x256xi1>
    %234 = vector.broadcast %cst_138 : f32 to vector<32x256xf32>
    %235 = arith.select %233, %231, %234 : vector<32x256xi1>, vector<32x256xf32>
    %c0_139 = arith.constant 0 : index
    %c143_140 = arith.constant 143 : index
    %236 = vector.load %arg21[%c0_139, %c143_140] : memref<32x512xf32, #tpu.memory_space<vmem>>, vector<32x256xf32>
    %cst_141 = arith.constant 0.000000e+00 : f32
    %237 = vector.shape_cast %18 : vector<1x256xi1> to vector<1x256xi1>
    %238 = vector.broadcast %237 : vector<1x256xi1> to vector<32x256xi1>
    %239 = vector.broadcast %cst_141 : f32 to vector<32x256xf32>
    %240 = arith.select %238, %236, %239 : vector<32x256xi1>, vector<32x256xf32>
    %c0_142 = arith.constant 0 : index
    %c144_143 = arith.constant 144 : index
    %241 = vector.load %arg21[%c0_142, %c144_143] : memref<32x512xf32, #tpu.memory_space<vmem>>, vector<32x256xf32>
    %c0_144 = arith.constant 0 : index
    %c145_145 = arith.constant 145 : index
    %242 = vector.load %arg21[%c0_144, %c145_145] : memref<32x512xf32, #tpu.memory_space<vmem>>, vector<32x256xf32>
    %cst_146 = arith.constant 0.000000e+00 : f32
    %243 = vector.shape_cast %20 : vector<1x256xi1> to vector<1x256xi1>
    %244 = vector.broadcast %243 : vector<1x256xi1> to vector<32x256xi1>
    %245 = vector.broadcast %cst_146 : f32 to vector<32x256xf32>
    %246 = arith.select %244, %242, %245 : vector<32x256xi1>, vector<32x256xf32>
    %247 = tpu.concatenate %218, %219, %224, %229, %230, %235, %240, %241, %246 in 0 : vector<32x256xf32>, vector<32x256xf32>, vector<32x256xf32>, vector<32x256xf32>, vector<32x256xf32>, vector<32x256xf32>, vector<32x256xf32>, vector<32x256xf32>, vector<32x256xf32> -> vector<288x256xf32>
    %c0_147 = arith.constant 0 : index
    %c0_148 = arith.constant 0 : index
    %248 = vector.load %arg18[%c0_147, %c0_148] : memref<4x288xf32, #tpu.memory_space<vmem>>, vector<4x288xf32>
    %cst_149 = arith.constant dense<0.000000e+00> : vector<4x256xf32>
    %249 = tpu.matmul %248, %247, %cst_149 {dimension_numbers = #tpu.dot_dimension_numbers<[1], [0], [0], [1], [0, 0, 1, 1], [], []>} : vector<4x288xf32>, vector<288x256xf32>, vector<4x256xf32> -> vector<4x256xf32>
    %c0_150 = arith.constant 0 : index
    %c0_151 = arith.constant 0 : index
    %250 = vector.load %arg19[%c0_150, %c0_151] : memref<4x1xf32, #tpu.memory_space<vmem>>, vector<4x1xf32>
    %251 = vector.broadcast %250 : vector<4x1xf32> to vector<4x256xf32>
    %252 = arith.addf %249, %251 : vector<4x256xf32>
    %c0_152 = arith.constant 0 : index
    %c0_153 = arith.constant 0 : index
    %c0_154 = arith.constant 0 : index
    %253 = vector.load %arg20[%c0_152, %c0_153, %c0_154] : memref<1x4x256xf32, #tpu.memory_space<vmem>>, vector<1x4x256xf32>
    %254 = vector.shape_cast %253 : vector<1x4x256xf32> to vector<4x256xf32>
    %255 = vector.shape_cast %252 : vector<4x256xf32> to vector<1x4x256xf32>
    tpu.vector_store %arg20[%c0_152, %c0_153, %c0_154], %255 {strides = array<i32>} : memref<1x4x256xf32, #tpu.memory_space<vmem>>, vector<1x4x256xf32>,
    return
  }
  func.func @transform_0(%arg0: i32, %arg1: memref<2xi32, #tpu.memory_space<smem>>, %arg2: memref<1000xf32, #tpu.memory_space<smem>>) -> (i32, i32, i32) {
    %c0_i32 = arith.constant 0 : i32
    %c0_i32_0 = arith.constant 0 : i32
    %c0_i32_1 = arith.constant 0 : i32
    return %arg0, %c0_i32, %c0_i32_0 : i32, i32, i32
  }
  func.func @transform_1(%arg0: i32, %arg1: memref<2xi32, #tpu.memory_space<smem>>, %arg2: memref<1000xf32, #tpu.memory_space<smem>>) -> (i32, i32, i32) {
    %c0_i32 = arith.constant 0 : i32
    %c0_i32_0 = arith.constant 0 : i32
    %c0_i32_1 = arith.constant 0 : i32
    return %arg0, %c0_i32, %c0_i32_0 : i32, i32, i32
  }
  func.func @transform_2(%arg0: i32, %arg1: memref<2xi32, #tpu.memory_space<smem>>, %arg2: memref<1000xf32, #tpu.memory_space<smem>>) -> (i32, i32, i32) {
    %c0_i32 = arith.constant 0 : i32
    %c0_i32_0 = arith.constant 0 : i32
    %c0_i32_1 = arith.constant 0 : i32
    return %arg0, %c0_i32, %c0_i32_0 : i32, i32, i32
  }
  func.func @transform_3(%arg0: i32, %arg1: memref<2xi32, #tpu.memory_space<smem>>, %arg2: memref<1000xf32, #tpu.memory_space<smem>>) -> (i32, i32) {
    %c0_i32 = arith.constant 0 : i32
    %c0_i32_0 = arith.constant 0 : i32
    %c0_i32_1 = arith.constant 0 : i32
    return %c0_i32, %c0_i32_0 : i32, i32
  }
  func.func @transform_4(%arg0: i32, %arg1: memref<2xi32, #tpu.memory_space<smem>>, %arg2: memref<1000xf32, #tpu.memory_space<smem>>) -> (i32, i32) {
    %c0_i32 = arith.constant 0 : i32
    %c0_i32_0 = arith.constant 0 : i32
    %c0_i32_1 = arith.constant 0 : i32
    return %c0_i32, %c0_i32_0 : i32, i32
  }
  func.func @transform_5(%arg0: i32, %arg1: memref<2xi32, #tpu.memory_space<smem>>, %arg2: memref<1000xf32, #tpu.memory_space<smem>>) -> (i32, i32) {
    %c0_i32 = arith.constant 0 : i32
    %c0_i32_0 = arith.constant 0 : i32
    %c0_i32_1 = arith.constant 0 : i32
    return %c0_i32, %c0_i32_0 : i32, i32
  }
  func.func @transform_6(%arg0: i32, %arg1: memref<2xi32, #tpu.memory_space<smem>>, %arg2: memref<1000xf32, #tpu.memory_space<smem>>) -> (i32, i32) {
    %c0_i32 = arith.constant 0 : i32
    %c0_i32_0 = arith.constant 0 : i32
    %c0_i32_1 = arith.constant 0 : i32
    return %c0_i32, %c0_i32_0 : i32, i32
  }
  func.func @transform_7(%arg0: i32, %arg1: memref<2xi32, #tpu.memory_space<smem>>, %arg2: memref<1000xf32, #tpu.memory_space<smem>>) -> (i32, i32) {
    %c0_i32 = arith.constant 0 : i32
    %c0_i32_0 = arith.constant 0 : i32
    %c0_i32_1 = arith.constant 0 : i32
    return %c0_i32, %c0_i32_0 : i32, i32
  }
  func.func @transform_8(%arg0: i32, %arg1: memref<2xi32, #tpu.memory_space<smem>>, %arg2: memref<1000xf32, #tpu.memory_space<smem>>) -> (i32, i32) {
    %c0_i32 = arith.constant 0 : i32
    %c0_i32_0 = arith.constant 0 : i32
    %c0_i32_1 = arith.constant 0 : i32
    return %c0_i32, %c0_i32_0 : i32, i32
  }
  func.func @transform_9(%arg0: i32, %arg1: memref<2xi32, #tpu.memory_space<smem>>, %arg2: memref<1000xf32, #tpu.memory_space<smem>>) -> (i32, i32) {
    %c0_i32 = arith.constant 0 : i32
    %c0_i32_0 = arith.constant 0 : i32
    %c0_i32_1 = arith.constant 0 : i32
    return %c0_i32, %c0_i32_0 : i32, i32
  }
  func.func @transform_10(%arg0: i32, %arg1: memref<2xi32, #tpu.memory_space<smem>>, %arg2: memref<1000xf32, #tpu.memory_space<smem>>) -> (i32, i32) {
    %c0_i32 = arith.constant 0 : i32
    %c0_i32_0 = arith.constant 0 : i32
    %c0_i32_1 = arith.constant 0 : i32
    return %c0_i32, %c0_i32_0 : i32, i32
  }
  func.func @transform_11(%arg0: i32, %arg1: memref<2xi32, #tpu.memory_space<smem>>, %arg2: memref<1000xf32, #tpu.memory_space<smem>>) -> (i32, i32) {
    %c0_i32 = arith.constant 0 : i32
    %c0_i32_0 = arith.constant 0 : i32
    %c0_i32_1 = arith.constant 0 : i32
    return %c0_i32, %c0_i32_0 : i32, i32
  }
  func.func @transform_12(%arg0: i32, %arg1: memref<2xi32, #tpu.memory_space<smem>>, %arg2: memref<1000xf32, #tpu.memory_space<smem>>) -> (i32, i32) {
    %c0_i32 = arith.constant 0 : i32
    %c0_i32_0 = arith.constant 0 : i32
    %c0_i32_1 = arith.constant 0 : i32
    return %c0_i32, %c0_i32_0 : i32, i32
  }
  func.func @transform_13(%arg0: i32, %arg1: memref<2xi32, #tpu.memory_space<smem>>, %arg2: memref<1000xf32, #tpu.memory_space<smem>>) -> (i32, i32) {
    %c0_i32 = arith.constant 0 : i32
    %c0_i32_0 = arith.constant 0 : i32
    %c0_i32_1 = arith.constant 0 : i32
    return %c0_i32, %c0_i32_0 : i32, i32
  }
  func.func @transform_14(%arg0: i32, %arg1: memref<2xi32, #tpu.memory_space<smem>>, %arg2: memref<1000xf32, #tpu.memory_space<smem>>) -> (i32, i32) {
    %c0_i32 = arith.constant 0 : i32
    %c0_i32_0 = arith.constant 0 : i32
    %c0_i32_1 = arith.constant 0 : i32
    return %c0_i32, %c0_i32_0 : i32, i32
  }
  func.func @transform_15(%arg0: i32, %arg1: memref<2xi32, #tpu.memory_space<smem>>, %arg2: memref<1000xf32, #tpu.memory_space<smem>>) -> (i32, i32) {
    %c0_i32 = arith.constant 0 : i32
    %c0_i32_0 = arith.constant 0 : i32
    %c0_i32_1 = arith.constant 0 : i32
    return %c0_i32, %c0_i32_0 : i32, i32
  }
  func.func @transform_16(%arg0: i32, %arg1: memref<2xi32, #tpu.memory_space<smem>>, %arg2: memref<1000xf32, #tpu.memory_space<smem>>) -> (i32, i32) {
    %c0_i32 = arith.constant 0 : i32
    %c0_i32_0 = arith.constant 0 : i32
    %c0_i32_1 = arith.constant 0 : i32
    return %c0_i32, %c0_i32_0 : i32, i32
  }
  func.func @transform_17(%arg0: i32, %arg1: memref<2xi32, #tpu.memory_space<smem>>, %arg2: memref<1000xf32, #tpu.memory_space<smem>>) -> (i32, i32, i32) {
    %c0_i32 = arith.constant 0 : i32
    %c0_i32_0 = arith.constant 0 : i32
    %c0_i32_1 = arith.constant 0 : i32
    return %arg0, %c0_i32, %c0_i32_0 : i32, i32, i32
  }
}

</mosaic_0001>

<llo_original>
// kernel: ddpm_forward.1
$region0: #{ddpm_forward.1}
  #allocation0 [shape = 'u32[]', space=smem, size = 0x4, offset = 0x4, fixed_abs, tag = 'smem constant byte address 0x4 - core index']
  #allocation1 [shape = 'u32[72,128]{1,0:T(1,128)}', space=vmem, size = 0x9000, scoped, tag = 'internal scratch']
  #allocation2 [shape = 'f32[32,512]{1,0:T(8,128)}', space=vmem, size = 0x10000, scoped, tag = 'scratch operand']
  #allocation3 [shape = 's32[1]{0}', space=sflag, size = 0x4, scoped, tag = 'scoped memory for ddpm_forward.1']
  #allocation4 [shape = 'u8[512]{0}', space=smem, size = 0x200, scoped, tag = 'prefetched SMEM operand 0']
  #allocation5 [shape = 'u8[4096]{0}', space=smem, size = 0x1000, scoped, tag = 'prefetched SMEM operand 1']
  %s0 = inlined_call_operand.vmem [shape: s32[2], index: 0, kind: input, shape index: {}]
  %s1 = inlined_call_operand.vmem [shape: f32[1000], index: 1, kind: input, shape index: {}]
  %s2 = inlined_call_operand.vmem [shape: f32[2,4,256], index: 2, kind: input, shape index: {}]
  %s3 = inlined_call_operand.vmem [shape: f32[2,4,256], index: 3, kind: input, shape index: {}]
  %s4 = inlined_call_operand.vmem [shape: f32[2,1,32], index: 4, kind: input, shape index: {}]
  %s5 = inlined_call_operand.vmem [shape: f32[32,32], index: 5, kind: input, shape index: {}]
  %s6 = inlined_call_operand.vmem [shape: f32[32,1], index: 6, kind: input, shape index: {}]
  %s7 = inlined_call_operand.vmem [shape: f32[32,32], index: 7, kind: input, shape index: {}]
  %s8 = inlined_call_operand.vmem [shape: f32[1,32], index: 8, kind: input, shape index: {}]
  %s9 = inlined_call_operand.vmem [shape: f32[32,32], index: 9, kind: input, shape index: {}]
  %s10 = inlined_call_operand.vmem [shape: f32[32,1], index: 10, kind: input, shape index: {}]
  %s11 = inlined_call_operand.vmem [shape: f32[32,72], index: 11, kind: input, shape index: {}]
  %s12 = inlined_call_operand.vmem [shape: f32[32,1], index: 12, kind: input, shape index: {}]
  %s13 = inlined_call_operand.vmem [shape: f32[32,288], index: 13, kind: input, shape index: {}]
  %s14 = inlined_call_operand.vmem [shape: f32[32,1], index: 14, kind: input, shape index: {}]
  %s15 = inlined_call_operand.vmem [shape: f32[32,288], index: 15, kind: input, shape index: {}]
  %s16 = inlined_call_operand.vmem [shape: f32[32,1], index: 16, kind: input, shape index: {}]
  %s17 = inlined_call_operand.vmem [shape: f32[4,288], index: 17, kind: input, shape index: {}]
  %s18 = inlined_call_operand.vmem [shape: f32[4,1], index: 18, kind: input, shape index: {}]
  %s19 = inlined_call_operand.vmem [shape: f32[2,4,256], index: 19, kind: output, shape index: {}]
  %s20 = sld [smem:[#allocation0]]
  $region101: #{ddpm_forward.1} parent=0
    _
  %s22 = ssub.s32 1, %s20
  %s23 = scalar_select 0, %s22, %s20
  %s25 = sshll.u32 %s0, 4
  %s26 = int_to_ptr.vmem [resolvable:$true] %s25
  %28 = dma.vmem_to_smem %s26, 16, [#allocation4], [#allocation3]
  %s30 = sshll.u32 %s1, 4
  %s31 = int_to_ptr.vmem [resolvable:$true] %s30
  %33 = dma.vmem_to_smem %s31, 128, [#allocation5], [#allocation3]
  %35 = dma.done [#allocation3], 144
  %36 = sfence
  loop: start=0, step=1, limit=4
  $region2: #{ddpm_forward.1} parent=0 // loop_pre_header
    _
  $region3: #{ddpm_forward.1} parent=0 // loop_header
    %s38 = sphi 0, %s42
    %p39 = scmp.ge.s32.totalorder %s38, 4
    %s48 = sphi 0, %s50
    %s51 = sphi 0, %s48
    %s52 = sphi 0, %s51
    %s68 = sphi 0, %s52
    %s74 = sphi 0, %s76
    %s77 = sphi 0, %s74
    %s78 = sphi 0, %s77
    %s94 = sphi 0, %s78
    %s100 = sphi 0, %s102
    %s103 = sphi 0, %s100
    %s104 = sphi 0, %s103
    %s120 = sphi 0, %s104
    %s124 = sphi 0, %s124
    %s126 = sphi 0, %s124
    %s127 = sphi 0, %s126
    %s141 = sphi 0, %s127
    %s145 = sphi 0, %s145
    %s147 = sphi 0, %s145
    %s148 = sphi 0, %s147
    %s162 = sphi 0, %s148
    %s166 = sphi 0, %s166
    %s168 = sphi 0, %s166
    %s169 = sphi 0, %s168
    %s183 = sphi 0, %s169
    %s187 = sphi 0, %s187
    %s189 = sphi 0, %s187
    %s190 = sphi 0, %s189
    %s204 = sphi 0, %s190
    %s208 = sphi 0, %s208
    %s210 = sphi 0, %s208
    %s211 = sphi 0, %s210
    %s225 = sphi 0, %s211
    %s229 = sphi 0, %s229
    %s231 = sphi 0, %s229
    %s232 = sphi 0, %s231
    %s246 = sphi 0, %s232
    %s250 = sphi 0, %s250
    %s252 = sphi 0, %s250
    %s253 = sphi 0, %s252
    %s267 = sphi 0, %s253
    %s271 = sphi 0, %s271
    %s273 = sphi 0, %s271
    %s274 = sphi 0, %s273
    %s288 = sphi 0, %s274
    %s292 = sphi 0, %s292
    %s294 = sphi 0, %s292
    %s295 = sphi 0, %s294
    %s309 = sphi 0, %s295
    %s313 = sphi 0, %s313
    %s315 = sphi 0, %s313
    %s316 = sphi 0, %s315
    %s330 = sphi 0, %s316
    %s334 = sphi 0, %s334
    %s336 = sphi 0, %s334
    %s337 = sphi 0, %s336
    %s351 = sphi 0, %s337
    %s355 = sphi 0, %s355
    %s357 = sphi 0, %s355
    %s358 = sphi 0, %s357
    %s372 = sphi 0, %s358
    %s376 = sphi 0, %s376
    %s378 = sphi 0, %s376
    %s379 = sphi 0, %s378
    %s393 = sphi 0, %s379
    %s397 = sphi 0, %s397
    %s399 = sphi 0, %s397
    %s400 = sphi 0, %s399
    %s414 = sphi 0, %s400
    %s420 = sphi 0, %s422
    %s423 = sphi 0, %s420
    %s424 = sphi 0, %s423
    %s440 = sphi 0, %s424
  $region4: #{ddpm_forward.1} parent=0 // loop_header_branch
    %41 = sbr.rel (%p39) target = $region8
  $region5: #{ddpm_forward.1} parent=0 // loop_body
    %s43 = ssub.s32 %s38, 1
    %s44 = ssub.s32 %s38, 2
    %s45 = sadd.s32 %s38, 1
    %s46 = ssub.s32 %s38, %s45
    %p47 = scmp.eq.s32.totalorder %s46, 0
    %s49 = sadd.s32 %s48, 1
    %s50 = scalar_select %p47, %s48, %s49
    %p53 = pneg %p47
    %p54 = scmp.eq.s32.totalorder %s38, 1
    %p55 = por %p53, %p54
    %p56 = scmp.ne.s32.totalorder %s48, %s51
    %p57 = scmp.eq.s32.totalorder %s38, 0
    %p58 = por %p56, %p57
    %p59 = scmp.ne.s32.totalorder %s48, %s51
    %p60 = scmp.eq.s32.totalorder %s43, 1
    %p61 = por %p59, %p60
    %p62 = scmp.ne.s32.totalorder %s51, %s52
    %p63 = scmp.eq.s32.totalorder %s43, 0
    %p64 = por %p62, %p63
    %p65 = scmp.ne.s32.totalorder %s51, %s52
    %p66 = scmp.eq.s32.totalorder %s44, 1
    %p67 = por %p65, %p66
    %p69 = scmp.ne.s32.totalorder %s52, %s68
    %p70 = scmp.eq.s32.totalorder %s44, 0
    %p71 = por %p69, %p70
    %s72 = ssub.s32 %s38, %s45
    %p73 = scmp.eq.s32.totalorder %s72, 0
    %s75 = sadd.s32 %s74, 1
    %s76 = scalar_select %p73, %s74, %s75
    %p79 = pneg %p73
    %p80 = scmp.eq.s32.totalorder %s38, 1
    %p81 = por %p79, %p80
    %p82 = scmp.ne.s32.totalorder %s74, %s77
    %p83 = scmp.eq.s32.totalorder %s38, 0
    %p84 = por %p82, %p83
    %p85 = scmp.ne.s32.totalorder %s74, %s77
    %p86 = scmp.eq.s32.totalorder %s43, 1
    %p87 = por %p85, %p86
    %p88 = scmp.ne.s32.totalorder %s77, %s78
    %p89 = scmp.eq.s32.totalorder %s43, 0
    %p90 = por %p88, %p89
    %p91 = scmp.ne.s32.totalorder %s77, %s78
    %p92 = scmp.eq.s32.totalorder %s44, 1
    %p93 = por %p91, %p92
    %p95 = scmp.ne.s32.totalorder %s78, %s94
    %p96 = scmp.eq.s32.totalorder %s44, 0
    %p97 = por %p95, %p96
    %s98 = ssub.s32 %s38, %s45
    %p99 = scmp.eq.s32.totalorder %s98, 0
    %s101 = sadd.s32 %s100, 1
    %s102 = scalar_select %p99, %s100, %s101
    %p105 = pneg %p99
    %p106 = scmp.eq.s32.totalorder %s38, 1
    %p107 = por %p105, %p106
    %p108 = scmp.ne.s32.totalorder %s100, %s103
    %p109 = scmp.eq.s32.totalorder %s38, 0
    %p110 = por %p108, %p109
    %p111 = scmp.ne.s32.totalorder %s100, %s103
    %p112 = scmp.eq.s32.totalorder %s43, 1
    %p113 = por %p111, %p112
    %p114 = scmp.ne.s32.totalorder %s103, %s104
    %p115 = scmp.eq.s32.totalorder %s43, 0
    %p116 = por %p114, %p115
    %p117 = scmp.ne.s32.totalorder %s103, %s104
    %p118 = scmp.eq.s32.totalorder %s44, 1
    %p119 = por %p117, %p118
    %p121 = scmp.ne.s32.totalorder %s104, %s120
    %p122 = scmp.eq.s32.totalorder %s44, 0
    %p123 = por %p121, %p122
    %s125 = sadd.s32 %s124, 1
    %p128 = scmp.eq.s32.totalorder %s38, 1
    %p129 = scmp.ne.s32.totalorder %s124, %s126
    %p130 = scmp.eq.s32.totalorder %s38, 0
    %p131 = por %p129, %p130
    %p132 = scmp.ne.s32.totalorder %s124, %s126
    %p133 = scmp.eq.s32.totalorder %s43, 1
    %p134 = por %p132, %p133
    %p135 = scmp.ne.s32.totalorder %s126, %s127
    %p136 = scmp.eq.s32.totalorder %s43, 0
    %p137 = por %p135, %p136
    %p138 = scmp.ne.s32.totalorder %s126, %s127
    %p139 = scmp.eq.s32.totalorder %s44, 1
    %p140 = por %p138, %p139
    %p142 = scmp.ne.s32.totalorder %s127, %s141
    %p143 = scmp.eq.s32.totalorder %s44, 0
    %p144 = por %p142, %p143
    %s146 = sadd.s32 %s145, 1
    %p149 = scmp.eq.s32.totalorder %s38, 1
    %p150 = scmp.ne.s32.totalorder %s145, %s147
    %p151 = scmp.eq.s32.totalorder %s38, 0
    %p152 = por %p150, %p151
    %p153 = scmp.ne.s32.totalorder %s145, %s147
    %p154 = scmp.eq.s32.totalorder %s43, 1
    %p155 = por %p153, %p154
    %p156 = scmp.ne.s32.totalorder %s147, %s148
    %p157 = scmp.eq.s32.totalorder %s43, 0
    %p158 = por %p156, %p157
    %p159 = scmp.ne.s32.totalorder %s147, %s148
    %p160 = scmp.eq.s32.totalorder %s44, 1
    %p161 = por %p159, %p160
    %p163 = scmp.ne.s32.totalorder %s148, %s162
    %p164 = scmp.eq.s32.totalorder %s44, 0
    %p165 = por %p163, %p164
    %s167 = sadd.s32 %s166, 1
    %p170 = scmp.eq.s32.totalorder %s38, 1
    %p171 = scmp.ne.s32.totalorder %s166, %s168
    %p172 = scmp.eq.s32.totalorder %s38, 0
    %p173 = por %p171, %p172
    %p174 = scmp.ne.s32.totalorder %s166, %s168
    %p175 = scmp.eq.s32.totalorder %s43, 1
    %p176 = por %p174, %p175
    %p177 = scmp.ne.s32.totalorder %s168, %s169
    %p178 = scmp.eq.s32.totalorder %s43, 0
    %p179 = por %p177, %p178
    %p180 = scmp.ne.s32.totalorder %s168, %s169
    %p181 = scmp.eq.s32.totalorder %s44, 1
    %p182 = por %p180, %p181
    %p184 = scmp.ne.s32.totalorder %s169, %s183
    %p185 = scmp.eq.s32.totalorder %s44, 0
    %p186 = por %p184, %p185
    %s188 = sadd.s32 %s187, 1
    %p191 = scmp.eq.s32.totalorder %s38, 1
    %p192 = scmp.ne.s32.totalorder %s187, %s189
    %p193 = scmp.eq.s32.totalorder %s38, 0
    %p194 = por %p192, %p193
    %p195 = scmp.ne.s32.totalorder %s187, %s189
    %p196 = scmp.eq.s32.totalorder %s43, 1
    %p197 = por %p195, %p196
    %p198 = scmp.ne.s32.totalorder %s189, %s190
    %p199 = scmp.eq.s32.totalorder %s43, 0
    %p200 = por %p198, %p199
    %p201 = scmp.ne.s32.totalorder %s189, %s190
    %p202 = scmp.eq.s32.totalorder %s44, 1
    %p203 = por %p201, %p202
    %p205 = scmp.ne.s32.totalorder %s190, %s204
    %p206 = scmp.eq.s32.totalorder %s44, 0
    %p207 = por %p205, %p206
    %s209 = sadd.s32 %s208, 1
    %p212 = scmp.eq.s32.totalorder %s38, 1
    %p213 = scmp.ne.s32.totalorder %s208, %s210
    %p214 = scmp.eq.s32.totalorder %s38, 0
    %p215 = por %p213, %p214
    %p216 = scmp.ne.s32.totalorder %s208, %s210
    %p217 = scmp.eq.s32.totalorder %s43, 1
    %p218 = por %p216, %p217
    %p219 = scmp.ne.s32.totalorder %s210, %s211
    %p220 = scmp.eq.s32.totalorder %s43, 0
    %p221 = por %p219, %p220
    %p222 = scmp.ne.s32.totalorder %s210, %s211
    %p223 = scmp.eq.s32.totalorder %s44, 1
    %p224 = por %p222, %p223
    %p226 = scmp.ne.s32.totalorder %s211, %s225
    %p227 = scmp.eq.s32.totalorder %s44, 0
    %p228 = por %p226, %p227
    %s230 = sadd.s32 %s229, 1
    %p233 = scmp.eq.s32.totalorder %s38, 1
    %p234 = scmp.ne.s32.totalorder %s229, %s231
    %p235 = scmp.eq.s32.totalorder %s38, 0
    %p236 = por %p234, %p235
    %p237 = scmp.ne.s32.totalorder %s229, %s231
    %p238 = scmp.eq.s32.totalorder %s43, 1
    %p239 = por %p237, %p238
    %p240 = scmp.ne.s32.totalorder %s231, %s232
    %p241 = scmp.eq.s32.totalorder %s43, 0
    %p242 = por %p240, %p241
    %p243 = scmp.ne.s32.totalorder %s231, %s232
    %p244 = scmp.eq.s32.totalorder %s44, 1
    %p245 = por %p243, %p244
    %p247 = scmp.ne.s32.totalorder %s232, %s246
    %p248 = scmp.eq.s32.totalorder %s44, 0
    %p249 = por %p247, %p248
    %s251 = sadd.s32 %s250, 1
    %p254 = scmp.eq.s32.totalorder %s38, 1
    %p255 = scmp.ne.s32.totalorder %s250, %s252
    %p256 = scmp.eq.s32.totalorder %s38, 0
    %p257 = por %p255, %p256
    %p258 = scmp.ne.s32.totalorder %s250, %s252
    %p259 = scmp.eq.s32.totalorder %s43, 1
    %p260 = por %p258, %p259
    %p261 = scmp.ne.s32.totalorder %s252, %s253
    %p262 = scmp.eq.s32.totalorder %s43, 0
    %p263 = por %p261, %p262
    %p264 = scmp.ne.s32.totalorder %s252, %s253
    %p265 = scmp.eq.s32.totalorder %s44, 1
    %p266 = por %p264, %p265
    %p268 = scmp.ne.s32.totalorder %s253, %s267
    %p269 = scmp.eq.s32.totalorder %s44, 0
    %p270 = por %p268, %p269
    %s272 = sadd.s32 %s271, 1
    %p275 = scmp.eq.s32.totalorder %s38, 1
    %p276 = scmp.ne.s32.totalorder %s271, %s273
    %p277 = scmp.eq.s32.totalorder %s38, 0
    %p278 = por %p276, %p277
    %p279 = scmp.ne.s32.totalorder %s271, %s273
    %p280 = scmp.eq.s32.totalorder %s43, 1
    %p281 = por %p279, %p280
    %p282 = scmp.ne.s32.totalorder %s273, %s274
    %p283 = scmp.eq.s32.totalorder %s43, 0
    %p284 = por %p282, %p283
    %p285 = scmp.ne.s32.totalorder %s273, %s274
    %p286 = scmp.eq.s32.totalorder %s44, 1
    %p287 = por %p285, %p286
    %p289 = scmp.ne.s32.totalorder %s274, %s288
    %p290 = scmp.eq.s32.totalorder %s44, 0
    %p291 = por %p289, %p290
    %s293 = sadd.s32 %s292, 1
    %p296 = scmp.eq.s32.totalorder %s38, 1
    %p297 = scmp.ne.s32.totalorder %s292, %s294
    %p298 = scmp.eq.s32.totalorder %s38, 0
    %p299 = por %p297, %p298
    %p300 = scmp.ne.s32.totalorder %s292, %s294
    %p301 = scmp.eq.s32.totalorder %s43, 1
    %p302 = por %p300, %p301
    %p303 = scmp.ne.s32.totalorder %s294, %s295
    %p304 = scmp.eq.s32.totalorder %s43, 0
    %p305 = por %p303, %p304
    %p306 = scmp.ne.s32.totalorder %s294, %s295
    %p307 = scmp.eq.s32.totalorder %s44, 1
    %p308 = por %p306, %p307
    %p310 = scmp.ne.s32.totalorder %s295, %s309
    %p311 = scmp.eq.s32.totalorder %s44, 0
    %p312 = por %p310, %p311
    %s314 = sadd.s32 %s313, 1
    %p317 = scmp.eq.s32.totalorder %s38, 1
    %p318 = scmp.ne.s32.totalorder %s313, %s315
    %p319 = scmp.eq.s32.totalorder %s38, 0
    %p320 = por %p318, %p319
    %p321 = scmp.ne.s32.totalorder %s313, %s315
    %p322 = scmp.eq.s32.totalorder %s43, 1
    %p323 = por %p321, %p322
    %p324 = scmp.ne.s32.totalorder %s315, %s316
    %p325 = scmp.eq.s32.totalorder %s43, 0
    %p326 = por %p324, %p325
    %p327 = scmp.ne.s32.totalorder %s315, %s316
    %p328 = scmp.eq.s32.totalorder %s44, 1
    %p329 = por %p327, %p328
    %p331 = scmp.ne.s32.totalorder %s316, %s330
    %p332 = scmp.eq.s32.totalorder %s44, 0
    %p333 = por %p331, %p332
    %s335 = sadd.s32 %s334, 1
    %p338 = scmp.eq.s32.totalorder %s38, 1
    %p339 = scmp.ne.s32.totalorder %s334, %s336
    %p340 = scmp.eq.s32.totalorder %s38, 0
    %p341 = por %p339, %p340
    %p342 = scmp.ne.s32.totalorder %s334, %s336
    %p343 = scmp.eq.s32.totalorder %s43, 1
    %p344 = por %p342, %p343
    %p345 = scmp.ne.s32.totalorder %s336, %s337
    %p346 = scmp.eq.s32.totalorder %s43, 0
    %p347 = por %p345, %p346
    %p348 = scmp.ne.s32.totalorder %s336, %s337
    %p349 = scmp.eq.s32.totalorder %s44, 1
    %p350 = por %p348, %p349
    %p352 = scmp.ne.s32.totalorder %s337, %s351
    %p353 = scmp.eq.s32.totalorder %s44, 0
    %p354 = por %p352, %p353
    %s356 = sadd.s32 %s355, 1
    %p359 = scmp.eq.s32.totalorder %s38, 1
    %p360 = scmp.ne.s32.totalorder %s355, %s357
    %p361 = scmp.eq.s32.totalorder %s38, 0
    %p362 = por %p360, %p361
    %p363 = scmp.ne.s32.totalorder %s355, %s357
    %p364 = scmp.eq.s32.totalorder %s43, 1
    %p365 = por %p363, %p364
    %p366 = scmp.ne.s32.totalorder %s357, %s358
    %p367 = scmp.eq.s32.totalorder %s43, 0
    %p368 = por %p366, %p367
    %p369 = scmp.ne.s32.totalorder %s357, %s358
    %p370 = scmp.eq.s32.totalorder %s44, 1
    %p371 = por %p369, %p370
    %p373 = scmp.ne.s32.totalorder %s358, %s372
    %p374 = scmp.eq.s32.totalorder %s44, 0
    %p375 = por %p373, %p374
    %s377 = sadd.s32 %s376, 1
    %p380 = scmp.eq.s32.totalorder %s38, 1
    %p381 = scmp.ne.s32.totalorder %s376, %s378
    %p382 = scmp.eq.s32.totalorder %s38, 0
    %p383 = por %p381, %p382
    %p384 = scmp.ne.s32.totalorder %s376, %s378
    %p385 = scmp.eq.s32.totalorder %s43, 1
    %p386 = por %p384, %p385
    %p387 = scmp.ne.s32.totalorder %s378, %s379
    %p388 = scmp.eq.s32.totalorder %s43, 0
    %p389 = por %p387, %p388
    %p390 = scmp.ne.s32.totalorder %s378, %s379
    %p391 = scmp.eq.s32.totalorder %s44, 1
    %p392 = por %p390, %p391
    %p394 = scmp.ne.s32.totalorder %s379, %s393
    %p395 = scmp.eq.s32.totalorder %s44, 0
    %p396 = por %p394, %p395
    %s398 = sadd.s32 %s397, 1
    %p401 = scmp.eq.s32.totalorder %s38, 1
    %p402 = scmp.ne.s32.totalorder %s397, %s399
    %p403 = scmp.eq.s32.totalorder %s38, 0
    %p404 = por %p402, %p403
    %p405 = scmp.ne.s32.totalorder %s397, %s399
    %p406 = scmp.eq.s32.totalorder %s43, 1
    %p407 = por %p405, %p406
    %p408 = scmp.ne.s32.totalorder %s399, %s400
    %p409 = scmp.eq.s32.totalorder %s43, 0
    %p410 = por %p408, %p409
    %p411 = scmp.ne.s32.totalorder %s399, %s400
    %p412 = scmp.eq.s32.totalorder %s44, 1
    %p413 = por %p411, %p412
    %p415 = scmp.ne.s32.totalorder %s400, %s414
    %p416 = scmp.eq.s32.totalorder %s44, 0
    %p417 = por %p415, %p416
    %s418 = ssub.s32 %s38, %s45
    %p419 = scmp.eq.s32.totalorder %s418, 0
    %s421 = sadd.s32 %s420, 1
    %s422 = scalar_select %p419, %s420, %s421
    %p425 = pneg %p419
    %p426 = scmp.eq.s32.totalorder %s38, 1
    %p427 = por %p425, %p426
    %p428 = scmp.ne.s32.totalorder %s420, %s423
    %p429 = scmp.eq.s32.totalorder %s38, 0
    %p430 = por %p428, %p429
    %p431 = scmp.ne.s32.totalorder %s420, %s423
    %p432 = scmp.eq.s32.totalorder %s43, 1
    %p433 = por %p431, %p432
    %p434 = scmp.ne.s32.totalorder %s423, %s424
    %p435 = scmp.eq.s32.totalorder %s43, 0
    %p436 = por %p434, %p435
    %p437 = scmp.ne.s32.totalorder %s423, %s424
    %p438 = scmp.eq.s32.totalorder %s44, 1
    %p439 = por %p437, %p438
    %p441 = scmp.ne.s32.totalorder %s424, %s440
    %p442 = scmp.eq.s32.totalorder %s44, 0
    %p443 = por %p441, %p442
    %p444 = scmp.le.s32.totalorder 1, %s38
    %p445 = scmp.lt.s32.totalorder %s38, 3
    %p446 = pnand %p444, %p445
    %p447 = pneg %p446
    // Predicated region
    $region9: #{ddpm_forward.1} parent=5 // pred_check
      _
    $region10: #{ddpm_forward.1} parent=5 // pred_check_branch
      %449 = sbr.rel (%p446) target = $region12
    $region11: #{ddpm_forward.1} parent=5 // pred_region
      %s450 = ssub.s32 %s38, 1
      // Predicated region
      $region13: #{ddpm_forward.1} parent=11 // pred_check
        %p451 = pneg %p137
      $region14: #{ddpm_forward.1} parent=11 // pred_check_branch
        %453 = sbr.rel (%p451) target = $region16
      $region15: #{ddpm_forward.1} parent=11 // pred_region
        _
      $region16: #{ddpm_forward.1} parent=11 // pred_fallthru
        _
      // Predicated region
      $region17: #{ddpm_forward.1} parent=11 // pred_check
        %p454 = pneg %p158
      $region18: #{ddpm_forward.1} parent=11 // pred_check_branch
        %456 = sbr.rel (%p454) target = $region20
      $region19: #{ddpm_forward.1} parent=11 // pred_region
        _
      $region20: #{ddpm_forward.1} parent=11 // pred_fallthru
        _
      // Predicated region
      $region21: #{ddpm_forward.1} parent=11 // pred_check
        %p457 = pneg %p179
      $region22: #{ddpm_forward.1} parent=11 // pred_check_branch
        %459 = sbr.rel (%p457) target = $region24
      $region23: #{ddpm_forward.1} parent=11 // pred_region
        _
      $region24: #{ddpm_forward.1} parent=11 // pred_fallthru
        _
      // Predicated region
      $region25: #{ddpm_forward.1} parent=11 // pred_check
        %p460 = pneg %p200
      $region26: #{ddpm_forward.1} parent=11 // pred_check_branch
        %462 = sbr.rel (%p460) target = $region28
      $region27: #{ddpm_forward.1} parent=11 // pred_region
        _
      $region28: #{ddpm_forward.1} parent=11 // pred_fallthru
        _
      // Predicated region
      $region29: #{ddpm_forward.1} parent=11 // pred_check
        %p463 = pneg %p221
      $region30: #{ddpm_forward.1} parent=11 // pred_check_branch
        %465 = sbr.rel (%p463) target = $region32
      $region31: #{ddpm_forward.1} parent=11 // pred_region
        _
      $region32: #{ddpm_forward.1} parent=11 // pred_fallthru
        _
      // Predicated region
      $region33: #{ddpm_forward.1} parent=11 // pred_check
        %p466 = pneg %p242
      $region34: #{ddpm_forward.1} parent=11 // pred_check_branch
        %468 = sbr.rel (%p466) target = $region36
      $region35: #{ddpm_forward.1} parent=11 // pred_region
        _
      $region36: #{ddpm_forward.1} parent=11 // pred_fallthru
        _
      // Predicated region
      $region37: #{ddpm_forward.1} parent=11 // pred_check
        %p469 = pneg %p263
      $region38: #{ddpm_forward.1} parent=11 // pred_check_branch
        %471 = sbr.rel (%p469) target = $region40
      $region39: #{ddpm_forward.1} parent=11 // pred_region
        _
      $region40: #{ddpm_forward.1} parent=11 // pred_fallthru
        _
      // Predicated region
      $region41: #{ddpm_forward.1} parent=11 // pred_check
        %p472 = pneg %p284
      $region42: #{ddpm_forward.1} parent=11 // pred_check_branch
        %474 = sbr.rel (%p472) target = $region44
      $region43: #{ddpm_forward.1} parent=11 // pred_region
        _
      $region44: #{ddpm_forward.1} parent=11 // pred_fallthru
        _
      // Predicated region
      $region45: #{ddpm_forward.1} parent=11 // pred_check
        %p475 = pneg %p305
      $region46: #{ddpm_forward.1} parent=11 // pred_check_branch
        %477 = sbr.rel (%p475) target = $region48
      $region47: #{ddpm_forward.1} parent=11 // pred_region
        _
      $region48: #{ddpm_forward.1} parent=11 // pred_fallthru
        _
      // Predicated region
      $region49: #{ddpm_forward.1} parent=11 // pred_check
        %p478 = pneg %p326
      $region50: #{ddpm_forward.1} parent=11 // pred_check_branch
        %480 = sbr.rel (%p478) target = $region52
      $region51: #{ddpm_forward.1} parent=11 // pred_region
        _
      $region52: #{ddpm_forward.1} parent=11 // pred_fallthru
        _
      // Predicated region
      $region53: #{ddpm_forward.1} parent=11 // pred_check
        %p481 = pneg %p347
      $region54: #{ddpm_forward.1} parent=11 // pred_check_branch
        %483 = sbr.rel (%p481) target = $region56
      $region55: #{ddpm_forward.1} parent=11 // pred_region
        _
      $region56: #{ddpm_forward.1} parent=11 // pred_fallthru
        _
      // Predicated region
      $region57: #{ddpm_forward.1} parent=11 // pred_check
        %p484 = pneg %p368
      $region58: #{ddpm_forward.1} parent=11 // pred_check_branch
        %486 = sbr.rel (%p484) target = $region60
      $region59: #{ddpm_forward.1} parent=11 // pred_region
        _
      $region60: #{ddpm_forward.1} parent=11 // pred_fallthru
        _
      // Predicated region
      $region61: #{ddpm_forward.1} parent=11 // pred_check
        %p487 = pneg %p389
      $region62: #{ddpm_forward.1} parent=11 // pred_check_branch
        %489 = sbr.rel (%p487) target = $region64
      $region63: #{ddpm_forward.1} parent=11 // pred_region
        _
      $region64: #{ddpm_forward.1} parent=11 // pred_fallthru
        _
      // Predicated region
      $region65: #{ddpm_forward.1} parent=11 // pred_check
        %p490 = pneg %p410
      $region66: #{ddpm_forward.1} parent=11 // pred_check_branch
        %492 = sbr.rel (%p490) target = $region68
      $region67: #{ddpm_forward.1} parent=11 // pred_region
        _
      $region68: #{ddpm_forward.1} parent=11 // pred_fallthru
        _
    $region12: #{ddpm_forward.1} parent=5 // pred_fallthru
      _
    %p493 = scmp.lt.s32.totalorder %s38, 2
    // Predicated region
    $region69: #{ddpm_forward.1} parent=5 // pred_check
      %p494 = pneg %p493
    $region70: #{ddpm_forward.1} parent=5 // pred_check_branch
      %496 = sbr.rel (%p494) target = $region72
    $region71: #{ddpm_forward.1} parent=5 // pred_region
      // Predicated region
      $region73: #{ddpm_forward.1} parent=71 // pred_check
        %p497 = pneg %p58
      $region74: #{ddpm_forward.1} parent=71 // pred_check_branch
        %499 = sbr.rel (%p497) target = $region76
      $region75: #{ddpm_forward.1} parent=71 // pred_region
        %p500 = scmp.lt.s32.totalorder %s38, 1
        %s501 = scalar_select %p500, %s38, 1
        %s502 = smul.addr %s501, 2
        %s503 = smul.addr %s502, 4
        %s504 = scalar_lea.vmem %s2, %s503
      $region76: #{ddpm_forward.1} parent=71 // pred_fallthru
        _
      // Predicated region
      $region77: #{ddpm_forward.1} parent=71 // pred_check
        %p505 = pneg %p84
      $region78: #{ddpm_forward.1} parent=71 // pred_check_branch
        %507 = sbr.rel (%p505) target = $region80
      $region79: #{ddpm_forward.1} parent=71 // pred_region
        %p508 = scmp.lt.s32.totalorder %s38, 1
        %s509 = scalar_select %p508, %s38, 1
        %s510 = smul.addr %s509, 2
        %s511 = smul.addr %s510, 4
        %s512 = scalar_lea.vmem %s3, %s511
      $region80: #{ddpm_forward.1} parent=71 // pred_fallthru
        _
      // Predicated region
      $region81: #{ddpm_forward.1} parent=71 // pred_check
        %p513 = pneg %p110
      $region82: #{ddpm_forward.1} parent=71 // pred_check_branch
        %515 = sbr.rel (%p513) target = $region84
      $region83: #{ddpm_forward.1} parent=71 // pred_region
        %p516 = scmp.lt.s32.totalorder %s38, 1
        %s517 = scalar_select %p516, %s38, 1
        %s518 = scalar_lea.vmem %s4, %s517
      $region84: #{ddpm_forward.1} parent=71 // pred_fallthru
        _
    $region72: #{ddpm_forward.1} parent=5 // pred_fallthru
      _
    %p519 = scmp.le.s32.totalorder 1, %s38
    %p520 = scmp.lt.s32.totalorder %s38, 3
    %p521 = pnand %p519, %p520
    %p522 = pneg %p521
    // Predicated region
    $region85: #{ddpm_forward.1} parent=5 // pred_check
      _
    $region86: #{ddpm_forward.1} parent=5 // pred_check_branch
      %524 = sbr.rel (%p521) target = $region88
    $region87: #{ddpm_forward.1} parent=5 // pred_region
      %s525 = ssub.s32 %s38, 1
      %p526 = scmp.lt.s32.totalorder %s43, 1
      %s527 = scalar_select %p526, %s43, 1
      %s528 = smul.addr %s527, 2
      %s529 = smul.addr %s528, 4
      %s530 = scalar_lea.vmem %s2, %s529
      %p531 = pneg %p64
      %p532 = pneg %p61
      %p533 = scmp.lt.s32.totalorder %s43, 1
      %s534 = scalar_select %p533, %s43, 1
      %s535 = smul.addr %s534, 2
      %s536 = smul.addr %s535, 4
      %s537 = scalar_lea.vmem %s3, %s536
      %p538 = pneg %p90
      %p539 = pneg %p87
      %p540 = scmp.lt.s32.totalorder %s43, 1
      %s541 = scalar_select %p540, %s43, 1
      %s542 = scalar_lea.vmem %s4, %s541
      %p543 = pneg %p116
      %p544 = pneg %p113
      %p545 = pneg %p137
      %p546 = pneg %p134
      %p547 = pneg %p158
      %p548 = pneg %p155
      %p549 = pneg %p179
      %p550 = pneg %p176
      %p551 = pneg %p200
      %p552 = pneg %p197
      %p553 = pneg %p221
      %p554 = pneg %p218
      %p555 = pneg %p242
      %p556 = pneg %p239
      %p557 = pneg %p263
      %p558 = pneg %p260
      %p559 = pneg %p284
      %p560 = pneg %p281
      %p561 = pneg %p305
      %p562 = pneg %p302
      %p563 = pneg %p326
      %p564 = pneg %p323
      %p565 = pneg %p347
      %p566 = pneg %p344
      %p567 = pneg %p368
      %p568 = pneg %p365
      %p569 = pneg %p389
      %p570 = pneg %p386
      %p571 = pneg %p410
      %p572 = pneg %p407
      %p573 = pneg %p436
      %p574 = pneg %p433
      %p575 = scmp.lt.s32.totalorder %s43, 1
      %s576 = scalar_select %p575, %s43, 1
      %s577 = smul.addr %s576, 2
      %s578 = smul.addr %s577, 4
      %s579 = scalar_lea.vmem %s19, %s578
      %p580 = scmp.lt.s32.totalorder %s43, 1
      %s581 = scalar_select %p580, %s43, 1
      %s582 = smul.addr %s581, 2
      %s583 = smul.addr %s582, 4
      %s584 = scalar_lea.vmem %s2, %s583
      %p585 = scmp.lt.s32.totalorder %s43, 1
      %s586 = scalar_select %p585, %s43, 1
      %s587 = smul.addr %s586, 2
      %s588 = smul.addr %s587, 4
      %s589 = scalar_lea.vmem %s3, %s588
      %p590 = scmp.lt.s32.totalorder %s43, 1
      %s591 = scalar_select %p590, %s43, 1
      %s592 = scalar_lea.vmem %s4, %s591
      %p593 = scmp.lt.s32.totalorder %s43, 1
      %s594 = scalar_select %p593, %s43, 1
      %s595 = smul.addr %s594, 2
      %s596 = smul.addr %s595, 4
      %s597 = scalar_lea.vmem %s19, %s596
      %v598 = vlaneseq
      %v599 = vand.u32 %v598, 127
      %v600 = vadd.s32 %v599, 128
      %vm601 = vcmp.lt.s32.totalorder %v599, 0
      %v602 = vsub.s32 0, %v599
      %v603 = vsel %vm601, %v602, %v599
      %v604 = vshrl.u32 %v603, 4
      %v605 = vand.u32 %v603, 15
      %v606 = vsub.s32 0, %v605
      %v607 = vsel %vm601, %v606, %v605
      %vm608 = vcmp.lt.s32.totalorder %v600, 0
      %v609 = vsub.s32 0, %v600
      %v610 = vsel %vm608, %v609, %v600
      %v611 = vshrl.u32 %v610, 4
      %v612 = vand.u32 %v610, 15
      %v613 = vsub.s32 0, %v612
      %v614 = vsel %vm608, %v613, %v612
      %vm615 = vcmp.ne.s32.totalorder %v607, 0
      %vm616 = vcmp.ne.s32.totalorder %v614, 0
      %vm617 = vcmp.lt.s32.totalorder %v607, 0
      %vm618 = vcmp.lt.s32.totalorder %v614, 0
      %vm619 = vmand %vm617, %vm615
      %vm620 = vmand %vm618, %vm616
      %v621 = vadd.s32 %v607, 16
      %v622 = vadd.s32 %v614, 16
      %v623 = vsel %vm619, %v621, %v607
      %v624 = vsel %vm620, %v622, %v614
      %vm625 = vcmp.ge.s32.totalorder %v623, 1
      %vm626 = vcmp.ge.s32.totalorder %v624, 1
      %vm627 = vcmp.le.s32.totalorder %v623, 14
      %vm628 = vcmp.le.s32.totalorder %v624, 14
      %629 = vst [vmem:[#allocation2] sm:$0xff] 0.0
      %630 = vst [vmem:[#allocation2 + $0x20] sm:$0xff] 0.0
      %631 = vst [vmem:[#allocation2 + $0x40] sm:$0xff] 0.0
      %632 = vst [vmem:[#allocation2 + $0x60] sm:$0xff] 0.0
      %633 = vst [vmem:[#allocation2 + $0x18] sm:$0xff] 0.0
      %634 = vst [vmem:[#allocation2 + $0x38] sm:$0xff] 0.0
      %635 = vst [vmem:[#allocation2 + $0x58] sm:$0xff] 0.0
      %636 = vst [vmem:[#allocation2 + $0x78] sm:$0xff] 0.0
      %s637 = sld [smem:[#allocation4 + %s43]]
      %s638 = sld [smem:[#allocation5 + %s637]]
      %v639 = vstv %s638
      %v640 = vrsqrt.pop %v639
      %v641 = vmul.f32 %v640, %v639
      %v642 = vmul.f32 %v641, %v640
      %v643 = vmul.f32 0.5, %v642
      %v644 = vsub.f32 1.5, %v643
      %v645 = vmul.f32 %v640, %v644
      %v646 = vmul.f32 %v639, %v645
      %vm647 = vcmp.eq.f32.partialorder %v639, inf
      %v648 = vsel %vm647, %v639, %v646
      %vm649 = vcmp.eq.f32.partialorder %v639, 0.0
      %v650 = vand.u32 %v639, 2147483648
      %v651 = vsel %vm649, %v650, %v648
      %s652 = vtos %v651
      %v653 = vld [vmem:[%s584] sm:$0xff]
      %v654 = vstv %s652
      %v655 = vmul.f32 %v654, %v653
      %s656 = ssub.f32 1.0, %s638
      %v657 = vstv %s656
      %v658 = vrsqrt.pop %v657
      %v659 = vmul.f32 %v658, %v657
      %v660 = vmul.f32 %v659, %v658
      %v661 = vmul.f32 0.5, %v660
      %v662 = vsub.f32 1.5, %v661
      %v663 = vmul.f32 %v658, %v662
      %v664 = vmul.f32 %v657, %v663
      %vm665 = vcmp.eq.f32.partialorder %v657, inf
      %v666 = vsel %vm665, %v657, %v664
      %vm667 = vcmp.eq.f32.partialorder %v657, 0.0
      %v668 = vand.u32 %v657, 2147483648
      %v669 = vsel %vm667, %v668, %v666
      %s670 = vtos %v669
      %v671 = vld [vmem:[%s589] sm:$0xff]
      %v672 = vstv %s670
      %v673 = vmul.f32 %v672, %v671
      %v674 = vadd.f32 %v655, %v673
      %676 = vst [vmem:[#allocation1] ss:$2 sm:$0xff] %v674
      %v677 = vld.sshfl [vmem:[#allocation1] sm:$0xff pattern:$0x75316420]
      %v678 = vld.sshfl [vmem:[#allocation1 + $0x8] sm:$0xff pattern:$0x75316420]
      %vm681 = vcmask 1043456
      %v682 = vsel %vm681, %v677, 0.0
      %v683 = vsel %vm681, %v678, 0.0
      %v684 = vld [vmem:[%s592] sm:$0x1]
      %v685 = vld [vmem:[%s5] sm:$0xff]
      %v686 = vld [vmem:[%s5 + $0x8] sm:$0xff]
      %v687 = vld [vmem:[%s5 + $0x10] sm:$0xff]
      %v688 = vld [vmem:[%s5 + $0x18] sm:$0xff]
      %v690 = vperm.slane %v684, 0
      %v692 = vmul.f32 %v685, %v690
      %v693 = vmul.f32 %v686, %v690
      %v694 = vmul.f32 %v687, %v690
      %v695 = vmul.f32 %v688, %v690
      %vm696 = vcmask 261120
      %v697 = vsel %vm696, %v692, 0.0
      %698 = vadd.xlane.f32.xlu0 %v697
      %v699 = vpop.xlane.xlu0 %698
      %v700 = vsel %vm696, %v693, 0.0
      %701 = vadd.xlane.f32.xlu0 %v700
      %v702 = vpop.xlane.xlu0 %701
      %v703 = vsel %vm696, %v694, 0.0
      %704 = vadd.xlane.f32.xlu0 %v703
      %v705 = vpop.xlane.xlu0 %704
      %v706 = vsel %vm696, %v695, 0.0
      %707 = vadd.xlane.f32.xlu0 %v706
      %v708 = vpop.xlane.xlu0 %707
      %v709 = vld [vmem:[%s6] sm:$0xff]
      %v710 = vld [vmem:[%s6 + $0x8] sm:$0xff]
      %v711 = vld [vmem:[%s6 + $0x10] sm:$0xff]
      %v712 = vld [vmem:[%s6 + $0x18] sm:$0xff]
      %v713 = vadd.f32 %v699, %v709
      %v714 = vadd.f32 %v702, %v710
      %v715 = vadd.f32 %v705, %v711
      %v716 = vadd.f32 %v708, %v712
      %v717 = vxor.u32 %v713, 2147483648
      %v718 = vxor.u32 %v714, 2147483648
      %v719 = vxor.u32 %v715, 2147483648
      %v720 = vxor.u32 %v716, 2147483648
      %v721 = vmul.f32 %v717, 1.442695
      %v722 = vpow.pop %v721
      %v723 = vmul.f32 %v718, 1.442695
      %v724 = vpow.pop %v723
      %v725 = vmul.f32 %v719, 1.442695
      %v726 = vpow.pop %v725
      %v727 = vmul.f32 %v720, 1.442695
      %v728 = vpow.pop %v727
      %v729 = vadd.f32 %v722, 1.0
      %v730 = vadd.f32 %v724, 1.0
      %v731 = vadd.f32 %v726, 1.0
      %v732 = vadd.f32 %v728, 1.0
      %v733 = vrcp.pop %v729
      %v734 = vmul.f32 %v729, %v733
      %v735 = vsub.f32 1.0, %v734
      %v736 = vmul.f32 %v733, %v735
      %v737 = vadd.f32 %v733, %v736
      %vm738 = vweird.f32 %v729
      %vm739 = vweird.f32 %v733
      %vm740 = vmor %vm738, %vm739
      %v741 = vsel %vm740, %v733, %v737
      %v742 = vand.u32 2147483647, %v729
      %vm743 = vcmp.eq.f32.partialorder %v742, 8.507059e+37
      %v744 = vand.u32 %v729, 2147483648
      %v745 = vor.u32 1.1754944e-38, %v744
      %v746 = vsel %vm743, %v745, %v741
      %v747 = vmul.f32 1.0, %v746
      %v748 = vrcp.pop %v730
      %v749 = vmul.f32 %v730, %v748
      %v750 = vsub.f32 1.0, %v749
      %v751 = vmul.f32 %v748, %v750
      %v752 = vadd.f32 %v748, %v751
      %vm753 = vweird.f32 %v730
      %vm754 = vweird.f32 %v748
      %vm755 = vmor %vm753, %vm754
      %v756 = vsel %vm755, %v748, %v752
      %v757 = vand.u32 2147483647, %v730
      %vm758 = vcmp.eq.f32.partialorder %v757, 8.507059e+37
      %v759 = vand.u32 %v730, 2147483648
      %v760 = vor.u32 1.1754944e-38, %v759
      %v761 = vsel %vm758, %v760, %v756
      %v762 = vmul.f32 1.0, %v761
      %v763 = vrcp.pop %v731
      %v764 = vmul.f32 %v731, %v763
      %v765 = vsub.f32 1.0, %v764
      %v766 = vmul.f32 %v763, %v765
      %v767 = vadd.f32 %v763, %v766
      %vm768 = vweird.f32 %v731
      %vm769 = vweird.f32 %v763
      %vm770 = vmor %vm768, %vm769
      %v771 = vsel %vm770, %v763, %v767
      %v772 = vand.u32 2147483647, %v731
      %vm773 = vcmp.eq.f32.partialorder %v772, 8.507059e+37
      %v774 = vand.u32 %v731, 2147483648
      %v775 = vor.u32 1.1754944e-38, %v774
      %v776 = vsel %vm773, %v775, %v771
      %v777 = vmul.f32 1.0, %v776
      %v778 = vrcp.pop %v732
      %v779 = vmul.f32 %v732, %v778
      %v780 = vsub.f32 1.0, %v779
      %v781 = vmul.f32 %v778, %v780
      %v782 = vadd.f32 %v778, %v781
      %vm783 = vweird.f32 %v732
      %vm784 = vweird.f32 %v778
      %vm785 = vmor %vm783, %vm784
      %v786 = vsel %vm785, %v778, %v782
      %v787 = vand.u32 2147483647, %v732
      %vm788 = vcmp.eq.f32.partialorder %v787, 8.507059e+37
      %v789 = vand.u32 %v732, 2147483648
      %v790 = vor.u32 1.1754944e-38, %v789
      %v791 = vsel %vm788, %v790, %v786
      %v792 = vmul.f32 1.0, %v791
      %v793 = vmul.f32 %v713, %v747
      %v794 = vmul.f32 %v714, %v762
      %v795 = vmul.f32 %v715, %v777
      %v796 = vmul.f32 %v716, %v792
      %v797 = vld [vmem:[%s7] sm:$0xff]
      %v798 = vld [vmem:[%s7 + $0x8] sm:$0xff]
      %v799 = vld [vmem:[%s7 + $0x10] sm:$0xff]
      %v800 = vld [vmem:[%s7 + $0x18] sm:$0xff]
      %802 = vset.pattern.permute.xlu0 0
      %803 = vperm.xlu0 %802, %v793
      %v804 = vpop.permute.xlu0 %803
      %807 = vset.pattern.permute.xlu0 0
      %808 = vperm.xlu0 %807, %v794
      %v809 = vpop.permute.xlu0 %808
      %812 = vset.pattern.permute.xlu0 0
      %813 = vperm.xlu0 %812, %v795
      %v814 = vpop.permute.xlu0 %813
      %817 = vset.pattern.permute.xlu0 0
      %818 = vperm.xlu0 %817, %v796
      %v819 = vpop.permute.xlu0 %818
      %v821 = vmul.f32 %v797, %v804
      %v822 = vmul.f32 %v798, %v809
      %v823 = vmul.f32 %v799, %v814
      %v824 = vmul.f32 %v800, %v819
      %v825 = vsel %vm696, %v821, 0.0
      %v826 = vsel %vm696, %v822, 0.0
      %v827 = vadd.f32 %v825, %v826
      %v828 = vsel %vm696, %v823, 0.0
      %v829 = vadd.f32 %v827, %v828
      %v830 = vsel %vm696, %v824, 0.0
      %v831 = vadd.f32 %v829, %v830
      %v832 = vrot.slane %v831, 4
      %v833 = vadd.f32 %v831, %v832
      %v834 = vrot.slane %v833, 2
      %v835 = vadd.f32 %v833, %v834
      %v836 = vrot.slane %v835, 1
      %v837 = vadd.f32 %v835, %v836
      %v838 = vld [vmem:[%s8] sm:$0x1]
      %v839 = vadd.f32 %v837, %v838
      %v840 = vld [vmem:[%s9] sm:$0xff]
      %v841 = vld [vmem:[%s9 + $0x8] sm:$0xff]
      %v842 = vld [vmem:[%s9 + $0x10] sm:$0xff]
      %v843 = vld [vmem:[%s9 + $0x18] sm:$0xff]
      %v844 = vperm.slane %v839, 0
      %v845 = vmul.f32 %v840, %v844
      %v846 = vmul.f32 %v841, %v844
      %v847 = vmul.f32 %v842, %v844
      %v848 = vmul.f32 %v843, %v844
      %v849 = vsel %vm696, %v845, 0.0
      %850 = vadd.xlane.f32.xlu0 %v849
      %v851 = vpop.xlane.xlu0 %850
      %v852 = vsel %vm696, %v846, 0.0
      %853 = vadd.xlane.f32.xlu0 %v852
      %v854 = vpop.xlane.xlu0 %853
      %v855 = vsel %vm696, %v847, 0.0
      %856 = vadd.xlane.f32.xlu0 %v855
      %v857 = vpop.xlane.xlu0 %856
      %v858 = vsel %vm696, %v848, 0.0
      %859 = vadd.xlane.f32.xlu0 %v858
      %v860 = vpop.xlane.xlu0 %859
      %v861 = vld [vmem:[%s10] sm:$0xff]
      %v862 = vld [vmem:[%s10 + $0x8] sm:$0xff]
      %v863 = vld [vmem:[%s10 + $0x10] sm:$0xff]
      %v864 = vld [vmem:[%s10 + $0x18] sm:$0xff]
      %v865 = vadd.f32 %v851, %v861
      %v866 = vadd.f32 %v854, %v862
      %v867 = vadd.f32 %v857, %v863
      %v868 = vadd.f32 %v860, %v864
      %869 = vst [vmem:[#allocation2 + $0x8] sm:$0xff] %v682
      %870 = vst [vmem:[#allocation2 + $0x10] sm:$0xff] %v683
      %v871 = vld [vmem:[#allocation2] sm:$0xff]
      %v872 = vld [vmem:[#allocation2 + $0x8] sm:$0xff]
      %v873 = vld [vmem:[#allocation2 + $0x10] sm:$0xff]
      %v874 = vsel %vm625, 1, 0
      %v875 = vsel %vm626, 1, 0
      %vm876 = vcmp.eq.s32.totalorder %v874, 1
      %vm877 = vcmp.eq.s32.totalorder %v875, 1
      %881 = vrot.lane.b32.xlu0 %v871, 17
      %v882 = vpop.permute.xlu0 %881
      %883 = vrot.lane.b32.xlu0 %v872, 17
      %v884 = vpop.permute.xlu0 %883
      %885 = vrot.lane.b32.xlu0 %v873, 17
      %v886 = vpop.permute.xlu0 %885
      %vm887 = vcmask 138240
      %v888 = vsel %vm887, %v882, %v884
      %v889 = vsel %vm887, %v884, %v886
      %v892 = vsel %vm876, %v888, 0.0
      %v893 = vsel %vm877, %v889, 0.0
      %v894 = vsel %vm627, 1, 0
      %v895 = vsel %vm628, 1, 0
      %vm896 = vcmp.eq.s32.totalorder %v894, 1
      %vm897 = vcmp.eq.s32.totalorder %v895, 1
      %898 = vrot.lane.b32.xlu0 %v871, 15
      %v899 = vpop.permute.xlu0 %898
      %900 = vrot.lane.b32.xlu0 %v872, 15
      %v901 = vpop.permute.xlu0 %900
      %902 = vrot.lane.b32.xlu0 %v873, 15
      %v903 = vpop.permute.xlu0 %902
      %vm904 = vcmask 121856
      %v905 = vsel %vm904, %v899, %v901
      %v906 = vsel %vm904, %v901, %v903
      %v909 = vsel %vm896, %v905, 0.0
      %v910 = vsel %vm897, %v906, 0.0
      %911 = vrot.lane.b32.xlu0 %v871, 1
      %v912 = vpop.permute.xlu0 %911
      %913 = vrot.lane.b32.xlu0 %v872, 1
      %v914 = vpop.permute.xlu0 %913
      %915 = vrot.lane.b32.xlu0 %v873, 1
      %v916 = vpop.permute.xlu0 %915
      %vm917 = vcmask 7168
      %v918 = vsel %vm917, %v912, %v914
      %v919 = vsel %vm917, %v914, %v916
      %v922 = vsel %vm876, %v918, 0.0
      %v923 = vsel %vm877, %v919, 0.0
      %v924 = vld [vmem:[#allocation2 + $0x18] sm:$0xff]
      %926 = vrot.lane.b32.xlu0 %v872, 127
      %v927 = vpop.permute.xlu0 %926
      %928 = vrot.lane.b32.xlu0 %v873, 127
      %v929 = vpop.permute.xlu0 %928
      %930 = vrot.lane.b32.xlu0 %v924, 127
      %v931 = vpop.permute.xlu0 %930
      %vm932 = vcmask 1039360
      %v933 = vsel %vm932, %v927, %v929
      %v934 = vsel %vm932, %v929, %v931
      %v937 = vsel %vm896, %v933, 0.0
      %v938 = vsel %vm897, %v934, 0.0
      %939 = vrot.lane.b32.xlu0 %v872, 113
      %v940 = vpop.permute.xlu0 %939
      %941 = vrot.lane.b32.xlu0 %v873, 113
      %v942 = vpop.permute.xlu0 %941
      %943 = vrot.lane.b32.xlu0 %v924, 113
      %v944 = vpop.permute.xlu0 %943
      %vm945 = vcmask 924672
      %v946 = vsel %vm945, %v940, %v942
      %v947 = vsel %vm945, %v942, %v944
      %v950 = vsel %vm876, %v946, 0.0
      %v951 = vsel %vm877, %v947, 0.0
      %952 = vrot.lane.b32.xlu0 %v872, 111
      %v953 = vpop.permute.xlu0 %952
      %954 = vrot.lane.b32.xlu0 %v873, 111
      %v955 = vpop.permute.xlu0 %954
      %956 = vrot.lane.b32.xlu0 %v924, 111
      %v957 = vpop.permute.xlu0 %956
      %vm958 = vcmask 908288
      %v959 = vsel %vm958, %v953, %v955
      %v960 = vsel %vm958, %v955, %v957
      %v963 = vsel %vm896, %v959, 0.0
      %v964 = vsel %vm897, %v960, 0.0
      %965 = vrot.lane.b32.xlu0 %v871, 16
      %v966 = vpop.permute.xlu0 %965
      %967 = vrot.lane.b32.xlu0 %v872, 16
      %v968 = vpop.permute.xlu0 %967
      %969 = vrot.lane.b32.xlu0 %v873, 16
      %v970 = vpop.permute.xlu0 %969
      %vm971 = vcmask 130048
      %v972 = vsel %vm971, %v966, %v968
      %v973 = vsel %vm971, %v968, %v970
      %976 = vrot.lane.b32.xlu0 %v872, 112
      %v977 = vpop.permute.xlu0 %976
      %978 = vrot.lane.b32.xlu0 %v873, 112
      %v979 = vpop.permute.xlu0 %978
      %980 = vrot.lane.b32.xlu0 %v924, 112
      %v981 = vpop.permute.xlu0 %980
      %vm982 = vcmask 916480
      %v983 = vsel %vm982, %v977, %v979
      %v984 = vsel %vm982, %v979, %v981
      %v987 = vld [vmem:[%s11] sm:$0xff]
      %v988 = vld [vmem:[%s11 + $0x8] sm:$0xff]
      %v989 = vld [vmem:[%s11 + $0x10] sm:$0xff]
      %v990 = vld [vmem:[%s11 + $0x18] sm:$0xff]
      %v991 = vld [vmem:[%s12] sm:$0xff]
      %v992 = vld [vmem:[%s12 + $0x8] sm:$0xff]
      %v993 = vld [vmem:[%s12 + $0x10] sm:$0xff]
      %v994 = vld [vmem:[%s12 + $0x18] sm:$0xff]
      %996 = vset.pattern.permute.xlu0 0
      %997 = vperm.xlu0 %996, %v991
      %v998 = vpop.permute.xlu0 %997
      %1001 = vset.pattern.permute.xlu0 0
      %1002 = vperm.xlu0 %1001, %v992
      %v1003 = vpop.permute.xlu0 %1002
      %1006 = vset.pattern.permute.xlu0 0
      %1007 = vperm.xlu0 %1006, %v993
      %v1008 = vpop.permute.xlu0 %1007
      %1011 = vset.pattern.permute.xlu0 0
      %1012 = vperm.xlu0 %1011, %v994
      %v1013 = vpop.permute.xlu0 %1012
      %vm1015 = vcmask 588800
      %v1017 = vsel %vm1015, %v987, 0
      %v1020 = vsel %vm1015, %v988, 0
      %v1023 = vsel %vm1015, %v989, 0
      %v1026 = vsel %vm1015, %v990, 0
      %1028 = vmatpush.msra.mxu0 0.0
      %1029 = vmatpush.msra.mxu0 0.0
      %1030 = vmatpush.msra.mxu0 0.0
      %1031 = vmatpush.msra.mxu0 0.0
      %1032 = vmatpush.msra.mxu0 0.0
      %1033 = vmatpush.msra.mxu0 0.0
      %1034 = vmatpush.msra.mxu0 0.0
      %1035 = vmatpush.msra.mxu0 %v963
      %1036 = vmatpush.msra.mxu0 %v983
      %1037 = vmatpush.msra.mxu0 %v950
      %1038 = vmatpush.msra.mxu0 %v937
      %1039 = vmatpush.msra.mxu0 %v872
      %1040 = vmatpush.msra.mxu0 %v922
      %1041 = vmatpush.msra.mxu0 %v909
      %1042 = vmatpush.msra.mxu0 %v972
      %1043 = vmatpush.msra.mxu0 %v892
      %1044 = vmatmul.f32.gmra.mxu0 %v1017
      %v1045 = vpop.f32.mrf.mxu0
      %v1046 = vadd.f32 %v998, %v1045
      %1047 = vmatmul.f32.gmra.mxu0 %v1020
      %v1048 = vpop.f32.mrf.mxu0
      %v1049 = vadd.f32 %v1003, %v1048
      %1050 = vmatmul.f32.gmra.mxu0 %v1023
      %v1051 = vpop.f32.mrf.mxu0
      %v1052 = vadd.f32 %v1008, %v1051
      %1053 = vmatmul.f32.gmra.mxu0 %v1026
      %v1054 = vpop.f32.mrf.mxu0
      %v1055 = vadd.f32 %v1013, %v1054
      %1056 = vdwg.mxu0
      %1057 = vmatpush.msra.mxu0 0.0
      %1058 = vmatpush.msra.mxu0 0.0
      %1059 = vmatpush.msra.mxu0 0.0
      %1060 = vmatpush.msra.mxu0 0.0
      %1061 = vmatpush.msra.mxu0 0.0
      %1062 = vmatpush.msra.mxu0 0.0
      %1063 = vmatpush.msra.mxu0 0.0
      %1064 = vmatpush.msra.mxu0 %v964
      %1065 = vmatpush.msra.mxu0 %v984
      %1066 = vmatpush.msra.mxu0 %v951
      %1067 = vmatpush.msra.mxu0 %v938
      %1068 = vmatpush.msra.mxu0 %v873
      %1069 = vmatpush.msra.mxu0 %v923
      %1070 = vmatpush.msra.mxu0 %v910
      %1071 = vmatpush.msra.mxu0 %v973
      %1072 = vmatpush.msra.mxu0 %v893
      %1073 = vmatmul.f32.gmra.mxu0 %v1017
      %v1074 = vpop.f32.mrf.mxu0
      %v1075 = vadd.f32 %v998, %v1074
      %1076 = vmatmul.f32.gmra.mxu0 %v1020
      %v1077 = vpop.f32.mrf.mxu0
      %v1078 = vadd.f32 %v1003, %v1077
      %1079 = vmatmul.f32.gmra.mxu0 %v1023
      %v1080 = vpop.f32.mrf.mxu0
      %v1081 = vadd.f32 %v1008, %v1080
      %1082 = vmatmul.f32.gmra.mxu0 %v1026
      %v1083 = vpop.f32.mrf.mxu0
      %v1084 = vadd.f32 %v1013, %v1083
      %1085 = vdwg.mxu0
      %v1086 = vxor.u32 %v1046, 2147483648
      %v1087 = vxor.u32 %v1075, 2147483648
      %v1088 = vxor.u32 %v1049, 2147483648
      %v1089 = vxor.u32 %v1078, 2147483648
      %v1090 = vxor.u32 %v1052, 2147483648
      %v1091 = vxor.u32 %v1081, 2147483648
      %v1092 = vxor.u32 %v1055, 2147483648
      %v1093 = vxor.u32 %v1084, 2147483648
      %v1094 = vmul.f32 %v1086, 1.442695
      %v1095 = vpow.pop %v1094
      %v1096 = vmul.f32 %v1087, 1.442695
      %v1097 = vpow.pop %v1096
      %v1098 = vmul.f32 %v1088, 1.442695
      %v1099 = vpow.pop %v1098
      %v1100 = vmul.f32 %v1089, 1.442695
      %v1101 = vpow.pop %v1100
      %v1102 = vmul.f32 %v1090, 1.442695
      %v1103 = vpow.pop %v1102
      %v1104 = vmul.f32 %v1091, 1.442695
      %v1105 = vpow.pop %v1104
      %v1106 = vmul.f32 %v1092, 1.442695
      %v1107 = vpow.pop %v1106
      %v1108 = vmul.f32 %v1093, 1.442695
      %v1109 = vpow.pop %v1108
      %v1110 = vadd.f32 %v1095, 1.0
      %v1111 = vadd.f32 %v1097, 1.0
      %v1112 = vadd.f32 %v1099, 1.0
      %v1113 = vadd.f32 %v1101, 1.0
      %v1114 = vadd.f32 %v1103, 1.0
      %v1115 = vadd.f32 %v1105, 1.0
      %v1116 = vadd.f32 %v1107, 1.0
      %v1117 = vadd.f32 %v1109, 1.0
      %v1118 = vrcp.pop %v1110
      %v1119 = vmul.f32 %v1110, %v1118
      %v1120 = vsub.f32 1.0, %v1119
      %v1121 = vmul.f32 %v1118, %v1120
      %v1122 = vadd.f32 %v1118, %v1121
      %vm1123 = vweird.f32 %v1110
      %vm1124 = vweird.f32 %v1118
      %vm1125 = vmor %vm1123, %vm1124
      %v1126 = vsel %vm1125, %v1118, %v1122
      %v1127 = vand.u32 2147483647, %v1110
      %vm1128 = vcmp.eq.f32.partialorder %v1127, 8.507059e+37
      %v1129 = vand.u32 %v1110, 2147483648
      %v1130 = vor.u32 1.1754944e-38, %v1129
      %v1131 = vsel %vm1128, %v1130, %v1126
      %v1132 = vmul.f32 1.0, %v1131
      %v1133 = vrcp.pop %v1111
      %v1134 = vmul.f32 %v1111, %v1133
      %v1135 = vsub.f32 1.0, %v1134
      %v1136 = vmul.f32 %v1133, %v1135
      %v1137 = vadd.f32 %v1133, %v1136
      %vm1138 = vweird.f32 %v1111
      %vm1139 = vweird.f32 %v1133
      %vm1140 = vmor %vm1138, %vm1139
      %v1141 = vsel %vm1140, %v1133, %v1137
      %v1142 = vand.u32 2147483647, %v1111
      %vm1143 = vcmp.eq.f32.partialorder %v1142, 8.507059e+37
      %v1144 = vand.u32 %v1111, 2147483648
      %v1145 = vor.u32 1.1754944e-38, %v1144
      %v1146 = vsel %vm1143, %v1145, %v1141
      %v1147 = vmul.f32 1.0, %v1146
      %v1148 = vrcp.pop %v1112
      %v1149 = vmul.f32 %v1112, %v1148
      %v1150 = vsub.f32 1.0, %v1149
      %v1151 = vmul.f32 %v1148, %v1150
      %v1152 = vadd.f32 %v1148, %v1151
      %vm1153 = vweird.f32 %v1112
      %vm1154 = vweird.f32 %v1148
      %vm1155 = vmor %vm1153, %vm1154
      %v1156 = vsel %vm1155, %v1148, %v1152
      %v1157 = vand.u32 2147483647, %v1112
      %vm1158 = vcmp.eq.f32.partialorder %v1157, 8.507059e+37
      %v1159 = vand.u32 %v1112, 2147483648
      %v1160 = vor.u32 1.1754944e-38, %v1159
      %v1161 = vsel %vm1158, %v1160, %v1156
      %v1162 = vmul.f32 1.0, %v1161
      %v1163 = vrcp.pop %v1113
      %v1164 = vmul.f32 %v1113, %v1163
      %v1165 = vsub.f32 1.0, %v1164
      %v1166 = vmul.f32 %v1163, %v1165
      %v1167 = vadd.f32 %v1163, %v1166
      %vm1168 = vweird.f32 %v1113
      %vm1169 = vweird.f32 %v1163
      %vm1170 = vmor %vm1168, %vm1169
      %v1171 = vsel %vm1170, %v1163, %v1167
      %v1172 = vand.u32 2147483647, %v1113
      %vm1173 = vcmp.eq.f32.partialorder %v1172, 8.507059e+37
      %v1174 = vand.u32 %v1113, 2147483648
      %v1175 = vor.u32 1.1754944e-38, %v1174
      %v1176 = vsel %vm1173, %v1175, %v1171
      %v1177 = vmul.f32 1.0, %v1176
      %v1178 = vrcp.pop %v1114
      %v1179 = vmul.f32 %v1114, %v1178
      %v1180 = vsub.f32 1.0, %v1179
      %v1181 = vmul.f32 %v1178, %v1180
      %v1182 = vadd.f32 %v1178, %v1181
      %vm1183 = vweird.f32 %v1114
      %vm1184 = vweird.f32 %v1178
      %vm1185 = vmor %vm1183, %vm1184
      %v1186 = vsel %vm1185, %v1178, %v1182
      %v1187 = vand.u32 2147483647, %v1114
      %vm1188 = vcmp.eq.f32.partialorder %v1187, 8.507059e+37
      %v1189 = vand.u32 %v1114, 2147483648
      %v1190 = vor.u32 1.1754944e-38, %v1189
      %v1191 = vsel %vm1188, %v1190, %v1186
      %v1192 = vmul.f32 1.0, %v1191
      %v1193 = vrcp.pop %v1115
      %v1194 = vmul.f32 %v1115, %v1193
      %v1195 = vsub.f32 1.0, %v1194
      %v1196 = vmul.f32 %v1193, %v1195
      %v1197 = vadd.f32 %v1193, %v1196
      %vm1198 = vweird.f32 %v1115
      %vm1199 = vweird.f32 %v1193
      %vm1200 = vmor %vm1198, %vm1199
      %v1201 = vsel %vm1200, %v1193, %v1197
      %v1202 = vand.u32 2147483647, %v1115
      %vm1203 = vcmp.eq.f32.partialorder %v1202, 8.507059e+37
      %v1204 = vand.u32 %v1115, 2147483648
      %v1205 = vor.u32 1.1754944e-38, %v1204
      %v1206 = vsel %vm1203, %v1205, %v1201
      %v1207 = vmul.f32 1.0, %v1206
      %v1208 = vrcp.pop %v1116
      %v1209 = vmul.f32 %v1116, %v1208
      %v1210 = vsub.f32 1.0, %v1209
      %v1211 = vmul.f32 %v1208, %v1210
      %v1212 = vadd.f32 %v1208, %v1211
      %vm1213 = vweird.f32 %v1116
      %vm1214 = vweird.f32 %v1208
      %vm1215 = vmor %vm1213, %vm1214
      %v1216 = vsel %vm1215, %v1208, %v1212
      %v1217 = vand.u32 2147483647, %v1116
      %vm1218 = vcmp.eq.f32.partialorder %v1217, 8.507059e+37
      %v1219 = vand.u32 %v1116, 2147483648
      %v1220 = vor.u32 1.1754944e-38, %v1219
      %v1221 = vsel %vm1218, %v1220, %v1216
      %v1222 = vmul.f32 1.0, %v1221
      %v1223 = vrcp.pop %v1117
      %v1224 = vmul.f32 %v1117, %v1223
      %v1225 = vsub.f32 1.0, %v1224
      %v1226 = vmul.f32 %v1223, %v1225
      %v1227 = vadd.f32 %v1223, %v1226
      %vm1228 = vweird.f32 %v1117
      %vm1229 = vweird.f32 %v1223
      %vm1230 = vmor %vm1228, %vm1229
      %v1231 = vsel %vm1230, %v1223, %v1227
      %v1232 = vand.u32 2147483647, %v1117
      %vm1233 = vcmp.eq.f32.partialorder %v1232, 8.507059e+37
      %v1234 = vand.u32 %v1117, 2147483648
      %v1235 = vor.u32 1.1754944e-38, %v1234
      %v1236 = vsel %vm1233, %v1235, %v1231
      %v1237 = vmul.f32 1.0, %v1236
      %v1238 = vmul.f32 %v1046, %v1132
      %v1239 = vmul.f32 %v1075, %v1147
      %v1240 = vmul.f32 %v1049, %v1162
      %v1241 = vmul.f32 %v1078, %v1177
      %v1242 = vmul.f32 %v1052, %v1192
      %v1243 = vmul.f32 %v1081, %v1207
      %v1244 = vmul.f32 %v1055, %v1222
      %v1245 = vmul.f32 %v1084, %v1237
      %1246 = vst [vmem:[#allocation2 + $0x8] sm:$0xff] %v1238
      %1247 = vst [vmem:[#allocation2 + $0x10] sm:$0xff] %v1239
      %1248 = vst [vmem:[#allocation2 + $0x28] sm:$0xff] %v1240
      %1249 = vst [vmem:[#allocation2 + $0x30] sm:$0xff] %v1241
      %1250 = vst [vmem:[#allocation2 + $0x48] sm:$0xff] %v1242
      %1251 = vst [vmem:[#allocation2 + $0x50] sm:$0xff] %v1243
      %1252 = vst [vmem:[#allocation2 + $0x68] sm:$0xff] %v1244
      %1253 = vst [vmem:[#allocation2 + $0x70] sm:$0xff] %v1245
      %v1254 = vld [vmem:[#allocation2] sm:$0xff]
      %v1255 = vld [vmem:[#allocation2 + $0x8] sm:$0xff]
      %v1256 = vld [vmem:[#allocation2 + $0x10] sm:$0xff]
      %v1257 = vld [vmem:[#allocation2 + $0x20] sm:$0xff]
      %v1258 = vld [vmem:[#allocation2 + $0x28] sm:$0xff]
      %v1259 = vld [vmem:[#allocation2 + $0x30] sm:$0xff]
      %v1260 = vld [vmem:[#allocation2 + $0x40] sm:$0xff]
      %v1261 = vld [vmem:[#allocation2 + $0x48] sm:$0xff]
      %v1262 = vld [vmem:[#allocation2 + $0x50] sm:$0xff]
      %v1263 = vld [vmem:[#allocation2 + $0x60] sm:$0xff]
      %v1264 = vld [vmem:[#allocation2 + $0x68] sm:$0xff]
      %v1265 = vld [vmem:[#allocation2 + $0x70] sm:$0xff]
      %1278 = vrot.lane.b32.xlu0 %v1254, 17
      %v1279 = vpop.permute.xlu0 %1278
      %1280 = vrot.lane.b32.xlu0 %v1255, 17
      %v1281 = vpop.permute.xlu0 %1280
      %1282 = vrot.lane.b32.xlu0 %v1256, 17
      %v1283 = vpop.permute.xlu0 %1282
      %1284 = vrot.lane.b32.xlu0 %v1257, 17
      %v1285 = vpop.permute.xlu0 %1284
      %1286 = vrot.lane.b32.xlu0 %v1258, 17
      %v1287 = vpop.permute.xlu0 %1286
      %1288 = vrot.lane.b32.xlu0 %v1259, 17
      %v1289 = vpop.permute.xlu0 %1288
      %1290 = vrot.lane.b32.xlu0 %v1260, 17
      %v1291 = vpop.permute.xlu0 %1290
      %1292 = vrot.lane.b32.xlu0 %v1261, 17
      %v1293 = vpop.permute.xlu0 %1292
      %1294 = vrot.lane.b32.xlu0 %v1262, 17
      %v1295 = vpop.permute.xlu0 %1294
      %1296 = vrot.lane.b32.xlu0 %v1263, 17
      %v1297 = vpop.permute.xlu0 %1296
      %1298 = vrot.lane.b32.xlu0 %v1264, 17
      %v1299 = vpop.permute.xlu0 %1298
      %1300 = vrot.lane.b32.xlu0 %v1265, 17
      %v1301 = vpop.permute.xlu0 %1300
      %v1302 = vsel %vm887, %v1279, %v1281
      %v1303 = vsel %vm887, %v1281, %v1283
      %v1304 = vsel %vm887, %v1285, %v1287
      %v1305 = vsel %vm887, %v1287, %v1289
      %v1306 = vsel %vm887, %v1291, %v1293
      %v1307 = vsel %vm887, %v1293, %v1295
      %v1308 = vsel %vm887, %v1297, %v1299
      %v1309 = vsel %vm887, %v1299, %v1301
      %v1318 = vsel %vm876, %v1302, 0.0
      %v1319 = vsel %vm877, %v1303, 0.0
      %v1320 = vsel %vm876, %v1304, 0.0
      %v1321 = vsel %vm877, %v1305, 0.0
      %v1322 = vsel %vm876, %v1306, 0.0
      %v1323 = vsel %vm877, %v1307, 0.0
      %v1324 = vsel %vm876, %v1308, 0.0
      %v1325 = vsel %vm877, %v1309, 0.0
      %1326 = vrot.lane.b32.xlu0 %v1254, 15
      %v1327 = vpop.permute.xlu0 %1326
      %1328 = vrot.lane.b32.xlu0 %v1255, 15
      %v1329 = vpop.permute.xlu0 %1328
      %1330 = vrot.lane.b32.xlu0 %v1256, 15
      %v1331 = vpop.permute.xlu0 %1330
      %1332 = vrot.lane.b32.xlu0 %v1257, 15
      %v1333 = vpop.permute.xlu0 %1332
      %1334 = vrot.lane.b32.xlu0 %v1258, 15
      %v1335 = vpop.permute.xlu0 %1334
      %1336 = vrot.lane.b32.xlu0 %v1259, 15
      %v1337 = vpop.permute.xlu0 %1336
      %1338 = vrot.lane.b32.xlu0 %v1260, 15
      %v1339 = vpop.permute.xlu0 %1338
      %1340 = vrot.lane.b32.xlu0 %v1261, 15
      %v1341 = vpop.permute.xlu0 %1340
      %1342 = vrot.lane.b32.xlu0 %v1262, 15
      %v1343 = vpop.permute.xlu0 %1342
      %1344 = vrot.lane.b32.xlu0 %v1263, 15
      %v1345 = vpop.permute.xlu0 %1344
      %1346 = vrot.lane.b32.xlu0 %v1264, 15
      %v1347 = vpop.permute.xlu0 %1346
      %1348 = vrot.lane.b32.xlu0 %v1265, 15
      %v1349 = vpop.permute.xlu0 %1348
      %v1350 = vsel %vm904, %v1327, %v1329
      %v1351 = vsel %vm904, %v1329, %v1331
      %v1352 = vsel %vm904, %v1333, %v1335
      %v1353 = vsel %vm904, %v1335, %v1337
      %v1354 = vsel %vm904, %v1339, %v1341
      %v1355 = vsel %vm904, %v1341, %v1343
      %v1356 = vsel %vm904, %v1345, %v1347
      %v1357 = vsel %vm904, %v1347, %v1349
      %v1366 = vsel %vm896, %v1350, 0.0
      %v1367 = vsel %vm897, %v1351, 0.0
      %v1368 = vsel %vm896, %v1352, 0.0
      %v1369 = vsel %vm897, %v1353, 0.0
      %v1370 = vsel %vm896, %v1354, 0.0
      %v1371 = vsel %vm897, %v1355, 0.0
      %v1372 = vsel %vm896, %v1356, 0.0
      %v1373 = vsel %vm897, %v1357, 0.0
      %1374 = vrot.lane.b32.xlu0 %v1254, 1
      %v1375 = vpop.permute.xlu0 %1374
      %1376 = vrot.lane.b32.xlu0 %v1255, 1
      %v1377 = vpop.permute.xlu0 %1376
      %1378 = vrot.lane.b32.xlu0 %v1256, 1
      %v1379 = vpop.permute.xlu0 %1378
      %1380 = vrot.lane.b32.xlu0 %v1257, 1
      %v1381 = vpop.permute.xlu0 %1380
      %1382 = vrot.lane.b32.xlu0 %v1258, 1
      %v1383 = vpop.permute.xlu0 %1382
      %1384 = vrot.lane.b32.xlu0 %v1259, 1
      %v1385 = vpop.permute.xlu0 %1384
      %1386 = vrot.lane.b32.xlu0 %v1260, 1
      %v1387 = vpop.permute.xlu0 %1386
      %1388 = vrot.lane.b32.xlu0 %v1261, 1
      %v1389 = vpop.permute.xlu0 %1388
      %1390 = vrot.lane.b32.xlu0 %v1262, 1
      %v1391 = vpop.permute.xlu0 %1390
      %1392 = vrot.lane.b32.xlu0 %v1263, 1
      %v1393 = vpop.permute.xlu0 %1392
      %1394 = vrot.lane.b32.xlu0 %v1264, 1
      %v1395 = vpop.permute.xlu0 %1394
      %1396 = vrot.lane.b32.xlu0 %v1265, 1
      %v1397 = vpop.permute.xlu0 %1396
      %v1398 = vsel %vm917, %v1375, %v1377
      %v1399 = vsel %vm917, %v1377, %v1379
      %v1400 = vsel %vm917, %v1381, %v1383
      %v1401 = vsel %vm917, %v1383, %v1385
      %v1402 = vsel %vm917, %v1387, %v1389
      %v1403 = vsel %vm917, %v1389, %v1391
      %v1404 = vsel %vm917, %v1393, %v1395
      %v1405 = vsel %vm917, %v1395, %v1397
      %v1414 = vsel %vm876, %v1398, 0.0
      %v1415 = vsel %vm877, %v1399, 0.0
      %v1416 = vsel %vm876, %v1400, 0.0
      %v1417 = vsel %vm877, %v1401, 0.0
      %v1418 = vsel %vm876, %v1402, 0.0
      %v1419 = vsel %vm877, %v1403, 0.0
      %v1420 = vsel %vm876, %v1404, 0.0
      %v1421 = vsel %vm877, %v1405, 0.0
      %v1422 = vld [vmem:[#allocation2 + $0x8] sm:$0xff]
      %v1423 = vld [vmem:[#allocation2 + $0x10] sm:$0xff]
      %v1424 = vld [vmem:[#allocation2 + $0x18] sm:$0xff]
      %v1425 = vld [vmem:[#allocation2 + $0x28] sm:$0xff]
      %v1426 = vld [vmem:[#allocation2 + $0x30] sm:$0xff]
      %v1427 = vld [vmem:[#allocation2 + $0x38] sm:$0xff]
      %v1428 = vld [vmem:[#allocation2 + $0x48] sm:$0xff]
      %v1429 = vld [vmem:[#allocation2 + $0x50] sm:$0xff]
      %v1430 = vld [vmem:[#allocation2 + $0x58] sm:$0xff]
      %v1431 = vld [vmem:[#allocation2 + $0x68] sm:$0xff]
      %v1432 = vld [vmem:[#allocation2 + $0x70] sm:$0xff]
      %v1433 = vld [vmem:[#allocation2 + $0x78] sm:$0xff]
      %1446 = vrot.lane.b32.xlu0 %v1422, 127
      %v1447 = vpop.permute.xlu0 %1446
      %1448 = vrot.lane.b32.xlu0 %v1423, 127
      %v1449 = vpop.permute.xlu0 %1448
      %1450 = vrot.lane.b32.xlu0 %v1424, 127
      %v1451 = vpop.permute.xlu0 %1450
      %1452 = vrot.lane.b32.xlu0 %v1425, 127
      %v1453 = vpop.permute.xlu0 %1452
      %1454 = vrot.lane.b32.xlu0 %v1426, 127
      %v1455 = vpop.permute.xlu0 %1454
      %1456 = vrot.lane.b32.xlu0 %v1427, 127
      %v1457 = vpop.permute.xlu0 %1456
      %1458 = vrot.lane.b32.xlu0 %v1428, 127
      %v1459 = vpop.permute.xlu0 %1458
      %1460 = vrot.lane.b32.xlu0 %v1429, 127
      %v1461 = vpop.permute.xlu0 %1460
      %1462 = vrot.lane.b32.xlu0 %v1430, 127
      %v1463 = vpop.permute.xlu0 %1462
      %1464 = vrot.lane.b32.xlu0 %v1431, 127
      %v1465 = vpop.permute.xlu0 %1464
      %1466 = vrot.lane.b32.xlu0 %v1432, 127
      %v1467 = vpop.permute.xlu0 %1466
      %1468 = vrot.lane.b32.xlu0 %v1433, 127
      %v1469 = vpop.permute.xlu0 %1468
      %v1470 = vsel %vm932, %v1447, %v1449
      %v1471 = vsel %vm932, %v1449, %v1451
      %v1472 = vsel %vm932, %v1453, %v1455
      %v1473 = vsel %vm932, %v1455, %v1457
      %v1474 = vsel %vm932, %v1459, %v1461
      %v1475 = vsel %vm932, %v1461, %v1463
      %v1476 = vsel %vm932, %v1465, %v1467
      %v1477 = vsel %vm932, %v1467, %v1469
      %v1486 = vsel %vm896, %v1470, 0.0
      %v1487 = vsel %vm897, %v1471, 0.0
      %v1488 = vsel %vm896, %v1472, 0.0
      %v1489 = vsel %vm897, %v1473, 0.0
      %v1490 = vsel %vm896, %v1474, 0.0
      %v1491 = vsel %vm897, %v1475, 0.0
      %v1492 = vsel %vm896, %v1476, 0.0
      %v1493 = vsel %vm897, %v1477, 0.0
      %1494 = vrot.lane.b32.xlu0 %v1422, 113
      %v1495 = vpop.permute.xlu0 %1494
      %1496 = vrot.lane.b32.xlu0 %v1423, 113
      %v1497 = vpop.permute.xlu0 %1496
      %1498 = vrot.lane.b32.xlu0 %v1424, 113
      %v1499 = vpop.permute.xlu0 %1498
      %1500 = vrot.lane.b32.xlu0 %v1425, 113
      %v1501 = vpop.permute.xlu0 %1500
      %1502 = vrot.lane.b32.xlu0 %v1426, 113
      %v1503 = vpop.permute.xlu0 %1502
      %1504 = vrot.lane.b32.xlu0 %v1427, 113
      %v1505 = vpop.permute.xlu0 %1504
      %1506 = vrot.lane.b32.xlu0 %v1428, 113
      %v1507 = vpop.permute.xlu0 %1506
      %1508 = vrot.lane.b32.xlu0 %v1429, 113
      %v1509 = vpop.permute.xlu0 %1508
      %1510 = vrot.lane.b32.xlu0 %v1430, 113
      %v1511 = vpop.permute.xlu0 %1510
      %1512 = vrot.lane.b32.xlu0 %v1431, 113
      %v1513 = vpop.permute.xlu0 %1512
      %1514 = vrot.lane.b32.xlu0 %v1432, 113
      %v1515 = vpop.permute.xlu0 %1514
      %1516 = vrot.lane.b32.xlu0 %v1433, 113
      %v1517 = vpop.permute.xlu0 %1516
      %v1518 = vsel %vm945, %v1495, %v1497
      %v1519 = vsel %vm945, %v1497, %v1499
      %v1520 = vsel %vm945, %v1501, %v1503
      %v1521 = vsel %vm945, %v1503, %v1505
      %v1522 = vsel %vm945, %v1507, %v1509
      %v1523 = vsel %vm945, %v1509, %v1511
      %v1524 = vsel %vm945, %v1513, %v1515
      %v1525 = vsel %vm945, %v1515, %v1517
      %v1534 = vsel %vm876, %v1518, 0.0
      %v1535 = vsel %vm877, %v1519, 0.0
      %v1536 = vsel %vm876, %v1520, 0.0
      %v1537 = vsel %vm877, %v1521, 0.0
      %v1538 = vsel %vm876, %v1522, 0.0
      %v1539 = vsel %vm877, %v1523, 0.0
      %v1540 = vsel %vm876, %v1524, 0.0
      %v1541 = vsel %vm877, %v1525, 0.0
      %1542 = vrot.lane.b32.xlu0 %v1422, 111
      %v1543 = vpop.permute.xlu0 %1542
      %1544 = vrot.lane.b32.xlu0 %v1423, 111
      %v1545 = vpop.permute.xlu0 %1544
      %1546 = vrot.lane.b32.xlu0 %v1424, 111
      %v1547 = vpop.permute.xlu0 %1546
      %1548 = vrot.lane.b32.xlu0 %v1425, 111
      %v1549 = vpop.permute.xlu0 %1548
      %1550 = vrot.lane.b32.xlu0 %v1426, 111
      %v1551 = vpop.permute.xlu0 %1550
      %1552 = vrot.lane.b32.xlu0 %v1427, 111
      %v1553 = vpop.permute.xlu0 %1552
      %1554 = vrot.lane.b32.xlu0 %v1428, 111
      %v1555 = vpop.permute.xlu0 %1554
      %1556 = vrot.lane.b32.xlu0 %v1429, 111
      %v1557 = vpop.permute.xlu0 %1556
      %1558 = vrot.lane.b32.xlu0 %v1430, 111
      %v1559 = vpop.permute.xlu0 %1558
      %1560 = vrot.lane.b32.xlu0 %v1431, 111
      %v1561 = vpop.permute.xlu0 %1560
      %1562 = vrot.lane.b32.xlu0 %v1432, 111
      %v1563 = vpop.permute.xlu0 %1562
      %1564 = vrot.lane.b32.xlu0 %v1433, 111
      %v1565 = vpop.permute.xlu0 %1564
      %v1566 = vsel %vm958, %v1543, %v1545
      %v1567 = vsel %vm958, %v1545, %v1547
      %v1568 = vsel %vm958, %v1549, %v1551
      %v1569 = vsel %vm958, %v1551, %v1553
      %v1570 = vsel %vm958, %v1555, %v1557
      %v1571 = vsel %vm958, %v1557, %v1559
      %v1572 = vsel %vm958, %v1561, %v1563
      %v1573 = vsel %vm958, %v1563, %v1565
      %v1582 = vsel %vm896, %v1566, 0.0
      %v1583 = vsel %vm897, %v1567, 0.0
      %v1584 = vsel %vm896, %v1568, 0.0
      %v1585 = vsel %vm897, %v1569, 0.0
      %v1586 = vsel %vm896, %v1570, 0.0
      %v1587 = vsel %vm897, %v1571, 0.0
      %v1588 = vsel %vm896, %v1572, 0.0
      %v1589 = vsel %vm897, %v1573, 0.0
      %1590 = vrot.lane.b32.xlu0 %v1254, 16
      %v1591 = vpop.permute.xlu0 %1590
      %1592 = vrot.lane.b32.xlu0 %v1255, 16
      %v1593 = vpop.permute.xlu0 %1592
      %1594 = vrot.lane.b32.xlu0 %v1256, 16
      %v1595 = vpop.permute.xlu0 %1594
      %1596 = vrot.lane.b32.xlu0 %v1257, 16
      %v1597 = vpop.permute.xlu0 %1596
      %1598 = vrot.lane.b32.xlu0 %v1258, 16
      %v1599 = vpop.permute.xlu0 %1598
      %1600 = vrot.lane.b32.xlu0 %v1259, 16
      %v1601 = vpop.permute.xlu0 %1600
      %1602 = vrot.lane.b32.xlu0 %v1260, 16
      %v1603 = vpop.permute.xlu0 %1602
      %1604 = vrot.lane.b32.xlu0 %v1261, 16
      %v1605 = vpop.permute.xlu0 %1604
      %1606 = vrot.lane.b32.xlu0 %v1262, 16
      %v1607 = vpop.permute.xlu0 %1606
      %1608 = vrot.lane.b32.xlu0 %v1263, 16
      %v1609 = vpop.permute.xlu0 %1608
      %1610 = vrot.lane.b32.xlu0 %v1264, 16
      %v1611 = vpop.permute.xlu0 %1610
      %1612 = vrot.lane.b32.xlu0 %v1265, 16
      %v1613 = vpop.permute.xlu0 %1612
      %v1614 = vsel %vm971, %v1591, %v1593
      %v1615 = vsel %vm971, %v1593, %v1595
      %v1616 = vsel %vm971, %v1597, %v1599
      %v1617 = vsel %vm971, %v1599, %v1601
      %v1618 = vsel %vm971, %v1603, %v1605
      %v1619 = vsel %vm971, %v1605, %v1607
      %v1620 = vsel %vm971, %v1609, %v1611
      %v1621 = vsel %vm971, %v1611, %v1613
      %1630 = vrot.lane.b32.xlu0 %v1422, 112
      %v1631 = vpop.permute.xlu0 %1630
      %1632 = vrot.lane.b32.xlu0 %v1423, 112
      %v1633 = vpop.permute.xlu0 %1632
      %1634 = vrot.lane.b32.xlu0 %v1424, 112
      %v1635 = vpop.permute.xlu0 %1634
      %1636 = vrot.lane.b32.xlu0 %v1425, 112
      %v1637 = vpop.permute.xlu0 %1636
      %1638 = vrot.lane.b32.xlu0 %v1426, 112
      %v1639 = vpop.permute.xlu0 %1638
      %1640 = vrot.lane.b32.xlu0 %v1427, 112
      %v1641 = vpop.permute.xlu0 %1640
      %1642 = vrot.lane.b32.xlu0 %v1428, 112
      %v1643 = vpop.permute.xlu0 %1642
      %1644 = vrot.lane.b32.xlu0 %v1429, 112
      %v1645 = vpop.permute.xlu0 %1644
      %1646 = vrot.lane.b32.xlu0 %v1430, 112
      %v1647 = vpop.permute.xlu0 %1646
      %1648 = vrot.lane.b32.xlu0 %v1431, 112
      %v1649 = vpop.permute.xlu0 %1648
      %1650 = vrot.lane.b32.xlu0 %v1432, 112
      %v1651 = vpop.permute.xlu0 %1650
      %1652 = vrot.lane.b32.xlu0 %v1433, 112
      %v1653 = vpop.permute.xlu0 %1652
      %v1654 = vsel %vm982, %v1631, %v1633
      %v1655 = vsel %vm982, %v1633, %v1635
      %v1656 = vsel %vm982, %v1637, %v1639
      %v1657 = vsel %vm982, %v1639, %v1641
      %v1658 = vsel %vm982, %v1643, %v1645
      %v1659 = vsel %vm982, %v1645, %v1647
      %v1660 = vsel %vm982, %v1649, %v1651
      %v1661 = vsel %vm982, %v1651, %v1653
      %v1670 = vld [vmem:[%s13] sm:$0xff]
      %v1671 = vld [vmem:[%s13 + $0x8] sm:$0xff]
      %v1672 = vld [vmem:[%s13 + $0x10] sm:$0xff]
      %v1673 = vld [vmem:[%s13 + $0x18] sm:$0xff]
      %v1674 = vld [vmem:[%s13 + $0x20] sm:$0xff]
      %v1675 = vld [vmem:[%s13 + $0x28] sm:$0xff]
      %v1676 = vld [vmem:[%s13 + $0x30] sm:$0xff]
      %v1677 = vld [vmem:[%s13 + $0x38] sm:$0xff]
      %v1678 = vld [vmem:[%s13 + $0x40] sm:$0xff]
      %v1679 = vld [vmem:[%s13 + $0x48] sm:$0xff]
      %v1680 = vld [vmem:[%s13 + $0x50] sm:$0xff]
      %v1681 = vld [vmem:[%s13 + $0x58] sm:$0xff]
      %v1682 = vld [vmem:[%s14] sm:$0xff]
      %v1683 = vld [vmem:[%s14 + $0x8] sm:$0xff]
      %v1684 = vld [vmem:[%s14 + $0x10] sm:$0xff]
      %v1685 = vld [vmem:[%s14 + $0x18] sm:$0xff]
      %1687 = vset.pattern.permute.xlu0 0
      %1688 = vperm.xlu0 %1687, %v1682
      %v1689 = vpop.permute.xlu0 %1688
      %1692 = vset.pattern.permute.xlu0 0
      %1693 = vperm.xlu0 %1692, %v1683
      %v1694 = vpop.permute.xlu0 %1693
      %1697 = vset.pattern.permute.xlu0 0
      %1698 = vperm.xlu0 %1697, %v1684
      %v1699 = vpop.permute.xlu0 %1698
      %1702 = vset.pattern.permute.xlu0 0
      %1703 = vperm.xlu0 %1702, %v1685
      %v1704 = vpop.permute.xlu0 %1703
      %v1707 = vsel %vm696, %v1672, 0
      %v1710 = vsel %vm696, %v1675, 0
      %v1713 = vsel %vm696, %v1678, 0
      %v1716 = vsel %vm696, %v1681, 0
      %1718 = vmatpush.msra.mxu0 %v1420
      %1719 = vmatpush.msra.mxu0 %v1418
      %1720 = vmatpush.msra.mxu0 %v1416
      %1721 = vmatpush.msra.mxu0 %v1414
      %1722 = vmatpush.msra.mxu0 %v1372
      %1723 = vmatpush.msra.mxu0 %v1370
      %1724 = vmatpush.msra.mxu0 %v1368
      %1725 = vmatpush.msra.mxu0 %v1366
      %1726 = vmatpush.msra.mxu0 %v1620
      %1727 = vmatpush.msra.mxu0 %v1618
      %1728 = vmatpush.msra.mxu0 %v1616
      %1729 = vmatpush.msra.mxu0 %v1614
      %1730 = vmatpush.msra.mxu0 %v1324
      %1731 = vmatpush.msra.mxu0 %v1322
      %1732 = vmatpush.msra.mxu0 %v1320
      %1733 = vmatpush.msra.mxu0 %v1318
      %1734 = vmatmul.f32.gmra.mxu0 %v1670
      %v1735 = vpop.f32.mrf.mxu0
      %v1736 = vadd.f32 %v1689, %v1735
      %1737 = vmatmul.f32.gmra.mxu0 %v1673
      %v1738 = vpop.f32.mrf.mxu0
      %v1739 = vadd.f32 %v1694, %v1738
      %1740 = vmatmul.f32.gmra.mxu0 %v1676
      %v1741 = vpop.f32.mrf.mxu0
      %v1742 = vadd.f32 %v1699, %v1741
      %1743 = vmatmul.f32.gmra.mxu0 %v1679
      %v1744 = vpop.f32.mrf.mxu0
      %v1745 = vadd.f32 %v1704, %v1744
      %1746 = vdwg.mxu0
      %1747 = vmatpush.msra.mxu0 %v1660
      %1748 = vmatpush.msra.mxu0 %v1658
      %1749 = vmatpush.msra.mxu0 %v1656
      %1750 = vmatpush.msra.mxu0 %v1654
      %1751 = vmatpush.msra.mxu0 %v1540
      %1752 = vmatpush.msra.mxu0 %v1538
      %1753 = vmatpush.msra.mxu0 %v1536
      %1754 = vmatpush.msra.mxu0 %v1534
      %1755 = vmatpush.msra.mxu0 %v1492
      %1756 = vmatpush.msra.mxu0 %v1490
      %1757 = vmatpush.msra.mxu0 %v1488
      %1758 = vmatpush.msra.mxu0 %v1486
      %1759 = vmatpush.msra.mxu0 %v1264
      %1760 = vmatpush.msra.mxu0 %v1261
      %1761 = vmatpush.msra.mxu0 %v1258
      %1762 = vmatpush.msra.mxu0 %v1255
      %1763 = vmatmul.f32.gmra.mxu0 %v1671
      %v1764 = vpop.f32.mrf.mxu0
      %v1765 = vadd.f32 %v1736, %v1764
      %1766 = vmatmul.f32.gmra.mxu0 %v1674
      %v1767 = vpop.f32.mrf.mxu0
      %v1768 = vadd.f32 %v1739, %v1767
      %1769 = vmatmul.f32.gmra.mxu0 %v1677
      %v1770 = vpop.f32.mrf.mxu0
      %v1771 = vadd.f32 %v1742, %v1770
      %1772 = vmatmul.f32.gmra.mxu0 %v1680
      %v1773 = vpop.f32.mrf.mxu0
      %v1774 = vadd.f32 %v1745, %v1773
      %1775 = vdwg.mxu0
      %1776 = vmatpush.msra.mxu0 0.0
      %1777 = vmatpush.msra.mxu0 0.0
      %1778 = vmatpush.msra.mxu0 0.0
      %1779 = vmatpush.msra.mxu0 0.0
      %1780 = vmatpush.msra.mxu0 0.0
      %1781 = vmatpush.msra.mxu0 0.0
      %1782 = vmatpush.msra.mxu0 0.0
      %1783 = vmatpush.msra.mxu0 0.0
      %1784 = vmatpush.msra.mxu0 0.0
      %1785 = vmatpush.msra.mxu0 0.0
      %1786 = vmatpush.msra.mxu0 0.0
      %1787 = vmatpush.msra.mxu0 0.0
      %1788 = vmatpush.msra.mxu0 %v1588
      %1789 = vmatpush.msra.mxu0 %v1586
      %1790 = vmatpush.msra.mxu0 %v1584
      %1791 = vmatpush.msra.mxu0 %v1582
      %1792 = vmatmul.f32.gmra.mxu0 %v1707
      %v1793 = vpop.f32.mrf.mxu0
      %v1794 = vadd.f32 %v1765, %v1793
      %1795 = vmatmul.f32.gmra.mxu0 %v1710
      %v1796 = vpop.f32.mrf.mxu0
      %v1797 = vadd.f32 %v1768, %v1796
      %1798 = vmatmul.f32.gmra.mxu0 %v1713
      %v1799 = vpop.f32.mrf.mxu0
      %v1800 = vadd.f32 %v1771, %v1799
      %1801 = vmatmul.f32.gmra.mxu0 %v1716
      %v1802 = vpop.f32.mrf.mxu0
      %v1803 = vadd.f32 %v1774, %v1802
      %1804 = vdwg.mxu0
      %1805 = vmatpush.msra.mxu0 %v1421
      %1806 = vmatpush.msra.mxu0 %v1419
      %1807 = vmatpush.msra.mxu0 %v1417
      %1808 = vmatpush.msra.mxu0 %v1415
      %1809 = vmatpush.msra.mxu0 %v1373
      %1810 = vmatpush.msra.mxu0 %v1371
      %1811 = vmatpush.msra.mxu0 %v1369
      %1812 = vmatpush.msra.mxu0 %v1367
      %1813 = vmatpush.msra.mxu0 %v1621
      %1814 = vmatpush.msra.mxu0 %v1619
      %1815 = vmatpush.msra.mxu0 %v1617
      %1816 = vmatpush.msra.mxu0 %v1615
      %1817 = vmatpush.msra.mxu0 %v1325
      %1818 = vmatpush.msra.mxu0 %v1323
      %1819 = vmatpush.msra.mxu0 %v1321
      %1820 = vmatpush.msra.mxu0 %v1319
      %1821 = vmatmul.f32.gmra.mxu0 %v1670
      %v1822 = vpop.f32.mrf.mxu0
      %v1823 = vadd.f32 %v1689, %v1822
      %1824 = vmatmul.f32.gmra.mxu0 %v1673
      %v1825 = vpop.f32.mrf.mxu0
      %v1826 = vadd.f32 %v1694, %v1825
      %1827 = vmatmul.f32.gmra.mxu0 %v1676
      %v1828 = vpop.f32.mrf.mxu0
      %v1829 = vadd.f32 %v1699, %v1828
      %1830 = vmatmul.f32.gmra.mxu0 %v1679
      %v1831 = vpop.f32.mrf.mxu0
      %v1832 = vadd.f32 %v1704, %v1831
      %1833 = vdwg.mxu0
      %1834 = vmatpush.msra.mxu0 %v1661
      %1835 = vmatpush.msra.mxu0 %v1659
      %1836 = vmatpush.msra.mxu0 %v1657
      %1837 = vmatpush.msra.mxu0 %v1655
      %1838 = vmatpush.msra.mxu0 %v1541
      %1839 = vmatpush.msra.mxu0 %v1539
      %1840 = vmatpush.msra.mxu0 %v1537
      %1841 = vmatpush.msra.mxu0 %v1535
      %1842 = vmatpush.msra.mxu0 %v1493
      %1843 = vmatpush.msra.mxu0 %v1491
      %1844 = vmatpush.msra.mxu0 %v1489
      %1845 = vmatpush.msra.mxu0 %v1487
      %1846 = vmatpush.msra.mxu0 %v1265
      %1847 = vmatpush.msra.mxu0 %v1262
      %1848 = vmatpush.msra.mxu0 %v1259
      %1849 = vmatpush.msra.mxu0 %v1256
      %1850 = vmatmul.f32.gmra.mxu0 %v1671
      %v1851 = vpop.f32.mrf.mxu0
      %v1852 = vadd.f32 %v1823, %v1851
      %1853 = vmatmul.f32.gmra.mxu0 %v1674
      %v1854 = vpop.f32.mrf.mxu0
      %v1855 = vadd.f32 %v1826, %v1854
      %1856 = vmatmul.f32.gmra.mxu0 %v1677
      %v1857 = vpop.f32.mrf.mxu0
      %v1858 = vadd.f32 %v1829, %v1857
      %1859 = vmatmul.f32.gmra.mxu0 %v1680
      %v1860 = vpop.f32.mrf.mxu0
      %v1861 = vadd.f32 %v1832, %v1860
      %1862 = vdwg.mxu0
      %1863 = vmatpush.msra.mxu0 0.0
      %1864 = vmatpush.msra.mxu0 0.0
      %1865 = vmatpush.msra.mxu0 0.0
      %1866 = vmatpush.msra.mxu0 0.0
      %1867 = vmatpush.msra.mxu0 0.0
      %1868 = vmatpush.msra.mxu0 0.0
      %1869 = vmatpush.msra.mxu0 0.0
      %1870 = vmatpush.msra.mxu0 0.0
      %1871 = vmatpush.msra.mxu0 0.0
      %1872 = vmatpush.msra.mxu0 0.0
      %1873 = vmatpush.msra.mxu0 0.0
      %1874 = vmatpush.msra.mxu0 0.0
      %1875 = vmatpush.msra.mxu0 %v1589
      %1876 = vmatpush.msra.mxu0 %v1587
      %1877 = vmatpush.msra.mxu0 %v1585
      %1878 = vmatpush.msra.mxu0 %v1583
      %1879 = vmatmul.f32.gmra.mxu0 %v1707
      %v1880 = vpop.f32.mrf.mxu0
      %v1881 = vadd.f32 %v1852, %v1880
      %1882 = vmatmul.f32.gmra.mxu0 %v1710
      %v1883 = vpop.f32.mrf.mxu0
      %v1884 = vadd.f32 %v1855, %v1883
      %1885 = vmatmul.f32.gmra.mxu0 %v1713
      %v1886 = vpop.f32.mrf.mxu0
      %v1887 = vadd.f32 %v1858, %v1886
      %1888 = vmatmul.f32.gmra.mxu0 %v1716
      %v1889 = vpop.f32.mrf.mxu0
      %v1890 = vadd.f32 %v1861, %v1889
      %1891 = vdwg.mxu0
      %1893 = vset.pattern.permute.xlu0 0
      %1894 = vperm.xlu0 %1893, %v865
      %v1895 = vpop.permute.xlu0 %1894
      %1898 = vset.pattern.permute.xlu0 0
      %1899 = vperm.xlu0 %1898, %v866
      %v1900 = vpop.permute.xlu0 %1899
      %1903 = vset.pattern.permute.xlu0 0
      %1904 = vperm.xlu0 %1903, %v867
      %v1905 = vpop.permute.xlu0 %1904
      %1908 = vset.pattern.permute.xlu0 0
      %1909 = vperm.xlu0 %1908, %v868
      %v1910 = vpop.permute.xlu0 %1909
      %v1912 = vadd.f32 %v1794, %v1895
      %v1913 = vadd.f32 %v1881, %v1895
      %v1914 = vadd.f32 %v1797, %v1900
      %v1915 = vadd.f32 %v1884, %v1900
      %v1916 = vadd.f32 %v1800, %v1905
      %v1917 = vadd.f32 %v1887, %v1905
      %v1918 = vadd.f32 %v1803, %v1910
      %v1919 = vadd.f32 %v1890, %v1910
      %v1920 = vxor.u32 %v1912, 2147483648
      %v1921 = vxor.u32 %v1913, 2147483648
      %v1922 = vxor.u32 %v1914, 2147483648
      %v1923 = vxor.u32 %v1915, 2147483648
      %v1924 = vxor.u32 %v1916, 2147483648
      %v1925 = vxor.u32 %v1917, 2147483648
      %v1926 = vxor.u32 %v1918, 2147483648
      %v1927 = vxor.u32 %v1919, 2147483648
      %v1928 = vmul.f32 %v1920, 1.442695
      %v1929 = vpow.pop %v1928
      %v1930 = vmul.f32 %v1921, 1.442695
      %v1931 = vpow.pop %v1930
      %v1932 = vmul.f32 %v1922, 1.442695
      %v1933 = vpow.pop %v1932
      %v1934 = vmul.f32 %v1923, 1.442695
      %v1935 = vpow.pop %v1934
      %v1936 = vmul.f32 %v1924, 1.442695
      %v1937 = vpow.pop %v1936
      %v1938 = vmul.f32 %v1925, 1.442695
      %v1939 = vpow.pop %v1938
      %v1940 = vmul.f32 %v1926, 1.442695
      %v1941 = vpow.pop %v1940
      %v1942 = vmul.f32 %v1927, 1.442695
      %v1943 = vpow.pop %v1942
      %v1944 = vadd.f32 %v1929, 1.0
      %v1945 = vadd.f32 %v1931, 1.0
      %v1946 = vadd.f32 %v1933, 1.0
      %v1947 = vadd.f32 %v1935, 1.0
      %v1948 = vadd.f32 %v1937, 1.0
      %v1949 = vadd.f32 %v1939, 1.0
      %v1950 = vadd.f32 %v1941, 1.0
      %v1951 = vadd.f32 %v1943, 1.0
      %v1952 = vrcp.pop %v1944
      %v1953 = vmul.f32 %v1944, %v1952
      %v1954 = vsub.f32 1.0, %v1953
      %v1955 = vmul.f32 %v1952, %v1954
      %v1956 = vadd.f32 %v1952, %v1955
      %vm1957 = vweird.f32 %v1944
      %vm1958 = vweird.f32 %v1952
      %vm1959 = vmor %vm1957, %vm1958
      %v1960 = vsel %vm1959, %v1952, %v1956
      %v1961 = vand.u32 2147483647, %v1944
      %vm1962 = vcmp.eq.f32.partialorder %v1961, 8.507059e+37
      %v1963 = vand.u32 %v1944, 2147483648
      %v1964 = vor.u32 1.1754944e-38, %v1963
      %v1965 = vsel %vm1962, %v1964, %v1960
      %v1966 = vmul.f32 1.0, %v1965
      %v1967 = vrcp.pop %v1945
      %v1968 = vmul.f32 %v1945, %v1967
      %v1969 = vsub.f32 1.0, %v1968
      %v1970 = vmul.f32 %v1967, %v1969
      %v1971 = vadd.f32 %v1967, %v1970
      %vm1972 = vweird.f32 %v1945
      %vm1973 = vweird.f32 %v1967
      %vm1974 = vmor %vm1972, %vm1973
      %v1975 = vsel %vm1974, %v1967, %v1971
      %v1976 = vand.u32 2147483647, %v1945
      %vm1977 = vcmp.eq.f32.partialorder %v1976, 8.507059e+37
      %v1978 = vand.u32 %v1945, 2147483648
      %v1979 = vor.u32 1.1754944e-38, %v1978
      %v1980 = vsel %vm1977, %v1979, %v1975
      %v1981 = vmul.f32 1.0, %v1980
      %v1982 = vrcp.pop %v1946
      %v1983 = vmul.f32 %v1946, %v1982
      %v1984 = vsub.f32 1.0, %v1983
      %v1985 = vmul.f32 %v1982, %v1984
      %v1986 = vadd.f32 %v1982, %v1985
      %vm1987 = vweird.f32 %v1946
      %vm1988 = vweird.f32 %v1982
      %vm1989 = vmor %vm1987, %vm1988
      %v1990 = vsel %vm1989, %v1982, %v1986
      %v1991 = vand.u32 2147483647, %v1946
      %vm1992 = vcmp.eq.f32.partialorder %v1991, 8.507059e+37
      %v1993 = vand.u32 %v1946, 2147483648
      %v1994 = vor.u32 1.1754944e-38, %v1993
      %v1995 = vsel %vm1992, %v1994, %v1990
      %v1996 = vmul.f32 1.0, %v1995
      %v1997 = vrcp.pop %v1947
      %v1998 = vmul.f32 %v1947, %v1997
      %v1999 = vsub.f32 1.0, %v1998
      %v2000 = vmul.f32 %v1997, %v1999
      %v2001 = vadd.f32 %v1997, %v2000
      %vm2002 = vweird.f32 %v1947
      %vm2003 = vweird.f32 %v1997
      %vm2004 = vmor %vm2002, %vm2003
      %v2005 = vsel %vm2004, %v1997, %v2001
      %v2006 = vand.u32 2147483647, %v1947
      %vm2007 = vcmp.eq.f32.partialorder %v2006, 8.507059e+37
      %v2008 = vand.u32 %v1947, 2147483648
      %v2009 = vor.u32 1.1754944e-38, %v2008
      %v2010 = vsel %vm2007, %v2009, %v2005
      %v2011 = vmul.f32 1.0, %v2010
      %v2012 = vrcp.pop %v1948
      %v2013 = vmul.f32 %v1948, %v2012
      %v2014 = vsub.f32 1.0, %v2013
      %v2015 = vmul.f32 %v2012, %v2014
      %v2016 = vadd.f32 %v2012, %v2015
      %vm2017 = vweird.f32 %v1948
      %vm2018 = vweird.f32 %v2012
      %vm2019 = vmor %vm2017, %vm2018
      %v2020 = vsel %vm2019, %v2012, %v2016
      %v2021 = vand.u32 2147483647, %v1948
      %vm2022 = vcmp.eq.f32.partialorder %v2021, 8.507059e+37
      %v2023 = vand.u32 %v1948, 2147483648
      %v2024 = vor.u32 1.1754944e-38, %v2023
      %v2025 = vsel %vm2022, %v2024, %v2020
      %v2026 = vmul.f32 1.0, %v2025
      %v2027 = vrcp.pop %v1949
      %v2028 = vmul.f32 %v1949, %v2027
      %v2029 = vsub.f32 1.0, %v2028
      %v2030 = vmul.f32 %v2027, %v2029
      %v2031 = vadd.f32 %v2027, %v2030
      %vm2032 = vweird.f32 %v1949
      %vm2033 = vweird.f32 %v2027
      %vm2034 = vmor %vm2032, %vm2033
      %v2035 = vsel %vm2034, %v2027, %v2031
      %v2036 = vand.u32 2147483647, %v1949
      %vm2037 = vcmp.eq.f32.partialorder %v2036, 8.507059e+37
      %v2038 = vand.u32 %v1949, 2147483648
      %v2039 = vor.u32 1.1754944e-38, %v2038
      %v2040 = vsel %vm2037, %v2039, %v2035
      %v2041 = vmul.f32 1.0, %v2040
      %v2042 = vrcp.pop %v1950
      %v2043 = vmul.f32 %v1950, %v2042
      %v2044 = vsub.f32 1.0, %v2043
      %v2045 = vmul.f32 %v2042, %v2044
      %v2046 = vadd.f32 %v2042, %v2045
      %vm2047 = vweird.f32 %v1950
      %vm2048 = vweird.f32 %v2042
      %vm2049 = vmor %vm2047, %vm2048
      %v2050 = vsel %vm2049, %v2042, %v2046
      %v2051 = vand.u32 2147483647, %v1950
      %vm2052 = vcmp.eq.f32.partialorder %v2051, 8.507059e+37
      %v2053 = vand.u32 %v1950, 2147483648
      %v2054 = vor.u32 1.1754944e-38, %v2053
      %v2055 = vsel %vm2052, %v2054, %v2050
      %v2056 = vmul.f32 1.0, %v2055
      %v2057 = vrcp.pop %v1951
      %v2058 = vmul.f32 %v1951, %v2057
      %v2059 = vsub.f32 1.0, %v2058
      %v2060 = vmul.f32 %v2057, %v2059
      %v2061 = vadd.f32 %v2057, %v2060
      %vm2062 = vweird.f32 %v1951
      %vm2063 = vweird.f32 %v2057
      %vm2064 = vmor %vm2062, %vm2063
      %v2065 = vsel %vm2064, %v2057, %v2061
      %v2066 = vand.u32 2147483647, %v1951
      %vm2067 = vcmp.eq.f32.partialorder %v2066, 8.507059e+37
      %v2068 = vand.u32 %v1951, 2147483648
      %v2069 = vor.u32 1.1754944e-38, %v2068
      %v2070 = vsel %vm2067, %v2069, %v2065
      %v2071 = vmul.f32 1.0, %v2070
      %v2072 = vmul.f32 %v1912, %v1966
      %v2073 = vmul.f32 %v1913, %v1981
      %v2074 = vmul.f32 %v1914, %v1996
      %v2075 = vmul.f32 %v1915, %v2011
      %v2076 = vmul.f32 %v1916, %v2026
      %v2077 = vmul.f32 %v1917, %v2041
      %v2078 = vmul.f32 %v1918, %v2056
      %v2079 = vmul.f32 %v1919, %v2071
      %2080 = vst [vmem:[#allocation2 + $0x8] sm:$0xff] %v2072
      %2081 = vst [vmem:[#allocation2 + $0x10] sm:$0xff] %v2073
      %2082 = vst [vmem:[#allocation2 + $0x28] sm:$0xff] %v2074
      %2083 = vst [vmem:[#allocation2 + $0x30] sm:$0xff] %v2075
      %2084 = vst [vmem:[#allocation2 + $0x48] sm:$0xff] %v2076
      %2085 = vst [vmem:[#allocation2 + $0x50] sm:$0xff] %v2077
      %2086 = vst [vmem:[#allocation2 + $0x68] sm:$0xff] %v2078
      %2087 = vst [vmem:[#allocation2 + $0x70] sm:$0xff] %v2079
      %v2088 = vld [vmem:[#allocation2] sm:$0xff]
      %v2089 = vld [vmem:[#allocation2 + $0x8] sm:$0xff]
      %v2090 = vld [vmem:[#allocation2 + $0x10] sm:$0xff]
      %v2091 = vld [vmem:[#allocation2 + $0x20] sm:$0xff]
      %v2092 = vld [vmem:[#allocation2 + $0x28] sm:$0xff]
      %v2093 = vld [vmem:[#allocation2 + $0x30] sm:$0xff]
      %v2094 = vld [vmem:[#allocation2 + $0x40] sm:$0xff]
      %v2095 = vld [vmem:[#allocation2 + $0x48] sm:$0xff]
      %v2096 = vld [vmem:[#allocation2 + $0x50] sm:$0xff]
      %v2097 = vld [vmem:[#allocation2 + $0x60] sm:$0xff]
      %v2098 = vld [vmem:[#allocation2 + $0x68] sm:$0xff]
      %v2099 = vld [vmem:[#allocation2 + $0x70] sm:$0xff]
      %2112 = vrot.lane.b32.xlu0 %v2088, 17
      %v2113 = vpop.permute.xlu0 %2112
      %2114 = vrot.lane.b32.xlu0 %v2089, 17
      %v2115 = vpop.permute.xlu0 %2114
      %2116 = vrot.lane.b32.xlu0 %v2090, 17
      %v2117 = vpop.permute.xlu0 %2116
      %2118 = vrot.lane.b32.xlu0 %v2091, 17
      %v2119 = vpop.permute.xlu0 %2118
      %2120 = vrot.lane.b32.xlu0 %v2092, 17
      %v2121 = vpop.permute.xlu0 %2120
      %2122 = vrot.lane.b32.xlu0 %v2093, 17
      %v2123 = vpop.permute.xlu0 %2122
      %2124 = vrot.lane.b32.xlu0 %v2094, 17
      %v2125 = vpop.permute.xlu0 %2124
      %2126 = vrot.lane.b32.xlu0 %v2095, 17
      %v2127 = vpop.permute.xlu0 %2126
      %2128 = vrot.lane.b32.xlu0 %v2096, 17
      %v2129 = vpop.permute.xlu0 %2128
      %2130 = vrot.lane.b32.xlu0 %v2097, 17
      %v2131 = vpop.permute.xlu0 %2130
      %2132 = vrot.lane.b32.xlu0 %v2098, 17
      %v2133 = vpop.permute.xlu0 %2132
      %2134 = vrot.lane.b32.xlu0 %v2099, 17
      %v2135 = vpop.permute.xlu0 %2134
      %v2136 = vsel %vm887, %v2113, %v2115
      %v2137 = vsel %vm887, %v2115, %v2117
      %v2138 = vsel %vm887, %v2119, %v2121
      %v2139 = vsel %vm887, %v2121, %v2123
      %v2140 = vsel %vm887, %v2125, %v2127
      %v2141 = vsel %vm887, %v2127, %v2129
      %v2142 = vsel %vm887, %v2131, %v2133
      %v2143 = vsel %vm887, %v2133, %v2135
      %v2152 = vsel %vm876, %v2136, 0.0
      %v2153 = vsel %vm877, %v2137, 0.0
      %v2154 = vsel %vm876, %v2138, 0.0
      %v2155 = vsel %vm877, %v2139, 0.0
      %v2156 = vsel %vm876, %v2140, 0.0
      %v2157 = vsel %vm877, %v2141, 0.0
      %v2158 = vsel %vm876, %v2142, 0.0
      %v2159 = vsel %vm877, %v2143, 0.0
      %2160 = vrot.lane.b32.xlu0 %v2088, 15
      %v2161 = vpop.permute.xlu0 %2160
      %2162 = vrot.lane.b32.xlu0 %v2089, 15
      %v2163 = vpop.permute.xlu0 %2162
      %2164 = vrot.lane.b32.xlu0 %v2090, 15
      %v2165 = vpop.permute.xlu0 %2164
      %2166 = vrot.lane.b32.xlu0 %v2091, 15
      %v2167 = vpop.permute.xlu0 %2166
      %2168 = vrot.lane.b32.xlu0 %v2092, 15
      %v2169 = vpop.permute.xlu0 %2168
      %2170 = vrot.lane.b32.xlu0 %v2093, 15
      %v2171 = vpop.permute.xlu0 %2170
      %2172 = vrot.lane.b32.xlu0 %v2094, 15
      %v2173 = vpop.permute.xlu0 %2172
      %2174 = vrot.lane.b32.xlu0 %v2095, 15
      %v2175 = vpop.permute.xlu0 %2174
      %2176 = vrot.lane.b32.xlu0 %v2096, 15
      %v2177 = vpop.permute.xlu0 %2176
      %2178 = vrot.lane.b32.xlu0 %v2097, 15
      %v2179 = vpop.permute.xlu0 %2178
      %2180 = vrot.lane.b32.xlu0 %v2098, 15
      %v2181 = vpop.permute.xlu0 %2180
      %2182 = vrot.lane.b32.xlu0 %v2099, 15
      %v2183 = vpop.permute.xlu0 %2182
      %v2184 = vsel %vm904, %v2161, %v2163
      %v2185 = vsel %vm904, %v2163, %v2165
      %v2186 = vsel %vm904, %v2167, %v2169
      %v2187 = vsel %vm904, %v2169, %v2171
      %v2188 = vsel %vm904, %v2173, %v2175
      %v2189 = vsel %vm904, %v2175, %v2177
      %v2190 = vsel %vm904, %v2179, %v2181
      %v2191 = vsel %vm904, %v2181, %v2183
      %v2200 = vsel %vm896, %v2184, 0.0
      %v2201 = vsel %vm897, %v2185, 0.0
      %v2202 = vsel %vm896, %v2186, 0.0
      %v2203 = vsel %vm897, %v2187, 0.0
      %v2204 = vsel %vm896, %v2188, 0.0
      %v2205 = vsel %vm897, %v2189, 0.0
      %v2206 = vsel %vm896, %v2190, 0.0
      %v2207 = vsel %vm897, %v2191, 0.0
      %2208 = vrot.lane.b32.xlu0 %v2088, 1
      %v2209 = vpop.permute.xlu0 %2208
      %2210 = vrot.lane.b32.xlu0 %v2089, 1
      %v2211 = vpop.permute.xlu0 %2210
      %2212 = vrot.lane.b32.xlu0 %v2090, 1
      %v2213 = vpop.permute.xlu0 %2212
      %2214 = vrot.lane.b32.xlu0 %v2091, 1
      %v2215 = vpop.permute.xlu0 %2214
      %2216 = vrot.lane.b32.xlu0 %v2092, 1
      %v2217 = vpop.permute.xlu0 %2216
      %2218 = vrot.lane.b32.xlu0 %v2093, 1
      %v2219 = vpop.permute.xlu0 %2218
      %2220 = vrot.lane.b32.xlu0 %v2094, 1
      %v2221 = vpop.permute.xlu0 %2220
      %2222 = vrot.lane.b32.xlu0 %v2095, 1
      %v2223 = vpop.permute.xlu0 %2222
      %2224 = vrot.lane.b32.xlu0 %v2096, 1
      %v2225 = vpop.permute.xlu0 %2224
      %2226 = vrot.lane.b32.xlu0 %v2097, 1
      %v2227 = vpop.permute.xlu0 %2226
      %2228 = vrot.lane.b32.xlu0 %v2098, 1
      %v2229 = vpop.permute.xlu0 %2228
      %2230 = vrot.lane.b32.xlu0 %v2099, 1
      %v2231 = vpop.permute.xlu0 %2230
      %v2232 = vsel %vm917, %v2209, %v2211
      %v2233 = vsel %vm917, %v2211, %v2213
      %v2234 = vsel %vm917, %v2215, %v2217
      %v2235 = vsel %vm917, %v2217, %v2219
      %v2236 = vsel %vm917, %v2221, %v2223
      %v2237 = vsel %vm917, %v2223, %v2225
      %v2238 = vsel %vm917, %v2227, %v2229
      %v2239 = vsel %vm917, %v2229, %v2231
      %v2248 = vsel %vm876, %v2232, 0.0
      %v2249 = vsel %vm877, %v2233, 0.0
      %v2250 = vsel %vm876, %v2234, 0.0
      %v2251 = vsel %vm877, %v2235, 0.0
      %v2252 = vsel %vm876, %v2236, 0.0
      %v2253 = vsel %vm877, %v2237, 0.0
      %v2254 = vsel %vm876, %v2238, 0.0
      %v2255 = vsel %vm877, %v2239, 0.0
      %v2256 = vld [vmem:[#allocation2 + $0x8] sm:$0xff]
      %v2257 = vld [vmem:[#allocation2 + $0x10] sm:$0xff]
      %v2258 = vld [vmem:[#allocation2 + $0x18] sm:$0xff]
      %v2259 = vld [vmem:[#allocation2 + $0x28] sm:$0xff]
      %v2260 = vld [vmem:[#allocation2 + $0x30] sm:$0xff]
      %v2261 = vld [vmem:[#allocation2 + $0x38] sm:$0xff]
      %v2262 = vld [vmem:[#allocation2 + $0x48] sm:$0xff]
      %v2263 = vld [vmem:[#allocation2 + $0x50] sm:$0xff]
      %v2264 = vld [vmem:[#allocation2 + $0x58] sm:$0xff]
      %v2265 = vld [vmem:[#allocation2 + $0x68] sm:$0xff]
      %v2266 = vld [vmem:[#allocation2 + $0x70] sm:$0xff]
      %v2267 = vld [vmem:[#allocation2 + $0x78] sm:$0xff]
      %2280 = vrot.lane.b32.xlu0 %v2256, 127
      %v2281 = vpop.permute.xlu0 %2280
      %2282 = vrot.lane.b32.xlu0 %v2257, 127
      %v2283 = vpop.permute.xlu0 %2282
      %2284 = vrot.lane.b32.xlu0 %v2258, 127
      %v2285 = vpop.permute.xlu0 %2284
      %2286 = vrot.lane.b32.xlu0 %v2259, 127
      %v2287 = vpop.permute.xlu0 %2286
      %2288 = vrot.lane.b32.xlu0 %v2260, 127
      %v2289 = vpop.permute.xlu0 %2288
      %2290 = vrot.lane.b32.xlu0 %v2261, 127
      %v2291 = vpop.permute.xlu0 %2290
      %2292 = vrot.lane.b32.xlu0 %v2262, 127
      %v2293 = vpop.permute.xlu0 %2292
      %2294 = vrot.lane.b32.xlu0 %v2263, 127
      %v2295 = vpop.permute.xlu0 %2294
      %2296 = vrot.lane.b32.xlu0 %v2264, 127
      %v2297 = vpop.permute.xlu0 %2296
      %2298 = vrot.lane.b32.xlu0 %v2265, 127
      %v2299 = vpop.permute.xlu0 %2298
      %2300 = vrot.lane.b32.xlu0 %v2266, 127
      %v2301 = vpop.permute.xlu0 %2300
      %2302 = vrot.lane.b32.xlu0 %v2267, 127
      %v2303 = vpop.permute.xlu0 %2302
      %v2304 = vsel %vm932, %v2281, %v2283
      %v2305 = vsel %vm932, %v2283, %v2285
      %v2306 = vsel %vm932, %v2287, %v2289
      %v2307 = vsel %vm932, %v2289, %v2291
      %v2308 = vsel %vm932, %v2293, %v2295
      %v2309 = vsel %vm932, %v2295, %v2297
      %v2310 = vsel %vm932, %v2299, %v2301
      %v2311 = vsel %vm932, %v2301, %v2303
      %v2320 = vsel %vm896, %v2304, 0.0
      %v2321 = vsel %vm897, %v2305, 0.0
      %v2322 = vsel %vm896, %v2306, 0.0
      %v2323 = vsel %vm897, %v2307, 0.0
      %v2324 = vsel %vm896, %v2308, 0.0
      %v2325 = vsel %vm897, %v2309, 0.0
      %v2326 = vsel %vm896, %v2310, 0.0
      %v2327 = vsel %vm897, %v2311, 0.0
      %2328 = vrot.lane.b32.xlu0 %v2256, 113
      %v2329 = vpop.permute.xlu0 %2328
      %2330 = vrot.lane.b32.xlu0 %v2257, 113
      %v2331 = vpop.permute.xlu0 %2330
      %2332 = vrot.lane.b32.xlu0 %v2258, 113
      %v2333 = vpop.permute.xlu0 %2332
      %2334 = vrot.lane.b32.xlu0 %v2259, 113
      %v2335 = vpop.permute.xlu0 %2334
      %2336 = vrot.lane.b32.xlu0 %v2260, 113
      %v2337 = vpop.permute.xlu0 %2336
      %2338 = vrot.lane.b32.xlu0 %v2261, 113
      %v2339 = vpop.permute.xlu0 %2338
      %2340 = vrot.lane.b32.xlu0 %v2262, 113
      %v2341 = vpop.permute.xlu0 %2340
      %2342 = vrot.lane.b32.xlu0 %v2263, 113
      %v2343 = vpop.permute.xlu0 %2342
      %2344 = vrot.lane.b32.xlu0 %v2264, 113
      %v2345 = vpop.permute.xlu0 %2344
      %2346 = vrot.lane.b32.xlu0 %v2265, 113
      %v2347 = vpop.permute.xlu0 %2346
      %2348 = vrot.lane.b32.xlu0 %v2266, 113
      %v2349 = vpop.permute.xlu0 %2348
      %2350 = vrot.lane.b32.xlu0 %v2267, 113
      %v2351 = vpop.permute.xlu0 %2350
      %v2352 = vsel %vm945, %v2329, %v2331
      %v2353 = vsel %vm945, %v2331, %v2333
      %v2354 = vsel %vm945, %v2335, %v2337
      %v2355 = vsel %vm945, %v2337, %v2339
      %v2356 = vsel %vm945, %v2341, %v2343
      %v2357 = vsel %vm945, %v2343, %v2345
      %v2358 = vsel %vm945, %v2347, %v2349
      %v2359 = vsel %vm945, %v2349, %v2351
      %v2368 = vsel %vm876, %v2352, 0.0
      %v2369 = vsel %vm877, %v2353, 0.0
      %v2370 = vsel %vm876, %v2354, 0.0
      %v2371 = vsel %vm877, %v2355, 0.0
      %v2372 = vsel %vm876, %v2356, 0.0
      %v2373 = vsel %vm877, %v2357, 0.0
      %v2374 = vsel %vm876, %v2358, 0.0
      %v2375 = vsel %vm877, %v2359, 0.0
      %2376 = vrot.lane.b32.xlu0 %v2256, 111
      %v2377 = vpop.permute.xlu0 %2376
      %2378 = vrot.lane.b32.xlu0 %v2257, 111
      %v2379 = vpop.permute.xlu0 %2378
      %2380 = vrot.lane.b32.xlu0 %v2258, 111
      %v2381 = vpop.permute.xlu0 %2380
      %2382 = vrot.lane.b32.xlu0 %v2259, 111
      %v2383 = vpop.permute.xlu0 %2382
      %2384 = vrot.lane.b32.xlu0 %v2260, 111
      %v2385 = vpop.permute.xlu0 %2384
      %2386 = vrot.lane.b32.xlu0 %v2261, 111
      %v2387 = vpop.permute.xlu0 %2386
      %2388 = vrot.lane.b32.xlu0 %v2262, 111
      %v2389 = vpop.permute.xlu0 %2388
      %2390 = vrot.lane.b32.xlu0 %v2263, 111
      %v2391 = vpop.permute.xlu0 %2390
      %2392 = vrot.lane.b32.xlu0 %v2264, 111
      %v2393 = vpop.permute.xlu0 %2392
      %2394 = vrot.lane.b32.xlu0 %v2265, 111
      %v2395 = vpop.permute.xlu0 %2394
      %2396 = vrot.lane.b32.xlu0 %v2266, 111
      %v2397 = vpop.permute.xlu0 %2396
      %2398 = vrot.lane.b32.xlu0 %v2267, 111
      %v2399 = vpop.permute.xlu0 %2398
      %v2400 = vsel %vm958, %v2377, %v2379
      %v2401 = vsel %vm958, %v2379, %v2381
      %v2402 = vsel %vm958, %v2383, %v2385
      %v2403 = vsel %vm958, %v2385, %v2387
      %v2404 = vsel %vm958, %v2389, %v2391
      %v2405 = vsel %vm958, %v2391, %v2393
      %v2406 = vsel %vm958, %v2395, %v2397
      %v2407 = vsel %vm958, %v2397, %v2399
      %v2416 = vsel %vm896, %v2400, 0.0
      %v2417 = vsel %vm897, %v2401, 0.0
      %v2418 = vsel %vm896, %v2402, 0.0
      %v2419 = vsel %vm897, %v2403, 0.0
      %v2420 = vsel %vm896, %v2404, 0.0
      %v2421 = vsel %vm897, %v2405, 0.0
      %v2422 = vsel %vm896, %v2406, 0.0
      %v2423 = vsel %vm897, %v2407, 0.0
      %2424 = vrot.lane.b32.xlu0 %v2088, 16
      %v2425 = vpop.permute.xlu0 %2424
      %2426 = vrot.lane.b32.xlu0 %v2089, 16
      %v2427 = vpop.permute.xlu0 %2426
      %2428 = vrot.lane.b32.xlu0 %v2090, 16
      %v2429 = vpop.permute.xlu0 %2428
      %2430 = vrot.lane.b32.xlu0 %v2091, 16
      %v2431 = vpop.permute.xlu0 %2430
      %2432 = vrot.lane.b32.xlu0 %v2092, 16
      %v2433 = vpop.permute.xlu0 %2432
      %2434 = vrot.lane.b32.xlu0 %v2093, 16
      %v2435 = vpop.permute.xlu0 %2434
      %2436 = vrot.lane.b32.xlu0 %v2094, 16
      %v2437 = vpop.permute.xlu0 %2436
      %2438 = vrot.lane.b32.xlu0 %v2095, 16
      %v2439 = vpop.permute.xlu0 %2438
      %2440 = vrot.lane.b32.xlu0 %v2096, 16
      %v2441 = vpop.permute.xlu0 %2440
      %2442 = vrot.lane.b32.xlu0 %v2097, 16
      %v2443 = vpop.permute.xlu0 %2442
      %2444 = vrot.lane.b32.xlu0 %v2098, 16
      %v2445 = vpop.permute.xlu0 %2444
      %2446 = vrot.lane.b32.xlu0 %v2099, 16
      %v2447 = vpop.permute.xlu0 %2446
      %v2448 = vsel %vm971, %v2425, %v2427
      %v2449 = vsel %vm971, %v2427, %v2429
      %v2450 = vsel %vm971, %v2431, %v2433
      %v2451 = vsel %vm971, %v2433, %v2435
      %v2452 = vsel %vm971, %v2437, %v2439
      %v2453 = vsel %vm971, %v2439, %v2441
      %v2454 = vsel %vm971, %v2443, %v2445
      %v2455 = vsel %vm971, %v2445, %v2447
      %2464 = vrot.lane.b32.xlu0 %v2256, 112
      %v2465 = vpop.permute.xlu0 %2464
      %2466 = vrot.lane.b32.xlu0 %v2257, 112
      %v2467 = vpop.permute.xlu0 %2466
      %2468 = vrot.lane.b32.xlu0 %v2258, 112
      %v2469 = vpop.permute.xlu0 %2468
      %2470 = vrot.lane.b32.xlu0 %v2259, 112
      %v2471 = vpop.permute.xlu0 %2470
      %2472 = vrot.lane.b32.xlu0 %v2260, 112
      %v2473 = vpop.permute.xlu0 %2472
      %2474 = vrot.lane.b32.xlu0 %v2261, 112
      %v2475 = vpop.permute.xlu0 %2474
      %2476 = vrot.lane.b32.xlu0 %v2262, 112
      %v2477 = vpop.permute.xlu0 %2476
      %2478 = vrot.lane.b32.xlu0 %v2263, 112
      %v2479 = vpop.permute.xlu0 %2478
      %2480 = vrot.lane.b32.xlu0 %v2264, 112
      %v2481 = vpop.permute.xlu0 %2480
      %2482 = vrot.lane.b32.xlu0 %v2265, 112
      %v2483 = vpop.permute.xlu0 %2482
      %2484 = vrot.lane.b32.xlu0 %v2266, 112
      %v2485 = vpop.permute.xlu0 %2484
      %2486 = vrot.lane.b32.xlu0 %v2267, 112
      %v2487 = vpop.permute.xlu0 %2486
      %v2488 = vsel %vm982, %v2465, %v2467
      %v2489 = vsel %vm982, %v2467, %v2469
      %v2490 = vsel %vm982, %v2471, %v2473
      %v2491 = vsel %vm982, %v2473, %v2475
      %v2492 = vsel %vm982, %v2477, %v2479
      %v2493 = vsel %vm982, %v2479, %v2481
      %v2494 = vsel %vm982, %v2483, %v2485
      %v2495 = vsel %vm982, %v2485, %v2487
      %v2504 = vld [vmem:[%s15] sm:$0xff]
      %v2505 = vld [vmem:[%s15 + $0x8] sm:$0xff]
      %v2506 = vld [vmem:[%s15 + $0x10] sm:$0xff]
      %v2507 = vld [vmem:[%s15 + $0x18] sm:$0xff]
      %v2508 = vld [vmem:[%s15 + $0x20] sm:$0xff]
      %v2509 = vld [vmem:[%s15 + $0x28] sm:$0xff]
      %v2510 = vld [vmem:[%s15 + $0x30] sm:$0xff]
      %v2511 = vld [vmem:[%s15 + $0x38] sm:$0xff]
      %v2512 = vld [vmem:[%s15 + $0x40] sm:$0xff]
      %v2513 = vld [vmem:[%s15 + $0x48] sm:$0xff]
      %v2514 = vld [vmem:[%s15 + $0x50] sm:$0xff]
      %v2515 = vld [vmem:[%s15 + $0x58] sm:$0xff]
      %v2516 = vld [vmem:[%s16] sm:$0xff]
      %v2517 = vld [vmem:[%s16 + $0x8] sm:$0xff]
      %v2518 = vld [vmem:[%s16 + $0x10] sm:$0xff]
      %v2519 = vld [vmem:[%s16 + $0x18] sm:$0xff]
      %2521 = vset.pattern.permute.xlu0 0
      %2522 = vperm.xlu0 %2521, %v2516
      %v2523 = vpop.permute.xlu0 %2522
      %2526 = vset.pattern.permute.xlu0 0
      %2527 = vperm.xlu0 %2526, %v2517
      %v2528 = vpop.permute.xlu0 %2527
      %2531 = vset.pattern.permute.xlu0 0
      %2532 = vperm.xlu0 %2531, %v2518
      %v2533 = vpop.permute.xlu0 %2532
      %2536 = vset.pattern.permute.xlu0 0
      %2537 = vperm.xlu0 %2536, %v2519
      %v2538 = vpop.permute.xlu0 %2537
      %v2541 = vsel %vm696, %v2506, 0
      %v2544 = vsel %vm696, %v2509, 0
      %v2547 = vsel %vm696, %v2512, 0
      %v2550 = vsel %vm696, %v2515, 0
      %2552 = vmatpush.msra.mxu0 %v2254
      %2553 = vmatpush.msra.mxu0 %v2252
      %2554 = vmatpush.msra.mxu0 %v2250
      %2555 = vmatpush.msra.mxu0 %v2248
      %2556 = vmatpush.msra.mxu0 %v2206
      %2557 = vmatpush.msra.mxu0 %v2204
      %2558 = vmatpush.msra.mxu0 %v2202
      %2559 = vmatpush.msra.mxu0 %v2200
      %2560 = vmatpush.msra.mxu0 %v2454
      %2561 = vmatpush.msra.mxu0 %v2452
      %2562 = vmatpush.msra.mxu0 %v2450
      %2563 = vmatpush.msra.mxu0 %v2448
      %2564 = vmatpush.msra.mxu0 %v2158
      %2565 = vmatpush.msra.mxu0 %v2156
      %2566 = vmatpush.msra.mxu0 %v2154
      %2567 = vmatpush.msra.mxu0 %v2152
      %2568 = vmatmul.f32.gmra.mxu0 %v2504
      %v2569 = vpop.f32.mrf.mxu0
      %v2570 = vadd.f32 %v2523, %v2569
      %2571 = vmatmul.f32.gmra.mxu0 %v2507
      %v2572 = vpop.f32.mrf.mxu0
      %v2573 = vadd.f32 %v2528, %v2572
      %2574 = vmatmul.f32.gmra.mxu0 %v2510
      %v2575 = vpop.f32.mrf.mxu0
      %v2576 = vadd.f32 %v2533, %v2575
      %2577 = vmatmul.f32.gmra.mxu0 %v2513
      %v2578 = vpop.f32.mrf.mxu0
      %v2579 = vadd.f32 %v2538, %v2578
      %2580 = vdwg.mxu0
      %2581 = vmatpush.msra.mxu0 %v2494
      %2582 = vmatpush.msra.mxu0 %v2492
      %2583 = vmatpush.msra.mxu0 %v2490
      %2584 = vmatpush.msra.mxu0 %v2488
      %2585 = vmatpush.msra.mxu0 %v2374
      %2586 = vmatpush.msra.mxu0 %v2372
      %2587 = vmatpush.msra.mxu0 %v2370
      %2588 = vmatpush.msra.mxu0 %v2368
      %2589 = vmatpush.msra.mxu0 %v2326
      %2590 = vmatpush.msra.mxu0 %v2324
      %2591 = vmatpush.msra.mxu0 %v2322
      %2592 = vmatpush.msra.mxu0 %v2320
      %2593 = vmatpush.msra.mxu0 %v2098
      %2594 = vmatpush.msra.mxu0 %v2095
      %2595 = vmatpush.msra.mxu0 %v2092
      %2596 = vmatpush.msra.mxu0 %v2089
      %2597 = vmatmul.f32.gmra.mxu0 %v2505
      %v2598 = vpop.f32.mrf.mxu0
      %v2599 = vadd.f32 %v2570, %v2598
      %2600 = vmatmul.f32.gmra.mxu0 %v2508
      %v2601 = vpop.f32.mrf.mxu0
      %v2602 = vadd.f32 %v2573, %v2601
      %2603 = vmatmul.f32.gmra.mxu0 %v2511
      %v2604 = vpop.f32.mrf.mxu0
      %v2605 = vadd.f32 %v2576, %v2604
      %2606 = vmatmul.f32.gmra.mxu0 %v2514
      %v2607 = vpop.f32.mrf.mxu0
      %v2608 = vadd.f32 %v2579, %v2607
      %2609 = vdwg.mxu0
      %2610 = vmatpush.msra.mxu0 0.0
      %2611 = vmatpush.msra.mxu0 0.0
      %2612 = vmatpush.msra.mxu0 0.0
      %2613 = vmatpush.msra.mxu0 0.0
      %2614 = vmatpush.msra.mxu0 0.0
      %2615 = vmatpush.msra.mxu0 0.0
      %2616 = vmatpush.msra.mxu0 0.0
      %2617 = vmatpush.msra.mxu0 0.0
      %2618 = vmatpush.msra.mxu0 0.0
      %2619 = vmatpush.msra.mxu0 0.0
      %2620 = vmatpush.msra.mxu0 0.0
      %2621 = vmatpush.msra.mxu0 0.0
      %2622 = vmatpush.msra.mxu0 %v2422
      %2623 = vmatpush.msra.mxu0 %v2420
      %2624 = vmatpush.msra.mxu0 %v2418
      %2625 = vmatpush.msra.mxu0 %v2416
      %2626 = vmatmul.f32.gmra.mxu0 %v2541
      %v2627 = vpop.f32.mrf.mxu0
      %v2628 = vadd.f32 %v2599, %v2627
      %2629 = vmatmul.f32.gmra.mxu0 %v2544
      %v2630 = vpop.f32.mrf.mxu0
      %v2631 = vadd.f32 %v2602, %v2630
      %2632 = vmatmul.f32.gmra.mxu0 %v2547
      %v2633 = vpop.f32.mrf.mxu0
      %v2634 = vadd.f32 %v2605, %v2633
      %2635 = vmatmul.f32.gmra.mxu0 %v2550
      %v2636 = vpop.f32.mrf.mxu0
      %v2637 = vadd.f32 %v2608, %v2636
      %2638 = vdwg.mxu0
      %2639 = vmatpush.msra.mxu0 %v2255
      %2640 = vmatpush.msra.mxu0 %v2253
      %2641 = vmatpush.msra.mxu0 %v2251
      %2642 = vmatpush.msra.mxu0 %v2249
      %2643 = vmatpush.msra.mxu0 %v2207
      %2644 = vmatpush.msra.mxu0 %v2205
      %2645 = vmatpush.msra.mxu0 %v2203
      %2646 = vmatpush.msra.mxu0 %v2201
      %2647 = vmatpush.msra.mxu0 %v2455
      %2648 = vmatpush.msra.mxu0 %v2453
      %2649 = vmatpush.msra.mxu0 %v2451
      %2650 = vmatpush.msra.mxu0 %v2449
      %2651 = vmatpush.msra.mxu0 %v2159
      %2652 = vmatpush.msra.mxu0 %v2157
      %2653 = vmatpush.msra.mxu0 %v2155
      %2654 = vmatpush.msra.mxu0 %v2153
      %2655 = vmatmul.f32.gmra.mxu0 %v2504
      %v2656 = vpop.f32.mrf.mxu0
      %v2657 = vadd.f32 %v2523, %v2656
      %2658 = vmatmul.f32.gmra.mxu0 %v2507
      %v2659 = vpop.f32.mrf.mxu0
      %v2660 = vadd.f32 %v2528, %v2659
      %2661 = vmatmul.f32.gmra.mxu0 %v2510
      %v2662 = vpop.f32.mrf.mxu0
      %v2663 = vadd.f32 %v2533, %v2662
      %2664 = vmatmul.f32.gmra.mxu0 %v2513
      %v2665 = vpop.f32.mrf.mxu0
      %v2666 = vadd.f32 %v2538, %v2665
      %2667 = vdwg.mxu0
      %2668 = vmatpush.msra.mxu0 %v2495
      %2669 = vmatpush.msra.mxu0 %v2493
      %2670 = vmatpush.msra.mxu0 %v2491
      %2671 = vmatpush.msra.mxu0 %v2489
      %2672 = vmatpush.msra.mxu0 %v2375
      %2673 = vmatpush.msra.mxu0 %v2373
      %2674 = vmatpush.msra.mxu0 %v2371
      %2675 = vmatpush.msra.mxu0 %v2369
      %2676 = vmatpush.msra.mxu0 %v2327
      %2677 = vmatpush.msra.mxu0 %v2325
      %2678 = vmatpush.msra.mxu0 %v2323
      %2679 = vmatpush.msra.mxu0 %v2321
      %2680 = vmatpush.msra.mxu0 %v2099
      %2681 = vmatpush.msra.mxu0 %v2096
      %2682 = vmatpush.msra.mxu0 %v2093
      %2683 = vmatpush.msra.mxu0 %v2090
      %2684 = vmatmul.f32.gmra.mxu0 %v2505
      %v2685 = vpop.f32.mrf.mxu0
      %v2686 = vadd.f32 %v2657, %v2685
      %2687 = vmatmul.f32.gmra.mxu0 %v2508
      %v2688 = vpop.f32.mrf.mxu0
      %v2689 = vadd.f32 %v2660, %v2688
      %2690 = vmatmul.f32.gmra.mxu0 %v2511
      %v2691 = vpop.f32.mrf.mxu0
      %v2692 = vadd.f32 %v2663, %v2691
      %2693 = vmatmul.f32.gmra.mxu0 %v2514
      %v2694 = vpop.f32.mrf.mxu0
      %v2695 = vadd.f32 %v2666, %v2694
      %2696 = vdwg.mxu0
      %2697 = vmatpush.msra.mxu0 0.0
      %2698 = vmatpush.msra.mxu0 0.0
      %2699 = vmatpush.msra.mxu0 0.0
      %2700 = vmatpush.msra.mxu0 0.0
      %2701 = vmatpush.msra.mxu0 0.0
      %2702 = vmatpush.msra.mxu0 0.0
      %2703 = vmatpush.msra.mxu0 0.0
      %2704 = vmatpush.msra.mxu0 0.0
      %2705 = vmatpush.msra.mxu0 0.0
      %2706 = vmatpush.msra.mxu0 0.0
      %2707 = vmatpush.msra.mxu0 0.0
      %2708 = vmatpush.msra.mxu0 0.0
      %2709 = vmatpush.msra.mxu0 %v2423
      %2710 = vmatpush.msra.mxu0 %v2421
      %2711 = vmatpush.msra.mxu0 %v2419
      %2712 = vmatpush.msra.mxu0 %v2417
      %2713 = vmatmul.f32.gmra.mxu0 %v2541
      %v2714 = vpop.f32.mrf.mxu0
      %v2715 = vadd.f32 %v2686, %v2714
      %2716 = vmatmul.f32.gmra.mxu0 %v2544
      %v2717 = vpop.f32.mrf.mxu0
      %v2718 = vadd.f32 %v2689, %v2717
      %2719 = vmatmul.f32.gmra.mxu0 %v2547
      %v2720 = vpop.f32.mrf.mxu0
      %v2721 = vadd.f32 %v2692, %v2720
      %2722 = vmatmul.f32.gmra.mxu0 %v2550
      %v2723 = vpop.f32.mrf.mxu0
      %v2724 = vadd.f32 %v2695, %v2723
      %2725 = vdwg.mxu0
      %v2726 = vadd.f32 %v2628, %v1238
      %v2727 = vadd.f32 %v2715, %v1239
      %v2728 = vadd.f32 %v2631, %v1240
      %v2729 = vadd.f32 %v2718, %v1241
      %v2730 = vadd.f32 %v2634, %v1242
      %v2731 = vadd.f32 %v2721, %v1243
      %v2732 = vadd.f32 %v2637, %v1244
      %v2733 = vadd.f32 %v2724, %v1245
      %v2734 = vxor.u32 %v2726, 2147483648
      %v2735 = vxor.u32 %v2727, 2147483648
      %v2736 = vxor.u32 %v2728, 2147483648
      %v2737 = vxor.u32 %v2729, 2147483648
      %v2738 = vxor.u32 %v2730, 2147483648
      %v2739 = vxor.u32 %v2731, 2147483648
      %v2740 = vxor.u32 %v2732, 2147483648
      %v2741 = vxor.u32 %v2733, 2147483648
      %v2742 = vmul.f32 %v2734, 1.442695
      %v2743 = vpow.pop %v2742
      %v2744 = vmul.f32 %v2735, 1.442695
      %v2745 = vpow.pop %v2744
      %v2746 = vmul.f32 %v2736, 1.442695
      %v2747 = vpow.pop %v2746
      %v2748 = vmul.f32 %v2737, 1.442695
      %v2749 = vpow.pop %v2748
      %v2750 = vmul.f32 %v2738, 1.442695
      %v2751 = vpow.pop %v2750
      %v2752 = vmul.f32 %v2739, 1.442695
      %v2753 = vpow.pop %v2752
      %v2754 = vmul.f32 %v2740, 1.442695
      %v2755 = vpow.pop %v2754
      %v2756 = vmul.f32 %v2741, 1.442695
      %v2757 = vpow.pop %v2756
      %v2758 = vadd.f32 %v2743, 1.0
      %v2759 = vadd.f32 %v2745, 1.0
      %v2760 = vadd.f32 %v2747, 1.0
      %v2761 = vadd.f32 %v2749, 1.0
      %v2762 = vadd.f32 %v2751, 1.0
      %v2763 = vadd.f32 %v2753, 1.0
      %v2764 = vadd.f32 %v2755, 1.0
      %v2765 = vadd.f32 %v2757, 1.0
      %v2766 = vrcp.pop %v2758
      %v2767 = vmul.f32 %v2758, %v2766
      %v2768 = vsub.f32 1.0, %v2767
      %v2769 = vmul.f32 %v2766, %v2768
      %v2770 = vadd.f32 %v2766, %v2769
      %vm2771 = vweird.f32 %v2758
      %vm2772 = vweird.f32 %v2766
      %vm2773 = vmor %vm2771, %vm2772
      %v2774 = vsel %vm2773, %v2766, %v2770
      %v2775 = vand.u32 2147483647, %v2758
      %vm2776 = vcmp.eq.f32.partialorder %v2775, 8.507059e+37
      %v2777 = vand.u32 %v2758, 2147483648
      %v2778 = vor.u32 1.1754944e-38, %v2777
      %v2779 = vsel %vm2776, %v2778, %v2774
      %v2780 = vmul.f32 1.0, %v2779
      %v2781 = vrcp.pop %v2759
      %v2782 = vmul.f32 %v2759, %v2781
      %v2783 = vsub.f32 1.0, %v2782
      %v2784 = vmul.f32 %v2781, %v2783
      %v2785 = vadd.f32 %v2781, %v2784
      %vm2786 = vweird.f32 %v2759
      %vm2787 = vweird.f32 %v2781
      %vm2788 = vmor %vm2786, %vm2787
      %v2789 = vsel %vm2788, %v2781, %v2785
      %v2790 = vand.u32 2147483647, %v2759
      %vm2791 = vcmp.eq.f32.partialorder %v2790, 8.507059e+37
      %v2792 = vand.u32 %v2759, 2147483648
      %v2793 = vor.u32 1.1754944e-38, %v2792
      %v2794 = vsel %vm2791, %v2793, %v2789
      %v2795 = vmul.f32 1.0, %v2794
      %v2796 = vrcp.pop %v2760
      %v2797 = vmul.f32 %v2760, %v2796
      %v2798 = vsub.f32 1.0, %v2797
      %v2799 = vmul.f32 %v2796, %v2798
      %v2800 = vadd.f32 %v2796, %v2799
      %vm2801 = vweird.f32 %v2760
      %vm2802 = vweird.f32 %v2796
      %vm2803 = vmor %vm2801, %vm2802
      %v2804 = vsel %vm2803, %v2796, %v2800
      %v2805 = vand.u32 2147483647, %v2760
      %vm2806 = vcmp.eq.f32.partialorder %v2805, 8.507059e+37
      %v2807 = vand.u32 %v2760, 2147483648
      %v2808 = vor.u32 1.1754944e-38, %v2807
      %v2809 = vsel %vm2806, %v2808, %v2804
      %v2810 = vmul.f32 1.0, %v2809
      %v2811 = vrcp.pop %v2761
      %v2812 = vmul.f32 %v2761, %v2811
      %v2813 = vsub.f32 1.0, %v2812
      %v2814 = vmul.f32 %v2811, %v2813
      %v2815 = vadd.f32 %v2811, %v2814
      %vm2816 = vweird.f32 %v2761
      %vm2817 = vweird.f32 %v2811
      %vm2818 = vmor %vm2816, %vm2817
      %v2819 = vsel %vm2818, %v2811, %v2815
      %v2820 = vand.u32 2147483647, %v2761
      %vm2821 = vcmp.eq.f32.partialorder %v2820, 8.507059e+37
      %v2822 = vand.u32 %v2761, 2147483648
      %v2823 = vor.u32 1.1754944e-38, %v2822
      %v2824 = vsel %vm2821, %v2823, %v2819
      %v2825 = vmul.f32 1.0, %v2824
      %v2826 = vrcp.pop %v2762
      %v2827 = vmul.f32 %v2762, %v2826
      %v2828 = vsub.f32 1.0, %v2827
      %v2829 = vmul.f32 %v2826, %v2828
      %v2830 = vadd.f32 %v2826, %v2829
      %vm2831 = vweird.f32 %v2762
      %vm2832 = vweird.f32 %v2826
      %vm2833 = vmor %vm2831, %vm2832
      %v2834 = vsel %vm2833, %v2826, %v2830
      %v2835 = vand.u32 2147483647, %v2762
      %vm2836 = vcmp.eq.f32.partialorder %v2835, 8.507059e+37
      %v2837 = vand.u32 %v2762, 2147483648
      %v2838 = vor.u32 1.1754944e-38, %v2837
      %v2839 = vsel %vm2836, %v2838, %v2834
      %v2840 = vmul.f32 1.0, %v2839
      %v2841 = vrcp.pop %v2763
      %v2842 = vmul.f32 %v2763, %v2841
      %v2843 = vsub.f32 1.0, %v2842
      %v2844 = vmul.f32 %v2841, %v2843
      %v2845 = vadd.f32 %v2841, %v2844
      %vm2846 = vweird.f32 %v2763
      %vm2847 = vweird.f32 %v2841
      %vm2848 = vmor %vm2846, %vm2847
      %v2849 = vsel %vm2848, %v2841, %v2845
      %v2850 = vand.u32 2147483647, %v2763
      %vm2851 = vcmp.eq.f32.partialorder %v2850, 8.507059e+37
      %v2852 = vand.u32 %v2763, 2147483648
      %v2853 = vor.u32 1.1754944e-38, %v2852
      %v2854 = vsel %vm2851, %v2853, %v2849
      %v2855 = vmul.f32 1.0, %v2854
      %v2856 = vrcp.pop %v2764
      %v2857 = vmul.f32 %v2764, %v2856
      %v2858 = vsub.f32 1.0, %v2857
      %v2859 = vmul.f32 %v2856, %v2858
      %v2860 = vadd.f32 %v2856, %v2859
      %vm2861 = vweird.f32 %v2764
      %vm2862 = vweird.f32 %v2856
      %vm2863 = vmor %vm2861, %vm2862
      %v2864 = vsel %vm2863, %v2856, %v2860
      %v2865 = vand.u32 2147483647, %v2764
      %vm2866 = vcmp.eq.f32.partialorder %v2865, 8.507059e+37
      %v2867 = vand.u32 %v2764, 2147483648
      %v2868 = vor.u32 1.1754944e-38, %v2867
      %v2869 = vsel %vm2866, %v2868, %v2864
      %v2870 = vmul.f32 1.0, %v2869
      %v2871 = vrcp.pop %v2765
      %v2872 = vmul.f32 %v2765, %v2871
      %v2873 = vsub.f32 1.0, %v2872
      %v2874 = vmul.f32 %v2871, %v2873
      %v2875 = vadd.f32 %v2871, %v2874
      %vm2876 = vweird.f32 %v2765
      %vm2877 = vweird.f32 %v2871
      %vm2878 = vmor %vm2876, %vm2877
      %v2879 = vsel %vm2878, %v2871, %v2875
      %v2880 = vand.u32 2147483647, %v2765
      %vm2881 = vcmp.eq.f32.partialorder %v2880, 8.507059e+37
      %v2882 = vand.u32 %v2765, 2147483648
      %v2883 = vor.u32 1.1754944e-38, %v2882
      %v2884 = vsel %vm2881, %v2883, %v2879
      %v2885 = vmul.f32 1.0, %v2884
      %v2886 = vmul.f32 %v2726, %v2780
      %v2887 = vmul.f32 %v2727, %v2795
      %v2888 = vmul.f32 %v2728, %v2810
      %v2889 = vmul.f32 %v2729, %v2825
      %v2890 = vmul.f32 %v2730, %v2840
      %v2891 = vmul.f32 %v2731, %v2855
      %v2892 = vmul.f32 %v2732, %v2870
      %v2893 = vmul.f32 %v2733, %v2885
      %2894 = vst [vmem:[#allocation2 + $0x8] sm:$0xff] %v2886
      %2895 = vst [vmem:[#allocation2 + $0x10] sm:$0xff] %v2887
      %2896 = vst [vmem:[#allocation2 + $0x28] sm:$0xff] %v2888
      %2897 = vst [vmem:[#allocation2 + $0x30] sm:$0xff] %v2889
      %2898 = vst [vmem:[#allocation2 + $0x48] sm:$0xff] %v2890
      %2899 = vst [vmem:[#allocation2 + $0x50] sm:$0xff] %v2891
      %2900 = vst [vmem:[#allocation2 + $0x68] sm:$0xff] %v2892
      %2901 = vst [vmem:[#allocation2 + $0x70] sm:$0xff] %v2893
      %v2902 = vld [vmem:[#allocation2] sm:$0xff]
      %v2903 = vld [vmem:[#allocation2 + $0x8] sm:$0xff]
      %v2904 = vld [vmem:[#allocation2 + $0x10] sm:$0xff]
      %v2905 = vld [vmem:[#allocation2 + $0x20] sm:$0xff]
      %v2906 = vld [vmem:[#allocation2 + $0x28] sm:$0xff]
      %v2907 = vld [vmem:[#allocation2 + $0x30] sm:$0xff]
      %v2908 = vld [vmem:[#allocation2 + $0x40] sm:$0xff]
      %v2909 = vld [vmem:[#allocation2 + $0x48] sm:$0xff]
      %v2910 = vld [vmem:[#allocation2 + $0x50] sm:$0xff]
      %v2911 = vld [vmem:[#allocation2 + $0x60] sm:$0xff]
      %v2912 = vld [vmem:[#allocation2 + $0x68] sm:$0xff]
      %v2913 = vld [vmem:[#allocation2 + $0x70] sm:$0xff]
      %2926 = vrot.lane.b32.xlu0 %v2902, 17
      %v2927 = vpop.permute.xlu0 %2926
      %2928 = vrot.lane.b32.xlu0 %v2903, 17
      %v2929 = vpop.permute.xlu0 %2928
      %2930 = vrot.lane.b32.xlu0 %v2904, 17
      %v2931 = vpop.permute.xlu0 %2930
      %2932 = vrot.lane.b32.xlu0 %v2905, 17
      %v2933 = vpop.permute.xlu0 %2932
      %2934 = vrot.lane.b32.xlu0 %v2906, 17
      %v2935 = vpop.permute.xlu0 %2934
      %2936 = vrot.lane.b32.xlu0 %v2907, 17
      %v2937 = vpop.permute.xlu0 %2936
      %2938 = vrot.lane.b32.xlu0 %v2908, 17
      %v2939 = vpop.permute.xlu0 %2938
      %2940 = vrot.lane.b32.xlu0 %v2909, 17
      %v2941 = vpop.permute.xlu0 %2940
      %2942 = vrot.lane.b32.xlu0 %v2910, 17
      %v2943 = vpop.permute.xlu0 %2942
      %2944 = vrot.lane.b32.xlu0 %v2911, 17
      %v2945 = vpop.permute.xlu0 %2944
      %2946 = vrot.lane.b32.xlu0 %v2912, 17
      %v2947 = vpop.permute.xlu0 %2946
      %2948 = vrot.lane.b32.xlu0 %v2913, 17
      %v2949 = vpop.permute.xlu0 %2948
      %v2950 = vsel %vm887, %v2927, %v2929
      %v2951 = vsel %vm887, %v2929, %v2931
      %v2952 = vsel %vm887, %v2933, %v2935
      %v2953 = vsel %vm887, %v2935, %v2937
      %v2954 = vsel %vm887, %v2939, %v2941
      %v2955 = vsel %vm887, %v2941, %v2943
      %v2956 = vsel %vm887, %v2945, %v2947
      %v2957 = vsel %vm887, %v2947, %v2949
      %v2966 = vsel %vm876, %v2950, 0.0
      %v2967 = vsel %vm877, %v2951, 0.0
      %v2968 = vsel %vm876, %v2952, 0.0
      %v2969 = vsel %vm877, %v2953, 0.0
      %v2970 = vsel %vm876, %v2954, 0.0
      %v2971 = vsel %vm877, %v2955, 0.0
      %v2972 = vsel %vm876, %v2956, 0.0
      %v2973 = vsel %vm877, %v2957, 0.0
      %2974 = vrot.lane.b32.xlu0 %v2902, 15
      %v2975 = vpop.permute.xlu0 %2974
      %2976 = vrot.lane.b32.xlu0 %v2903, 15
      %v2977 = vpop.permute.xlu0 %2976
      %2978 = vrot.lane.b32.xlu0 %v2904, 15
      %v2979 = vpop.permute.xlu0 %2978
      %2980 = vrot.lane.b32.xlu0 %v2905, 15
      %v2981 = vpop.permute.xlu0 %2980
      %2982 = vrot.lane.b32.xlu0 %v2906, 15
      %v2983 = vpop.permute.xlu0 %2982
      %2984 = vrot.lane.b32.xlu0 %v2907, 15
      %v2985 = vpop.permute.xlu0 %2984
      %2986 = vrot.lane.b32.xlu0 %v2908, 15
      %v2987 = vpop.permute.xlu0 %2986
      %2988 = vrot.lane.b32.xlu0 %v2909, 15
      %v2989 = vpop.permute.xlu0 %2988
      %2990 = vrot.lane.b32.xlu0 %v2910, 15
      %v2991 = vpop.permute.xlu0 %2990
      %2992 = vrot.lane.b32.xlu0 %v2911, 15
      %v2993 = vpop.permute.xlu0 %2992
      %2994 = vrot.lane.b32.xlu0 %v2912, 15
      %v2995 = vpop.permute.xlu0 %2994
      %2996 = vrot.lane.b32.xlu0 %v2913, 15
      %v2997 = vpop.permute.xlu0 %2996
      %v2998 = vsel %vm904, %v2975, %v2977
      %v2999 = vsel %vm904, %v2977, %v2979
      %v3000 = vsel %vm904, %v2981, %v2983
      %v3001 = vsel %vm904, %v2983, %v2985
      %v3002 = vsel %vm904, %v2987, %v2989
      %v3003 = vsel %vm904, %v2989, %v2991
      %v3004 = vsel %vm904, %v2993, %v2995
      %v3005 = vsel %vm904, %v2995, %v2997
      %v3014 = vsel %vm896, %v2998, 0.0
      %v3015 = vsel %vm897, %v2999, 0.0
      %v3016 = vsel %vm896, %v3000, 0.0
      %v3017 = vsel %vm897, %v3001, 0.0
      %v3018 = vsel %vm896, %v3002, 0.0
      %v3019 = vsel %vm897, %v3003, 0.0
      %v3020 = vsel %vm896, %v3004, 0.0
      %v3021 = vsel %vm897, %v3005, 0.0
      %3022 = vrot.lane.b32.xlu0 %v2902, 1
      %v3023 = vpop.permute.xlu0 %3022
      %3024 = vrot.lane.b32.xlu0 %v2903, 1
      %v3025 = vpop.permute.xlu0 %3024
      %3026 = vrot.lane.b32.xlu0 %v2904, 1
      %v3027 = vpop.permute.xlu0 %3026
      %3028 = vrot.lane.b32.xlu0 %v2905, 1
      %v3029 = vpop.permute.xlu0 %3028
      %3030 = vrot.lane.b32.xlu0 %v2906, 1
      %v3031 = vpop.permute.xlu0 %3030
      %3032 = vrot.lane.b32.xlu0 %v2907, 1
      %v3033 = vpop.permute.xlu0 %3032
      %3034 = vrot.lane.b32.xlu0 %v2908, 1
      %v3035 = vpop.permute.xlu0 %3034
      %3036 = vrot.lane.b32.xlu0 %v2909, 1
      %v3037 = vpop.permute.xlu0 %3036
      %3038 = vrot.lane.b32.xlu0 %v2910, 1
      %v3039 = vpop.permute.xlu0 %3038
      %3040 = vrot.lane.b32.xlu0 %v2911, 1
      %v3041 = vpop.permute.xlu0 %3040
      %3042 = vrot.lane.b32.xlu0 %v2912, 1
      %v3043 = vpop.permute.xlu0 %3042
      %3044 = vrot.lane.b32.xlu0 %v2913, 1
      %v3045 = vpop.permute.xlu0 %3044
      %v3046 = vsel %vm917, %v3023, %v3025
      %v3047 = vsel %vm917, %v3025, %v3027
      %v3048 = vsel %vm917, %v3029, %v3031
      %v3049 = vsel %vm917, %v3031, %v3033
      %v3050 = vsel %vm917, %v3035, %v3037
      %v3051 = vsel %vm917, %v3037, %v3039
      %v3052 = vsel %vm917, %v3041, %v3043
      %v3053 = vsel %vm917, %v3043, %v3045
      %v3062 = vsel %vm876, %v3046, 0.0
      %v3063 = vsel %vm877, %v3047, 0.0
      %v3064 = vsel %vm876, %v3048, 0.0
      %v3065 = vsel %vm877, %v3049, 0.0
      %v3066 = vsel %vm876, %v3050, 0.0
      %v3067 = vsel %vm877, %v3051, 0.0
      %v3068 = vsel %vm876, %v3052, 0.0
      %v3069 = vsel %vm877, %v3053, 0.0
      %v3070 = vld [vmem:[#allocation2 + $0x8] sm:$0xff]
      %v3071 = vld [vmem:[#allocation2 + $0x10] sm:$0xff]
      %v3072 = vld [vmem:[#allocation2 + $0x18] sm:$0xff]
      %v3073 = vld [vmem:[#allocation2 + $0x28] sm:$0xff]
      %v3074 = vld [vmem:[#allocation2 + $0x30] sm:$0xff]
      %v3075 = vld [vmem:[#allocation2 + $0x38] sm:$0xff]
      %v3076 = vld [vmem:[#allocation2 + $0x48] sm:$0xff]
      %v3077 = vld [vmem:[#allocation2 + $0x50] sm:$0xff]
      %v3078 = vld [vmem:[#allocation2 + $0x58] sm:$0xff]
      %v3079 = vld [vmem:[#allocation2 + $0x68] sm:$0xff]
      %v3080 = vld [vmem:[#allocation2 + $0x70] sm:$0xff]
      %v3081 = vld [vmem:[#allocation2 + $0x78] sm:$0xff]
      %3094 = vrot.lane.b32.xlu0 %v3070, 127
      %v3095 = vpop.permute.xlu0 %3094
      %3096 = vrot.lane.b32.xlu0 %v3071, 127
      %v3097 = vpop.permute.xlu0 %3096
      %3098 = vrot.lane.b32.xlu0 %v3072, 127
      %v3099 = vpop.permute.xlu0 %3098
      %3100 = vrot.lane.b32.xlu0 %v3073, 127
      %v3101 = vpop.permute.xlu0 %3100
      %3102 = vrot.lane.b32.xlu0 %v3074, 127
      %v3103 = vpop.permute.xlu0 %3102
      %3104 = vrot.lane.b32.xlu0 %v3075, 127
      %v3105 = vpop.permute.xlu0 %3104
      %3106 = vrot.lane.b32.xlu0 %v3076, 127
      %v3107 = vpop.permute.xlu0 %3106
      %3108 = vrot.lane.b32.xlu0 %v3077, 127
      %v3109 = vpop.permute.xlu0 %3108
      %3110 = vrot.lane.b32.xlu0 %v3078, 127
      %v3111 = vpop.permute.xlu0 %3110
      %3112 = vrot.lane.b32.xlu0 %v3079, 127
      %v3113 = vpop.permute.xlu0 %3112
      %3114 = vrot.lane.b32.xlu0 %v3080, 127
      %v3115 = vpop.permute.xlu0 %3114
      %3116 = vrot.lane.b32.xlu0 %v3081, 127
      %v3117 = vpop.permute.xlu0 %3116
      %v3118 = vsel %vm932, %v3095, %v3097
      %v3119 = vsel %vm932, %v3097, %v3099
      %v3120 = vsel %vm932, %v3101, %v3103
      %v3121 = vsel %vm932, %v3103, %v3105
      %v3122 = vsel %vm932, %v3107, %v3109
      %v3123 = vsel %vm932, %v3109, %v3111
      %v3124 = vsel %vm932, %v3113, %v3115
      %v3125 = vsel %vm932, %v3115, %v3117
      %v3134 = vsel %vm896, %v3118, 0.0
      %v3135 = vsel %vm897, %v3119, 0.0
      %v3136 = vsel %vm896, %v3120, 0.0
      %v3137 = vsel %vm897, %v3121, 0.0
      %v3138 = vsel %vm896, %v3122, 0.0
      %v3139 = vsel %vm897, %v3123, 0.0
      %v3140 = vsel %vm896, %v3124, 0.0
      %v3141 = vsel %vm897, %v3125, 0.0
      %3142 = vrot.lane.b32.xlu0 %v3070, 113
      %v3143 = vpop.permute.xlu0 %3142
      %3144 = vrot.lane.b32.xlu0 %v3071, 113
      %v3145 = vpop.permute.xlu0 %3144
      %3146 = vrot.lane.b32.xlu0 %v3072, 113
      %v3147 = vpop.permute.xlu0 %3146
      %3148 = vrot.lane.b32.xlu0 %v3073, 113
      %v3149 = vpop.permute.xlu0 %3148
      %3150 = vrot.lane.b32.xlu0 %v3074, 113
      %v3151 = vpop.permute.xlu0 %3150
      %3152 = vrot.lane.b32.xlu0 %v3075, 113
      %v3153 = vpop.permute.xlu0 %3152
      %3154 = vrot.lane.b32.xlu0 %v3076, 113
      %v3155 = vpop.permute.xlu0 %3154
      %3156 = vrot.lane.b32.xlu0 %v3077, 113
      %v3157 = vpop.permute.xlu0 %3156
      %3158 = vrot.lane.b32.xlu0 %v3078, 113
      %v3159 = vpop.permute.xlu0 %3158
      %3160 = vrot.lane.b32.xlu0 %v3079, 113
      %v3161 = vpop.permute.xlu0 %3160
      %3162 = vrot.lane.b32.xlu0 %v3080, 113
      %v3163 = vpop.permute.xlu0 %3162
      %3164 = vrot.lane.b32.xlu0 %v3081, 113
      %v3165 = vpop.permute.xlu0 %3164
      %v3166 = vsel %vm945, %v3143, %v3145
      %v3167 = vsel %vm945, %v3145, %v3147
      %v3168 = vsel %vm945, %v3149, %v3151
      %v3169 = vsel %vm945, %v3151, %v3153
      %v3170 = vsel %vm945, %v3155, %v3157
      %v3171 = vsel %vm945, %v3157, %v3159
      %v3172 = vsel %vm945, %v3161, %v3163
      %v3173 = vsel %vm945, %v3163, %v3165
      %v3182 = vsel %vm876, %v3166, 0.0
      %v3183 = vsel %vm877, %v3167, 0.0
      %v3184 = vsel %vm876, %v3168, 0.0
      %v3185 = vsel %vm877, %v3169, 0.0
      %v3186 = vsel %vm876, %v3170, 0.0
      %v3187 = vsel %vm877, %v3171, 0.0
      %v3188 = vsel %vm876, %v3172, 0.0
      %v3189 = vsel %vm877, %v3173, 0.0
      %3190 = vrot.lane.b32.xlu0 %v3070, 111
      %v3191 = vpop.permute.xlu0 %3190
      %3192 = vrot.lane.b32.xlu0 %v3071, 111
      %v3193 = vpop.permute.xlu0 %3192
      %3194 = vrot.lane.b32.xlu0 %v3072, 111
      %v3195 = vpop.permute.xlu0 %3194
      %3196 = vrot.lane.b32.xlu0 %v3073, 111
      %v3197 = vpop.permute.xlu0 %3196
      %3198 = vrot.lane.b32.xlu0 %v3074, 111
      %v3199 = vpop.permute.xlu0 %3198
      %3200 = vrot.lane.b32.xlu0 %v3075, 111
      %v3201 = vpop.permute.xlu0 %3200
      %3202 = vrot.lane.b32.xlu0 %v3076, 111
      %v3203 = vpop.permute.xlu0 %3202
      %3204 = vrot.lane.b32.xlu0 %v3077, 111
      %v3205 = vpop.permute.xlu0 %3204
      %3206 = vrot.lane.b32.xlu0 %v3078, 111
      %v3207 = vpop.permute.xlu0 %3206
      %3208 = vrot.lane.b32.xlu0 %v3079, 111
      %v3209 = vpop.permute.xlu0 %3208
      %3210 = vrot.lane.b32.xlu0 %v3080, 111
      %v3211 = vpop.permute.xlu0 %3210
      %3212 = vrot.lane.b32.xlu0 %v3081, 111
      %v3213 = vpop.permute.xlu0 %3212
      %v3214 = vsel %vm958, %v3191, %v3193
      %v3215 = vsel %vm958, %v3193, %v3195
      %v3216 = vsel %vm958, %v3197, %v3199
      %v3217 = vsel %vm958, %v3199, %v3201
      %v3218 = vsel %vm958, %v3203, %v3205
      %v3219 = vsel %vm958, %v3205, %v3207
      %v3220 = vsel %vm958, %v3209, %v3211
      %v3221 = vsel %vm958, %v3211, %v3213
      %v3230 = vsel %vm896, %v3214, 0.0
      %v3231 = vsel %vm897, %v3215, 0.0
      %v3232 = vsel %vm896, %v3216, 0.0
      %v3233 = vsel %vm897, %v3217, 0.0
      %v3234 = vsel %vm896, %v3218, 0.0
      %v3235 = vsel %vm897, %v3219, 0.0
      %v3236 = vsel %vm896, %v3220, 0.0
      %v3237 = vsel %vm897, %v3221, 0.0
      %3238 = vrot.lane.b32.xlu0 %v2902, 16
      %v3239 = vpop.permute.xlu0 %3238
      %3240 = vrot.lane.b32.xlu0 %v2903, 16
      %v3241 = vpop.permute.xlu0 %3240
      %3242 = vrot.lane.b32.xlu0 %v2904, 16
      %v3243 = vpop.permute.xlu0 %3242
      %3244 = vrot.lane.b32.xlu0 %v2905, 16
      %v3245 = vpop.permute.xlu0 %3244
      %3246 = vrot.lane.b32.xlu0 %v2906, 16
      %v3247 = vpop.permute.xlu0 %3246
      %3248 = vrot.lane.b32.xlu0 %v2907, 16
      %v3249 = vpop.permute.xlu0 %3248
      %3250 = vrot.lane.b32.xlu0 %v2908, 16
      %v3251 = vpop.permute.xlu0 %3250
      %3252 = vrot.lane.b32.xlu0 %v2909, 16
      %v3253 = vpop.permute.xlu0 %3252
      %3254 = vrot.lane.b32.xlu0 %v2910, 16
      %v3255 = vpop.permute.xlu0 %3254
      %3256 = vrot.lane.b32.xlu0 %v2911, 16
      %v3257 = vpop.permute.xlu0 %3256
      %3258 = vrot.lane.b32.xlu0 %v2912, 16
      %v3259 = vpop.permute.xlu0 %3258
      %3260 = vrot.lane.b32.xlu0 %v2913, 16
      %v3261 = vpop.permute.xlu0 %3260
      %v3262 = vsel %vm971, %v3239, %v3241
      %v3263 = vsel %vm971, %v3241, %v3243
      %v3264 = vsel %vm971, %v3245, %v3247
      %v3265 = vsel %vm971, %v3247, %v3249
      %v3266 = vsel %vm971, %v3251, %v3253
      %v3267 = vsel %vm971, %v3253, %v3255
      %v3268 = vsel %vm971, %v3257, %v3259
      %v3269 = vsel %vm971, %v3259, %v3261
      %3278 = vrot.lane.b32.xlu0 %v3070, 112
      %v3279 = vpop.permute.xlu0 %3278
      %3280 = vrot.lane.b32.xlu0 %v3071, 112
      %v3281 = vpop.permute.xlu0 %3280
      %3282 = vrot.lane.b32.xlu0 %v3072, 112
      %v3283 = vpop.permute.xlu0 %3282
      %3284 = vrot.lane.b32.xlu0 %v3073, 112
      %v3285 = vpop.permute.xlu0 %3284
      %3286 = vrot.lane.b32.xlu0 %v3074, 112
      %v3287 = vpop.permute.xlu0 %3286
      %3288 = vrot.lane.b32.xlu0 %v3075, 112
      %v3289 = vpop.permute.xlu0 %3288
      %3290 = vrot.lane.b32.xlu0 %v3076, 112
      %v3291 = vpop.permute.xlu0 %3290
      %3292 = vrot.lane.b32.xlu0 %v3077, 112
      %v3293 = vpop.permute.xlu0 %3292
      %3294 = vrot.lane.b32.xlu0 %v3078, 112
      %v3295 = vpop.permute.xlu0 %3294
      %3296 = vrot.lane.b32.xlu0 %v3079, 112
      %v3297 = vpop.permute.xlu0 %3296
      %3298 = vrot.lane.b32.xlu0 %v3080, 112
      %v3299 = vpop.permute.xlu0 %3298
      %3300 = vrot.lane.b32.xlu0 %v3081, 112
      %v3301 = vpop.permute.xlu0 %3300
      %v3302 = vsel %vm982, %v3279, %v3281
      %v3303 = vsel %vm982, %v3281, %v3283
      %v3304 = vsel %vm982, %v3285, %v3287
      %v3305 = vsel %vm982, %v3287, %v3289
      %v3306 = vsel %vm982, %v3291, %v3293
      %v3307 = vsel %vm982, %v3293, %v3295
      %v3308 = vsel %vm982, %v3297, %v3299
      %v3309 = vsel %vm982, %v3299, %v3301
      %v3318 = vld [vmem:[%s17] sm:$0xff]
      %v3319 = vld [vmem:[%s17 + $0x8] sm:$0xf]
      %v3320 = vld [vmem:[%s18] sm:$0xf]
      %3322 = vset.pattern.permute.xlu0 0
      %3323 = vperm.xlu0 %3322, %v3320
      %v3324 = vpop.permute.xlu0 %3323
      %3328 = vst [vmem:[#allocation1] ss:$2 sm:$0xff] %v3318
      %s3329 = scalar_lea.vmem [#allocation1], 16
      %3330 = vst [vmem:[%s3329] ss:$2 sm:$0xff] %v3319
      %v3331 = vld.sshfl [vmem:[#allocation1] sm:$0xff pattern:$0x75316420]
      %v3332 = vld.sshfl [vmem:[#allocation1 + $0x8] sm:$0xff pattern:$0x75316420]
      %v3333 = vld.sshfl [vmem:[#allocation1 + $0x10] sm:$0xff pattern:$0x75316420]
      %v3336 = vsel %vm696, %v3333, 0
      %3338 = vmatpush.msra.mxu0 %v3068
      %3339 = vmatpush.msra.mxu0 %v3066
      %3340 = vmatpush.msra.mxu0 %v3064
      %3341 = vmatpush.msra.mxu0 %v3062
      %3342 = vmatpush.msra.mxu0 %v3020
      %3343 = vmatpush.msra.mxu0 %v3018
      %3344 = vmatpush.msra.mxu0 %v3016
      %3345 = vmatpush.msra.mxu0 %v3014
      %3346 = vmatpush.msra.mxu0 %v3268
      %3347 = vmatpush.msra.mxu0 %v3266
      %3348 = vmatpush.msra.mxu0 %v3264
      %3349 = vmatpush.msra.mxu0 %v3262
      %3350 = vmatpush.msra.mxu0 %v2972
      %3351 = vmatpush.msra.mxu0 %v2970
      %3352 = vmatpush.msra.mxu0 %v2968
      %3353 = vmatpush.msra.mxu0 %v2966
      %3354 = vmatmul.f32.gmra.mxu0 %v3331
      %v3355 = vpop.f32.mrf.mxu0
      %v3356 = vadd.f32 %v3324, %v3355
      %3357 = vdwg.mxu0
      %3358 = vmatpush.msra.mxu0 %v3308
      %3359 = vmatpush.msra.mxu0 %v3306
      %3360 = vmatpush.msra.mxu0 %v3304
      %3361 = vmatpush.msra.mxu0 %v3302
      %3362 = vmatpush.msra.mxu0 %v3188
      %3363 = vmatpush.msra.mxu0 %v3186
      %3364 = vmatpush.msra.mxu0 %v3184
      %3365 = vmatpush.msra.mxu0 %v3182
      %3366 = vmatpush.msra.mxu0 %v3140
      %3367 = vmatpush.msra.mxu0 %v3138
      %3368 = vmatpush.msra.mxu0 %v3136
      %3369 = vmatpush.msra.mxu0 %v3134
      %3370 = vmatpush.msra.mxu0 %v2912
      %3371 = vmatpush.msra.mxu0 %v2909
      %3372 = vmatpush.msra.mxu0 %v2906
      %3373 = vmatpush.msra.mxu0 %v2903
      %3374 = vmatmul.f32.gmra.mxu0 %v3332
      %v3375 = vpop.f32.mrf.mxu0
      %v3376 = vadd.f32 %v3356, %v3375
      %3377 = vdwg.mxu0
      %3378 = vmatpush.msra.mxu0 0.0
      %3379 = vmatpush.msra.mxu0 0.0
      %3380 = vmatpush.msra.mxu0 0.0
      %3381 = vmatpush.msra.mxu0 0.0
      %3382 = vmatpush.msra.mxu0 0.0
      %3383 = vmatpush.msra.mxu0 0.0
      %3384 = vmatpush.msra.mxu0 0.0
      %3385 = vmatpush.msra.mxu0 0.0
      %3386 = vmatpush.msra.mxu0 0.0
      %3387 = vmatpush.msra.mxu0 0.0
      %3388 = vmatpush.msra.mxu0 0.0
      %3389 = vmatpush.msra.mxu0 0.0
      %3390 = vmatpush.msra.mxu0 %v3236
      %3391 = vmatpush.msra.mxu0 %v3234
      %3392 = vmatpush.msra.mxu0 %v3232
      %3393 = vmatpush.msra.mxu0 %v3230
      %3394 = vmatmul.f32.gmra.mxu0 %v3336
      %v3395 = vpop.f32.mrf.mxu0
      %v3396 = vadd.f32 %v3376, %v3395
      %3397 = vdwg.mxu0
      %3398 = vmatpush.msra.mxu0 %v3069
      %3399 = vmatpush.msra.mxu0 %v3067
      %3400 = vmatpush.msra.mxu0 %v3065
      %3401 = vmatpush.msra.mxu0 %v3063
      %3402 = vmatpush.msra.mxu0 %v3021
      %3403 = vmatpush.msra.mxu0 %v3019
      %3404 = vmatpush.msra.mxu0 %v3017
      %3405 = vmatpush.msra.mxu0 %v3015
      %3406 = vmatpush.msra.mxu0 %v3269
      %3407 = vmatpush.msra.mxu0 %v3267
      %3408 = vmatpush.msra.mxu0 %v3265
      %3409 = vmatpush.msra.mxu0 %v3263
      %3410 = vmatpush.msra.mxu0 %v2973
      %3411 = vmatpush.msra.mxu0 %v2971
      %3412 = vmatpush.msra.mxu0 %v2969
      %3413 = vmatpush.msra.mxu0 %v2967
      %3414 = vmatmul.f32.gmra.mxu0 %v3331
      %v3415 = vpop.f32.mrf.mxu0
      %v3416 = vadd.f32 %v3324, %v3415
      %3417 = vdwg.mxu0
      %3418 = vmatpush.msra.mxu0 %v3309
      %3419 = vmatpush.msra.mxu0 %v3307
      %3420 = vmatpush.msra.mxu0 %v3305
      %3421 = vmatpush.msra.mxu0 %v3303
      %3422 = vmatpush.msra.mxu0 %v3189
      %3423 = vmatpush.msra.mxu0 %v3187
      %3424 = vmatpush.msra.mxu0 %v3185
      %3425 = vmatpush.msra.mxu0 %v3183
      %3426 = vmatpush.msra.mxu0 %v3141
      %3427 = vmatpush.msra.mxu0 %v3139
      %3428 = vmatpush.msra.mxu0 %v3137
      %3429 = vmatpush.msra.mxu0 %v3135
      %3430 = vmatpush.msra.mxu0 %v2913
      %3431 = vmatpush.msra.mxu0 %v2910
      %3432 = vmatpush.msra.mxu0 %v2907
      %3433 = vmatpush.msra.mxu0 %v2904
      %3434 = vmatmul.f32.gmra.mxu0 %v3332
      %v3435 = vpop.f32.mrf.mxu0
      %v3436 = vadd.f32 %v3416, %v3435
      %3437 = vdwg.mxu0
      %3438 = vmatpush.msra.mxu0 0.0
      %3439 = vmatpush.msra.mxu0 0.0
      %3440 = vmatpush.msra.mxu0 0.0
      %3441 = vmatpush.msra.mxu0 0.0
      %3442 = vmatpush.msra.mxu0 0.0
      %3443 = vmatpush.msra.mxu0 0.0
      %3444 = vmatpush.msra.mxu0 0.0
      %3445 = vmatpush.msra.mxu0 0.0
      %3446 = vmatpush.msra.mxu0 0.0
      %3447 = vmatpush.msra.mxu0 0.0
      %3448 = vmatpush.msra.mxu0 0.0
      %3449 = vmatpush.msra.mxu0 0.0
      %3450 = vmatpush.msra.mxu0 %v3237
      %3451 = vmatpush.msra.mxu0 %v3235
      %3452 = vmatpush.msra.mxu0 %v3233
      %3453 = vmatpush.msra.mxu0 %v3231
      %3454 = vmatmul.f32.gmra.mxu0 %v3336
      %v3455 = vpop.f32.mrf.mxu0
      %v3456 = vadd.f32 %v3436, %v3455
      %3457 = vdwg.mxu0
      %v3460 = vrot.slane %v3456, 4
      %v3461 = vsel %vm681, %v3396, %v3460
      %3463 = vst [vmem:[%s597] sm:$0xff] %v3461
      %p3464 = scmp.lt.s32.totalorder %s43, 1
      %s3465 = scalar_select %p3464, %s43, 1
      %s3466 = smul.addr %s3465, 2
      %s3467 = smul.addr %s3466, 4
      %s3468 = scalar_lea.vmem %s19, %s3467
      // Predicated region
      $region89: #{ddpm_forward.1} parent=87 // pred_check
        %p3469 = pneg %p433
      $region90: #{ddpm_forward.1} parent=87 // pred_check_branch
        %3471 = sbr.rel (%p3469) target = $region92
      $region91: #{ddpm_forward.1} parent=87 // pred_region
        _
      $region92: #{ddpm_forward.1} parent=87 // pred_fallthru
        _
    $region88: #{ddpm_forward.1} parent=5 // pred_fallthru
      _
    %p3472 = scmp.le.s32.totalorder 2, %s38
    // Predicated region
    $region93: #{ddpm_forward.1} parent=5 // pred_check
      %p3473 = pneg %p3472
    $region94: #{ddpm_forward.1} parent=5 // pred_check_branch
      %3475 = sbr.rel (%p3473) target = $region96
    $region95: #{ddpm_forward.1} parent=5 // pred_region
      %s3476 = ssub.s32 %s38, 2
      // Predicated region
      $region97: #{ddpm_forward.1} parent=95 // pred_check
        %p3477 = pneg %p439
      $region98: #{ddpm_forward.1} parent=95 // pred_check_branch
        %3479 = sbr.rel (%p3477) target = $region100
      $region99: #{ddpm_forward.1} parent=95 // pred_region
        %p3480 = scmp.lt.s32.totalorder %s44, 1
        %s3481 = scalar_select %p3480, %s44, 1
        %s3482 = smul.addr %s3481, 2
        %s3483 = smul.addr %s3482, 4
        %s3484 = scalar_lea.vmem %s19, %s3483
      $region100: #{ddpm_forward.1} parent=95 // pred_fallthru
        _
    $region96: #{ddpm_forward.1} parent=5 // pred_fallthru
      _
  $region6: #{ddpm_forward.1} parent=0 // loop_footer
    %s42 = sadd.s32 1, %s38
  $region7: #{ddpm_forward.1} parent=0 // loop_footer_branch
    %37 = sbr.rel target = $region3
  $region8: #{ddpm_forward.1} parent=0 // loop_exit
    _

</llo_original>
